<compile_context>
chip_gen: v7x
topology: tpu7x:2x2x1
jax: 0.10.0
libtpu: 0.0.40
codegen_flags: <defaults>
</compile_context>

<pallas_src>
import functools

import jax
import jax.numpy as jnp
from jax import lax
from jax.experimental import pallas as pl
from jax.experimental.pallas import tpu as pltpu


# ---------------------------------------------------------------------------
# In-kernel math helpers.
# ---------------------------------------------------------------------------
def _layernorm(x, gamma, beta, eps=1e-5):
    mu = jnp.mean(x, axis=-1, keepdims=True)
    xc = x - mu
    var = jnp.mean(xc * xc, axis=-1, keepdims=True)
    return xc * jax.lax.rsqrt(var + eps) * gamma + beta


def _gelu_tanh(x):
    # tanh-approximate GELU: the tanh goes to the EUP (its own VLIW slot)
    # instead of a ~10-op erf polynomial on the VALU.  Matches nn.GELU to ~1e-3.
    c = 0.7978845608028654  # sqrt(2/pi)
    return 0.5 * x * (1.0 + jnp.tanh(c * (x + 0.044715 * x * x * x)))


# ---------------------------------------------------------------------------
# Fused kernel: one grid step = (batch b, layer l, key tile j).
# ---------------------------------------------------------------------------
def fused_block_kernel(x_ref, rioe_ref,
                       ln1_g_ref, ln1_b_ref, wqkv_ref,
                       wproj_ref, bproj_ref,
                       ln2_g_ref, ln2_b_ref,
                       wfc1_ref, bfc1_ref, wfc2_ref, bfc2_ref,
                       o_ref,
                       x_scr, q_scr, k_scr, v_scr, m_scr, l_scr, acc_scr,
                       *, num_heads, scale, kv_tile):
    li = pl.program_id(1)            # layer index
    kj = pl.program_id(2)            # key-tile index
    n_kv = pl.num_programs(2)
    n_layers = pl.num_programs(1)

    N, C = x_scr.shape
    H = num_heads
    hd = C // H
    tj = kv_tile

    # ---------------- residual-stream init (first step of every batch) -----
    @pl.when(jnp.logical_and(li == 0, kj == 0))
    def _init_residual_stream():
        x_scr[...] = x_ref[...].astype(jnp.float32)

    # ---------------- layer setup (first key tile of every layer) ----------
    @pl.when(kj == 0)
    def _layer_setup():
        h = _layernorm(x_scr[...], ln1_g_ref[...], ln1_b_ref[...])
        # qkv Linear (no bias); bf16 operands, f32 accumulation on the MXU.
        qkv = jnp.dot(h.astype(wqkv_ref.dtype), wqkv_ref[...],
                      preferred_element_type=jnp.float32)              # (N, 3C) f32
        # Fold the softmax scale into q (legal: both q@k^T and the rioe bias
        # are linear in q; the PyTorch reference scales their sum).
        q_scr[...] = (qkv[:, 0:C] * scale).astype(jnp.bfloat16)
        k_scr[...] = qkv[:, C:2 * C].astype(jnp.bfloat16)
        v_scr[...] = qkv[:, 2 * C:3 * C].astype(jnp.bfloat16)
        m_scr[...] = jnp.full(m_scr.shape, -jnp.inf, m_scr.dtype)
        l_scr[...] = jnp.zeros(l_scr.shape, l_scr.dtype)
        acc_scr[...] = jnp.zeros(acc_scr.shape, acc_scr.dtype)

    # ---------------- attention: accumulate key tile kj --------------------
    row0 = pl.multiple_of(kj * tj, tj)
    q_b = q_scr[...]                           # (N, C)  bf16, pre-scaled
    k_blk = k_scr[pl.ds(row0, tj), :]          # (tj, C) bf16
    v_blk = v_scr[pl.ds(row0, tj), :]          # (tj, C) bf16

    # rioe bias: one lane-dense bf16 multiply over the full C dim.
    # bias[i, j, :] = rioe[i, j, :] * (scale * q)[i, :]   (reduce per head below)
    prod = rioe_ref[...] * q_b[:, None, :]     # (N, tj, C) bf16

    nt = (((1,), (1,)), ((), ()))              # contract last dim of both (A @ B^T)

    s_list = []
    row_max_cols = []
    for h in range(H):
        cs = h * hd
        # f32-accumulated reduce of the bf16 product over this head's channels.
        bias_h = jnp.sum(prod[:, :, cs:cs + hd], axis=-1,
                         dtype=jnp.float32)                           # (N, tj)
        s_h = lax.dot_general(q_b[:, cs:cs + hd], k_blk[:, cs:cs + hd], nt,
                              preferred_element_type=jnp.float32) + bias_h
        s_list.append(s_h)
        row_max_cols.append(jnp.max(s_h, axis=-1, keepdims=True))

    # Vectorized online-softmax state update across heads (lane-dense stores).
    m_prev = m_scr[...]                                               # (N, H)
    m_new = jnp.maximum(m_prev, jnp.concatenate(row_max_cols, axis=-1))
    alpha = jnp.exp(m_prev - m_new)                                   # (N, H)

    sum_cols, pv_cols = [], []
    for h in range(H):
        cs = h * hd
        p_h = jnp.exp(s_list[h] - m_new[:, h:h + 1])                  # (N, tj)
        sum_cols.append(jnp.sum(p_h, axis=-1, keepdims=True))
        pv_cols.append(jnp.dot(p_h.astype(jnp.bfloat16), v_blk[:, cs:cs + hd],
                               preferred_element_type=jnp.float32))   # (N, hd)

    m_scr[...] = m_new
    l_scr[...] = alpha * l_scr[...] + jnp.concatenate(sum_cols, axis=-1)
    alpha_wide = jnp.concatenate(
        [jnp.broadcast_to(alpha[:, h:h + 1], (N, hd)) for h in range(H)], axis=-1)
    acc_scr[...] = alpha_wide * acc_scr[...] + jnp.concatenate(pv_cols, axis=-1)

    # ---------------- finalize layer (last key tile) -----------------------
    @pl.when(kj == n_kv - 1)
    def _finalize():
        inv_l = pl.reciprocal(l_scr[...], approx=True)                # (N, H) on the EUP
        inv_wide = jnp.concatenate(
            [jnp.broadcast_to(inv_l[:, h:h + 1], (N, hd)) for h in range(H)], axis=-1)
        attn = acc_scr[...] * inv_wide                                # (N, C), one dense FMA

        proj = jnp.dot(attn.astype(wproj_ref.dtype), wproj_ref[...],
                       preferred_element_type=jnp.float32) + bproj_ref[...]
        x1 = x_scr[...] + proj                                        # residual 1

        h2 = _layernorm(x1, ln2_g_ref[...], ln2_b_ref[...])
        f = jnp.dot(h2.astype(wfc1_ref.dtype), wfc1_ref[...],
                    preferred_element_type=jnp.float32) + bfc1_ref[...]
        f = _gelu_tanh(f)
        f = jnp.dot(f.astype(wfc2_ref.dtype), wfc2_ref[...],
                    preferred_element_type=jnp.float32) + bfc2_ref[...]
        x2 = x1 + f                                                   # residual 2

        x_scr[...] = x2                          # carried to the next layer

        # Output block is resident across layers; only write the last layer.
        @pl.when(li == n_layers - 1)
        def _write_output():
            o_ref[...] = x2.astype(o_ref.dtype)


# ---------------------------------------------------------------------------
# VMEM-aware sizing helpers.
# ---------------------------------------------------------------------------
def _physical_vmem_bytes():
    try:
        cap = getattr(pltpu.get_tpu_info(), "vmem_capacity_bytes", None)
        if cap:
            return int(cap)
    except Exception:
        pass
    return 64 << 20     # conservative default: v7x per-TensorCore VMEM


def _estimate_vmem_bytes(N, C, hidden, heads, tj):
    bf16, f32 = 2, 4
    est = 0
    est += 2 * N * tj * C * bf16                              # rioe key slab, double-buffered
    est += 2 * 2 * N * C * f32                                # x block + out block
    est += 2 * (3 * C * C + C * C + 2 * C * hidden) * bf16    # per-layer weights, double-buffered
    est += 2 * 9 * 8 * max(128, C, hidden) * f32              # LN/bias blocks ((8,128)-padded)
    est += 2 * N * C * f32 + 3 * N * C * bf16                 # x_scr/acc_scr + q/k/v scratch
    est += 2 * N * max(128, heads) * f32                      # m/l scratch (lane-padded)
    est += N * tj * C * bf16 + N * tj * heads * f32           # prod + per-head score temps
    est += N * tj * (C // heads) * f32                        # bias-reduce accumulation temp
    est += 3 * N * C * f32 + N * hidden * f32                 # qkv / MLP temporaries
    return int(est * 1.3) + (2 << 20)                         # layout / pipelining headroom


def _pick_kv_tile(n, c, hidden, heads, phys_vmem):
    """Largest multiple-of-16 divisor of n (<=256) whose working set fits VMEM."""
    budget = int(phys_vmem * 0.85)
    top = (min(n, 256) // 16) * 16
    for t in range(top, 0, -16):
        if n % t == 0 and _estimate_vmem_bytes(n, c, hidden, heads, t) <= budget:
            return t
    # TODO(synk): ragged key-axis tiles (mask the tail) for N with no /16 divisor.
    return n


# ---------------------------------------------------------------------------
# Wrapper.
# ---------------------------------------------------------------------------
def fused_forward(x, ripe, params, num_heads, *, kv_tile=None):
    B, N, C = x.shape
    assert C % num_heads == 0
    L = params['wqkv'].shape[0]
    hidden = params['wfc1'].shape[-1]
    scale = float((C // num_heads) ** (-0.5))
    phys_vmem = _physical_vmem_bytes()

    tj = kv_tile if kv_tile is not None else _pick_kv_tile(N, C, hidden, num_heads, phys_vmem)
    assert N % tj == 0 and (tj % 16 == 0 or tj == N), \
        "kv tile must divide N and be a multiple of 16 (bf16 sublane packing)"
    n_kv = N // tj

    # rioe is consumed in bf16; when the producer already emits bf16 this cast
    # (an extra HBM round trip) disappears.
    ripe_b = ripe if ripe.dtype == jnp.bfloat16 else ripe.astype(jnp.bfloat16)

    kernel = functools.partial(fused_block_kernel, num_heads=num_heads,
                               scale=scale, kv_tile=tj)

    def wspec(arr):
        _, a, b = arr.shape
        # TODO(synk): add pipeline_mode=pl.Buffered(3) if the layer-boundary
        # weight DMA shows up exposed in a trace.
        return pl.BlockSpec((None, a, b), lambda bb, ll, jj: (ll, 0, 0))

    weights = (params['ln1_g'], params['ln1_b'], params['wqkv'],
               params['wproj'], params['bproj'],
               params['ln2_g'], params['ln2_b'],
               params['wfc1'], params['bfc1'], params['wfc2'], params['bfc2'])

    vmem_limit = min(int(phys_vmem * 0.9),
                     max(32 << 20, _estimate_vmem_bytes(N, C, hidden, num_heads, tj)))

    # NOTE: batch is the only "parallel" axis; keep per-chip B >= 2 on v7x so
    # both TensorCores do useful work.
    return pl.pallas_call(
        kernel,
        out_shape=jax.ShapeDtypeStruct((B, N, C), x.dtype),
        grid=(B, L, n_kv),
        in_specs=[
            pl.BlockSpec((None, N, C), lambda bb, ll, jj: (bb, 0, 0)),          # x (resident per b)
            pl.BlockSpec((None, N, tj, C), lambda bb, ll, jj: (bb, 0, jj, 0)),  # rioe key slab
            *[wspec(w) for w in weights],                                       # per-layer weights
        ],
        out_specs=pl.BlockSpec((None, N, C), lambda bb, ll, jj: (bb, 0, 0)),
        scratch_shapes=[
            pltpu.VMEM((N, C), jnp.float32),            # residual stream (carried over layers)
            pltpu.VMEM((N, C), jnp.bfloat16),           # q (pre-scaled)
            pltpu.VMEM((N, C), jnp.bfloat16),           # k
            pltpu.VMEM((N, C), jnp.bfloat16),           # v
            pltpu.VMEM((N, num_heads), jnp.float32),    # online-softmax running max
            pltpu.VMEM((N, num_heads), jnp.float32),    # online-softmax running sum
            pltpu.VMEM((N, C), jnp.float32),            # attention accumulator
        ],
        compiler_params=pltpu.CompilerParams(
            dimension_semantics=("parallel", "arbitrary", "arbitrary"),
            vmem_limit_bytes=vmem_limit),
    )(x, ripe_b, *weights)


def transformer_predictor(x, ripe, params, num_heads, return_token_num=0, kv_tile=None):
    """Matches TransformerPredictor.forward(x, ripe, return_token_num)."""
    out = fused_forward(x, ripe, params, num_heads, kv_tile=kv_tile)
    if return_token_num > 0:
        out = out[:, -return_token_num:]
    return out


# ---------------------------------------------------------------------------
# Parameters: stacked per layer, big matrices in bf16 (f32 MXU accumulation).
# nn.Linear weights are (out, in); stored here pre-transposed to (in, out).
# ---------------------------------------------------------------------------
def init_params(key, embed_dim, depth, mlp_ratio=4.0):
    hidden = int(embed_dim * mlp_ratio)

    def nrm(k, shape, std=0.02):
        return (std * jax.random.normal(k, shape, dtype=jnp.float32)).astype(jnp.bfloat16)

    k0, k1, k2, k3 = jax.random.split(key, 4)
    return dict(
        ln1_g=jnp.ones((depth, 1, embed_dim), jnp.float32),
        ln1_b=jnp.zeros((depth, 1, embed_dim), jnp.float32),
        wqkv=nrm(k0, (depth, embed_dim, 3 * embed_dim)),
        wproj=nrm(k1, (depth, embed_dim, embed_dim)),
        bproj=jnp.zeros((depth, 1, embed_dim), jnp.float32),
        ln2_g=jnp.ones((depth, 1, embed_dim), jnp.float32),
        ln2_b=jnp.zeros((depth, 1, embed_dim), jnp.float32),
        wfc1=nrm(k2, (depth, embed_dim, hidden)),
        bfc1=jnp.zeros((depth, 1, hidden), jnp.float32),
        wfc2=nrm(k3, (depth, hidden, embed_dim)),
        bfc2=jnp.zeros((depth, 1, embed_dim), jnp.float32),
    )


# ---------------------------------------------------------------------------
# Pure-JAX reference (same bf16 storage, tanh GELU) for a loose sanity check.
# ---------------------------------------------------------------------------
def reference_forward(x, ripe, params, num_heads):
    B, N, C = x.shape
    hd = C // num_heads
    scale = hd ** (-0.5)
    L = params['wqkv'].shape[0]
    f32 = jnp.float32

    rioe = ripe.astype(jnp.bfloat16).astype(f32).reshape(B, N, N, num_heads, hd)
    xf = x.astype(f32)

    def ln(z, g, b):
        mu = z.mean(-1, keepdims=True)
        zc = z - mu
        return zc * jax.lax.rsqrt((zc * zc).mean(-1, keepdims=True) + 1e-5) * g + b

    for l in range(L):
        h = ln(xf, params['ln1_g'][l], params['ln1_b'][l])
        qkv = h @ params['wqkv'][l].astype(f32)
        q, k, v = jnp.split(qkv, 3, axis=-1)
        q = q.reshape(B, N, num_heads, hd)
        k = k.reshape(B, N, num_heads, hd)
        v = v.reshape(B, N, num_heads, hd)
        bias = jnp.einsum('bihd,bijhd->bhij', q, rioe)
        scores = (jnp.einsum('bihd,bjhd->bhij', q, k) + bias) * scale
        probs = jax.nn.softmax(scores, axis=-1)
        attn = jnp.einsum('bhij,bjhd->bihd', probs, v).reshape(B, N, C)
        xf = xf + attn @ params['wproj'][l].astype(f32) + params['bproj'][l]
        h2 = ln(xf, params['ln2_g'][l], params['ln2_b'][l])
        f = _gelu_tanh(h2 @ params['wfc1'][l].astype(f32) + params['bfc1'][l])
        xf = xf + f @ params['wfc2'][l].astype(f32) + params['bfc2'][l]
    return xf


if __name__ == "__main__":
    # Small config consistent with the module: embed_dim=32, num_heads=4, depth=2.
    # N=32 with kv_tile=16 exercises the multi-tile online-softmax path (2 kv
    # tiles) while keeping tiles %16-aligned for bf16 sublane packing.
    B, N, C, H, DEPTH = 2, 32, 32, 4, 2

    key = jax.random.PRNGKey(0)
    kx, kr, kp = jax.random.split(key, 3)
    x = jax.random.normal(kx, (B, N, C), dtype=jnp.float32)
    # Producer emits rioe directly in bf16 (no wrapper-side astype HBM pass).
    ripe = jax.random.normal(kr, (B, N, N, C), dtype=jnp.float32).astype(jnp.bfloat16)
    params = init_params(kp, C, DEPTH)

    out = transformer_predictor(x, ripe, params, num_heads=H,
                                return_token_num=0, kv_tile=16)
    out = jax.block_until_ready(out)

    assert out.shape == (B, N, C) and out.dtype == jnp.float32
    assert bool(jnp.all(jnp.isfinite(out)))

    ref = jax.block_until_ready(reference_forward(x, ripe, params, num_heads=H))
    max_err = float(jnp.max(jnp.abs(out - ref)))
    assert max_err < 5e-2, f"kernel deviates from reference: max|err|={max_err}"

    print("KERNEL_OK")
</pallas_src>

<mosaic_0001>
module attributes {stable_mosaic.version = 11 : i64} {
  func.func @fused_block_kernel(%arg0: i32, %arg1: i32, %arg2: i32, %arg3: memref<1x32x32xf32, #tpu.memory_space<vmem>>, %arg4: memref<1x32x16x32xbf16, #tpu.memory_space<vmem>>, %arg5: memref<1x1x32xf32, #tpu.memory_space<vmem>>, %arg6: memref<1x1x32xf32, #tpu.memory_space<vmem>>, %arg7: memref<1x32x96xbf16, #tpu.memory_space<vmem>>, %arg8: memref<1x32x32xbf16, #tpu.memory_space<vmem>>, %arg9: memref<1x1x32xf32, #tpu.memory_space<vmem>>, %arg10: memref<1x1x32xf32, #tpu.memory_space<vmem>>, %arg11: memref<1x1x32xf32, #tpu.memory_space<vmem>>, %arg12: memref<1x32x128xbf16, #tpu.memory_space<vmem>>, %arg13: memref<1x1x128xf32, #tpu.memory_space<vmem>>, %arg14: memref<1x128x32xbf16, #tpu.memory_space<vmem>>, %arg15: memref<1x1x32xf32, #tpu.memory_space<vmem>>, %arg16: memref<1x32x32xf32, #tpu.memory_space<vmem>>, %arg17: memref<32x32xf32, #tpu.memory_space<vmem>>, %arg18: memref<32x32xbf16, #tpu.memory_space<vmem>>, %arg19: memref<32x32xbf16, #tpu.memory_space<vmem>>, %arg20: memref<32x32xbf16, #tpu.memory_space<vmem>>, %arg21: memref<32x4xf32, #tpu.memory_space<vmem>>, %arg22: memref<32x4xf32, #tpu.memory_space<vmem>>, %arg23: memref<32x32xf32, #tpu.memory_space<vmem>>) attributes {dimension_semantics = [#tpu.dimension_semantics<parallel>, #tpu.dimension_semantics<arbitrary>, #tpu.dimension_semantics<arbitrary>], iteration_bounds = array<i64: 2, 2, 2>, scalar_prefetch = 0 : i64, scratch_operands = 7 : i64, tpu.core_type = #tpu.core_type<tc>, window_params = [{transform_indices = @transform_0, window_bounds = array<i64: 1, 32, 32>}, {transform_indices = @transform_1, window_bounds = array<i64: 1, 32, 16, 32>}, {transform_indices = @transform_2, window_bounds = array<i64: 1, 1, 32>}, {transform_indices = @transform_3, window_bounds = array<i64: 1, 1, 32>}, {transform_indices = @transform_4, window_bounds = array<i64: 1, 32, 96>}, {transform_indices = @transform_5, window_bounds = array<i64: 1, 32, 32>}, {transform_indices = @transform_6, window_bounds = array<i64: 1, 1, 32>}, {transform_indices = @transform_7, window_bounds = array<i64: 1, 1, 32>}, {transform_indices = @transform_8, window_bounds = array<i64: 1, 1, 32>}, {transform_indices = @transform_9, window_bounds = array<i64: 1, 32, 128>}, {transform_indices = @transform_10, window_bounds = array<i64: 1, 1, 128>}, {transform_indices = @transform_11, window_bounds = array<i64: 1, 128, 32>}, {transform_indices = @transform_12, window_bounds = array<i64: 1, 1, 32>}, {transform_indices = @transform_13, window_bounds = array<i64: 1, 32, 32>}]} {
    %c0_i32 = arith.constant 0 : i32
    %0 = arith.cmpi eq, %arg1, %c0_i32 : i32
    %c0_i32_0 = arith.constant 0 : i32
    %1 = arith.cmpi eq, %arg2, %c0_i32_0 : i32
    %2 = arith.andi %0, %1 : i1
    %3 = arith.extui %2 : i1 to i32
    %c0_i32_1 = arith.constant 0 : i32
    %4 = arith.cmpi ne, %3, %c0_i32_1 : i32
    scf.if %4 {
      %c0_43 = arith.constant 0 : index
      %c0_44 = arith.constant 0 : index
      %c0_45 = arith.constant 0 : index
      %124 = vector.load %arg3[%c0_43, %c0_44, %c0_45] : memref<1x32x32xf32, #tpu.memory_space<vmem>>, vector<1x32x32xf32>
      %125 = vector.shape_cast %124 : vector<1x32x32xf32> to vector<32x32xf32>
      %c0_46 = arith.constant 0 : index
      %c0_47 = arith.constant 0 : index
      %126 = vector.load %arg17[%c0_46, %c0_47] : memref<32x32xf32, #tpu.memory_space<vmem>>, vector<32x32xf32>
      tpu.vector_store %arg17[%c0_46, %c0_47], %125 {strides = array<i32>} : memref<32x32xf32, #tpu.memory_space<vmem>>, vector<32x32xf32>,
    } else {
    }
    %c0_i32_2 = arith.constant 0 : i32
    %5 = arith.cmpi eq, %arg2, %c0_i32_2 : i32
    %6 = arith.extui %5 : i1 to i32
    %c0_i32_3 = arith.constant 0 : i32
    %7 = arith.cmpi ne, %6, %c0_i32_3 : i32
    scf.if %7 {
      %c0_43 = arith.constant 0 : index
      %c0_44 = arith.constant 0 : index
      %124 = vector.load %arg17[%c0_43, %c0_44] : memref<32x32xf32, #tpu.memory_space<vmem>>, vector<32x32xf32>
      %c0_45 = arith.constant 0 : index
      %c0_46 = arith.constant 0 : index
      %c0_47 = arith.constant 0 : index
      %125 = vector.load %arg5[%c0_45, %c0_46, %c0_47] : memref<1x1x32xf32, #tpu.memory_space<vmem>>, vector<1x1x32xf32>
      %126 = vector.shape_cast %125 : vector<1x1x32xf32> to vector<1x32xf32>
      %c0_48 = arith.constant 0 : index
      %c0_49 = arith.constant 0 : index
      %c0_50 = arith.constant 0 : index
      %127 = vector.load %arg6[%c0_48, %c0_49, %c0_50] : memref<1x1x32xf32, #tpu.memory_space<vmem>>, vector<1x1x32xf32>
      %128 = vector.shape_cast %127 : vector<1x1x32xf32> to vector<1x32xf32>
      %cst_51 = arith.constant dense<0.000000e+00> : vector<32xf32>
      %129 = vector.multi_reduction <add>, %124, %cst_51 [1] : vector<32x32xf32> to vector<32xf32>
      %130 = vector.shape_cast %129 : vector<32xf32> to vector<32x1xf32>
      %cst_52 = arith.constant 3.200000e+01 : f32
      %131 = vector.broadcast %cst_52 : f32 to vector<32x1xf32>
      %132 = arith.divf %130, %131 : vector<32x1xf32>
      %133 = vector.broadcast %132 : vector<32x1xf32> to vector<32x32xf32>
      %134 = arith.subf %124, %133 : vector<32x32xf32>
      %135 = arith.mulf %134, %134 : vector<32x32xf32>
      %cst_53 = arith.constant dense<0.000000e+00> : vector<32xf32>
      %136 = vector.multi_reduction <add>, %135, %cst_53 [1] : vector<32x32xf32> to vector<32xf32>
      %137 = vector.shape_cast %136 : vector<32xf32> to vector<32x1xf32>
      %cst_54 = arith.constant 3.200000e+01 : f32
      %138 = vector.broadcast %cst_54 : f32 to vector<32x1xf32>
      %139 = arith.divf %137, %138 : vector<32x1xf32>
      %cst_55 = arith.constant 9.99999974E-6 : f32
      %140 = vector.broadcast %cst_55 : f32 to vector<32x1xf32>
      %141 = arith.addf %139, %140 : vector<32x1xf32>
      %142 = math.rsqrt %141 : vector<32x1xf32>
      %143 = vector.broadcast %142 : vector<32x1xf32> to vector<32x32xf32>
      %144 = arith.mulf %134, %143 : vector<32x32xf32>
      %145 = vector.broadcast %126 : vector<1x32xf32> to vector<32x32xf32>
      %146 = arith.mulf %144, %145 : vector<32x32xf32>
      %147 = vector.broadcast %128 : vector<1x32xf32> to vector<32x32xf32>
      %148 = arith.addf %146, %147 : vector<32x32xf32>
      %149 = arith.truncf %148 : vector<32x32xf32> to vector<32x32xbf16>
      %c0_56 = arith.constant 0 : index
      %c0_57 = arith.constant 0 : index
      %c0_58 = arith.constant 0 : index
      %150 = vector.load %arg7[%c0_56, %c0_57, %c0_58] : memref<1x32x96xbf16, #tpu.memory_space<vmem>>, vector<1x32x96xbf16>
      %151 = vector.shape_cast %150 : vector<1x32x96xbf16> to vector<32x96xbf16>
      %cst_59 = arith.constant dense<0.000000e+00> : vector<32x96xf32>
      %152 = tpu.matmul %149, %151, %cst_59 {dimension_numbers = #tpu.dot_dimension_numbers<[1], [0], [0], [1], [0, 0, 1, 1], [], []>} : vector<32x32xbf16>, vector<32x96xbf16>, vector<32x96xf32> -> vector<32x96xf32>
      %153 = vector.extract_strided_slice %152 {offsets = [0, 0], sizes = [32, 32], strides = [1, 1]} : vector<32x96xf32> to vector<32x32xf32>
      %cst_60 = arith.constant 0.353553385 : f32
      %154 = vector.broadcast %cst_60 : f32 to vector<32x32xf32>
      %155 = arith.mulf %153, %154 : vector<32x32xf32>
      %156 = arith.truncf %155 : vector<32x32xf32> to vector<32x32xbf16>
      %c0_61 = arith.constant 0 : index
      %c0_62 = arith.constant 0 : index
      %157 = vector.load %arg18[%c0_61, %c0_62] : memref<32x32xbf16, #tpu.memory_space<vmem>>, vector<32x32xbf16>
      tpu.vector_store %arg18[%c0_61, %c0_62], %156 {strides = array<i32>} : memref<32x32xbf16, #tpu.memory_space<vmem>>, vector<32x32xbf16>,
      %158 = vector.extract_strided_slice %152 {offsets = [0, 32], sizes = [32, 32], strides = [1, 1]} : vector<32x96xf32> to vector<32x32xf32>
      %159 = arith.truncf %158 : vector<32x32xf32> to vector<32x32xbf16>
      %c0_63 = arith.constant 0 : index
      %c0_64 = arith.constant 0 : index
      %160 = vector.load %arg19[%c0_63, %c0_64] : memref<32x32xbf16, #tpu.memory_space<vmem>>, vector<32x32xbf16>
      tpu.vector_store %arg19[%c0_63, %c0_64], %159 {strides = array<i32>} : memref<32x32xbf16, #tpu.memory_space<vmem>>, vector<32x32xbf16>,
      %161 = vector.extract_strided_slice %152 {offsets = [0, 64], sizes = [32, 32], strides = [1, 1]} : vector<32x96xf32> to vector<32x32xf32>
      %162 = arith.truncf %161 : vector<32x32xf32> to vector<32x32xbf16>
      %c0_65 = arith.constant 0 : index
      %c0_66 = arith.constant 0 : index
      %163 = vector.load %arg20[%c0_65, %c0_66] : memref<32x32xbf16, #tpu.memory_space<vmem>>, vector<32x32xbf16>
      tpu.vector_store %arg20[%c0_65, %c0_66], %162 {strides = array<i32>} : memref<32x32xbf16, #tpu.memory_space<vmem>>, vector<32x32xbf16>,
      %cst_67 = arith.constant 0xFF800000 : f32
      %164 = vector.broadcast %cst_67 : f32 to vector<32x4xf32>
      %c0_68 = arith.constant 0 : index
      %c0_69 = arith.constant 0 : index
      %165 = vector.load %arg21[%c0_68, %c0_69] : memref<32x4xf32, #tpu.memory_space<vmem>>, vector<32x4xf32>
      tpu.vector_store %arg21[%c0_68, %c0_69], %164 {strides = array<i32>} : memref<32x4xf32, #tpu.memory_space<vmem>>, vector<32x4xf32>,
      %cst_70 = arith.constant 0.000000e+00 : f32
      %166 = vector.broadcast %cst_70 : f32 to vector<32x4xf32>
      %c0_71 = arith.constant 0 : index
      %c0_72 = arith.constant 0 : index
      %167 = vector.load %arg22[%c0_71, %c0_72] : memref<32x4xf32, #tpu.memory_space<vmem>>, vector<32x4xf32>
      tpu.vector_store %arg22[%c0_71, %c0_72], %166 {strides = array<i32>} : memref<32x4xf32, #tpu.memory_space<vmem>>, vector<32x4xf32>,
      %cst_73 = arith.constant 0.000000e+00 : f32
      %168 = vector.broadcast %cst_73 : f32 to vector<32x32xf32>
      %c0_74 = arith.constant 0 : index
      %c0_75 = arith.constant 0 : index
      %169 = vector.load %arg23[%c0_74, %c0_75] : memref<32x32xf32, #tpu.memory_space<vmem>>, vector<32x32xf32>
      tpu.vector_store %arg23[%c0_74, %c0_75], %168 {strides = array<i32>} : memref<32x32xf32, #tpu.memory_space<vmem>>, vector<32x32xf32>,
    } else {
    }
    %c16_i32 = arith.constant 16 : i32
    %8 = arith.muli %arg2, %c16_i32 : i32
    %9 = tpu.assume_multiple %8, 16 : i32
    %c0 = arith.constant 0 : index
    %c0_4 = arith.constant 0 : index
    %10 = vector.load %arg18[%c0, %c0_4] : memref<32x32xbf16, #tpu.memory_space<vmem>>, vector<32x32xbf16>
    %11 = arith.index_cast %9 : i32 to index
    %c0_5 = arith.constant 0 : index
    %12 = vector.load %arg19[%11, %c0_5] : memref<32x32xbf16, #tpu.memory_space<vmem>>, vector<16x32xbf16>
    %13 = arith.index_cast %9 : i32 to index
    %c0_6 = arith.constant 0 : index
    %14 = vector.load %arg20[%13, %c0_6] : memref<32x32xbf16, #tpu.memory_space<vmem>>, vector<16x32xbf16>
    %c0_7 = arith.constant 0 : index
    %c0_8 = arith.constant 0 : index
    %c0_9 = arith.constant 0 : index
    %c0_10 = arith.constant 0 : index
    %15 = vector.load %arg4[%c0_7, %c0_8, %c0_9, %c0_10] : memref<1x32x16x32xbf16, #tpu.memory_space<vmem>>, vector<1x32x16x32xbf16>
    %16 = vector.shape_cast %15 : vector<1x32x16x32xbf16> to vector<32x16x32xbf16>
    %17 = vector.shape_cast %10 : vector<32x32xbf16> to vector<32x1x32xbf16>
    %18 = vector.broadcast %17 : vector<32x1x32xbf16> to vector<32x16x32xbf16>
    %19 = arith.mulf %16, %18 : vector<32x16x32xbf16>
    %20 = vector.extract_strided_slice %19 {offsets = [0, 0, 0], sizes = [32, 16, 8], strides = [1, 1, 1]} : vector<32x16x32xbf16> to vector<32x16x8xbf16>
    %21 = arith.extf %20 : vector<32x16x8xbf16> to vector<32x16x8xf32>
    %cst = arith.constant dense<0.000000e+00> : vector<32x16xf32>
    %22 = vector.multi_reduction <add>, %21, %cst [2] : vector<32x16x8xf32> to vector<32x16xf32>
    %23 = vector.extract_strided_slice %10 {offsets = [0, 0], sizes = [32, 8], strides = [1, 1]} : vector<32x32xbf16> to vector<32x8xbf16>
    %24 = vector.extract_strided_slice %12 {offsets = [0, 0], sizes = [16, 8], strides = [1, 1]} : vector<16x32xbf16> to vector<16x8xbf16>
    %cst_11 = arith.constant dense<0.000000e+00> : vector<32x16xf32>
    %25 = tpu.matmul %23, %24, %cst_11 {dimension_numbers = #tpu.dot_dimension_numbers<[1], [1], [0], [0], [0, 0, 1, 0], [], []>} : vector<32x8xbf16>, vector<16x8xbf16>, vector<32x16xf32> -> vector<32x16xf32>
    %26 = arith.addf %25, %22 : vector<32x16xf32>
    %cst_12 = arith.constant dense<0xFF800000> : vector<32xf32>
    %27 = vector.multi_reduction <maximumf>, %26, %cst_12 [1] : vector<32x16xf32> to vector<32xf32>
    %28 = vector.shape_cast %27 : vector<32xf32> to vector<32x1xf32>
    %29 = vector.extract_strided_slice %19 {offsets = [0, 0, 8], sizes = [32, 16, 8], strides = [1, 1, 1]} : vector<32x16x32xbf16> to vector<32x16x8xbf16>
    %30 = arith.extf %29 : vector<32x16x8xbf16> to vector<32x16x8xf32>
    %cst_13 = arith.constant dense<0.000000e+00> : vector<32x16xf32>
    %31 = vector.multi_reduction <add>, %30, %cst_13 [2] : vector<32x16x8xf32> to vector<32x16xf32>
    %32 = vector.extract_strided_slice %10 {offsets = [0, 8], sizes = [32, 8], strides = [1, 1]} : vector<32x32xbf16> to vector<32x8xbf16>
    %33 = vector.extract_strided_slice %12 {offsets = [0, 8], sizes = [16, 8], strides = [1, 1]} : vector<16x32xbf16> to vector<16x8xbf16>
    %cst_14 = arith.constant dense<0.000000e+00> : vector<32x16xf32>
    %34 = tpu.matmul %32, %33, %cst_14 {dimension_numbers = #tpu.dot_dimension_numbers<[1], [1], [0], [0], [0, 0, 1, 0], [], []>} : vector<32x8xbf16>, vector<16x8xbf16>, vector<32x16xf32> -> vector<32x16xf32>
    %35 = arith.addf %34, %31 : vector<32x16xf32>
    %cst_15 = arith.constant dense<0xFF800000> : vector<32xf32>
    %36 = vector.multi_reduction <maximumf>, %35, %cst_15 [1] : vector<32x16xf32> to vector<32xf32>
    %37 = vector.shape_cast %36 : vector<32xf32> to vector<32x1xf32>
    %38 = vector.extract_strided_slice %19 {offsets = [0, 0, 16], sizes = [32, 16, 8], strides = [1, 1, 1]} : vector<32x16x32xbf16> to vector<32x16x8xbf16>
    %39 = arith.extf %38 : vector<32x16x8xbf16> to vector<32x16x8xf32>
    %cst_16 = arith.constant dense<0.000000e+00> : vector<32x16xf32>
    %40 = vector.multi_reduction <add>, %39, %cst_16 [2] : vector<32x16x8xf32> to vector<32x16xf32>
    %41 = vector.extract_strided_slice %10 {offsets = [0, 16], sizes = [32, 8], strides = [1, 1]} : vector<32x32xbf16> to vector<32x8xbf16>
    %42 = vector.extract_strided_slice %12 {offsets = [0, 16], sizes = [16, 8], strides = [1, 1]} : vector<16x32xbf16> to vector<16x8xbf16>
    %cst_17 = arith.constant dense<0.000000e+00> : vector<32x16xf32>
    %43 = tpu.matmul %41, %42, %cst_17 {dimension_numbers = #tpu.dot_dimension_numbers<[1], [1], [0], [0], [0, 0, 1, 0], [], []>} : vector<32x8xbf16>, vector<16x8xbf16>, vector<32x16xf32> -> vector<32x16xf32>
    %44 = arith.addf %43, %40 : vector<32x16xf32>
    %cst_18 = arith.constant dense<0xFF800000> : vector<32xf32>
    %45 = vector.multi_reduction <maximumf>, %44, %cst_18 [1] : vector<32x16xf32> to vector<32xf32>
    %46 = vector.shape_cast %45 : vector<32xf32> to vector<32x1xf32>
    %47 = vector.extract_strided_slice %19 {offsets = [0, 0, 24], sizes = [32, 16, 8], strides = [1, 1, 1]} : vector<32x16x32xbf16> to vector<32x16x8xbf16>
    %48 = arith.extf %47 : vector<32x16x8xbf16> to vector<32x16x8xf32>
    %cst_19 = arith.constant dense<0.000000e+00> : vector<32x16xf32>
    %49 = vector.multi_reduction <add>, %48, %cst_19 [2] : vector<32x16x8xf32> to vector<32x16xf32>
    %50 = vector.extract_strided_slice %10 {offsets = [0, 24], sizes = [32, 8], strides = [1, 1]} : vector<32x32xbf16> to vector<32x8xbf16>
    %51 = vector.extract_strided_slice %12 {offsets = [0, 24], sizes = [16, 8], strides = [1, 1]} : vector<16x32xbf16> to vector<16x8xbf16>
    %cst_20 = arith.constant dense<0.000000e+00> : vector<32x16xf32>
    %52 = tpu.matmul %50, %51, %cst_20 {dimension_numbers = #tpu.dot_dimension_numbers<[1], [1], [0], [0], [0, 0, 1, 0], [], []>} : vector<32x8xbf16>, vector<16x8xbf16>, vector<32x16xf32> -> vector<32x16xf32>
    %53 = arith.addf %52, %49 : vector<32x16xf32>
    %cst_21 = arith.constant dense<0xFF800000> : vector<32xf32>
    %54 = vector.multi_reduction <maximumf>, %53, %cst_21 [1] : vector<32x16xf32> to vector<32xf32>
    %55 = vector.shape_cast %54 : vector<32xf32> to vector<32x1xf32>
    %c0_22 = arith.constant 0 : index
    %c0_23 = arith.constant 0 : index
    %56 = vector.load %arg21[%c0_22, %c0_23] : memref<32x4xf32, #tpu.memory_space<vmem>>, vector<32x4xf32>
    %57 = tpu.concatenate %28, %37, %46, %55 in 1 : vector<32x1xf32>, vector<32x1xf32>, vector<32x1xf32>, vector<32x1xf32> -> vector<32x4xf32>
    %58 = arith.maximumf %56, %57 : vector<32x4xf32>
    %59 = arith.subf %56, %58 : vector<32x4xf32>
    %60 = math.exp %59 : vector<32x4xf32>
    %61 = vector.extract_strided_slice %58 {offsets = [0, 0], sizes = [32, 1], strides = [1, 1]} : vector<32x4xf32> to vector<32x1xf32>
    %62 = vector.broadcast %61 : vector<32x1xf32> to vector<32x16xf32>
    %63 = arith.subf %26, %62 : vector<32x16xf32>
    %64 = math.exp %63 : vector<32x16xf32>
    %cst_24 = arith.constant dense<0.000000e+00> : vector<32xf32>
    %65 = vector.multi_reduction <add>, %64, %cst_24 [1] : vector<32x16xf32> to vector<32xf32>
    %66 = vector.shape_cast %65 : vector<32xf32> to vector<32x1xf32>
    %67 = arith.truncf %64 : vector<32x16xf32> to vector<32x16xbf16>
    %68 = vector.extract_strided_slice %14 {offsets = [0, 0], sizes = [16, 8], strides = [1, 1]} : vector<16x32xbf16> to vector<16x8xbf16>
    %cst_25 = arith.constant dense<0.000000e+00> : vector<32x8xf32>
    %69 = tpu.matmul %67, %68, %cst_25 {dimension_numbers = #tpu.dot_dimension_numbers<[1], [0], [0], [1], [0, 0, 1, 1], [], []>} : vector<32x16xbf16>, vector<16x8xbf16>, vector<32x8xf32> -> vector<32x8xf32>
    %70 = vector.extract_strided_slice %58 {offsets = [0, 1], sizes = [32, 1], strides = [1, 1]} : vector<32x4xf32> to vector<32x1xf32>
    %71 = vector.broadcast %70 : vector<32x1xf32> to vector<32x16xf32>
    %72 = arith.subf %35, %71 : vector<32x16xf32>
    %73 = math.exp %72 : vector<32x16xf32>
    %cst_26 = arith.constant dense<0.000000e+00> : vector<32xf32>
    %74 = vector.multi_reduction <add>, %73, %cst_26 [1] : vector<32x16xf32> to vector<32xf32>
    %75 = vector.shape_cast %74 : vector<32xf32> to vector<32x1xf32>
    %76 = arith.truncf %73 : vector<32x16xf32> to vector<32x16xbf16>
    %77 = vector.extract_strided_slice %14 {offsets = [0, 8], sizes = [16, 8], strides = [1, 1]} : vector<16x32xbf16> to vector<16x8xbf16>
    %cst_27 = arith.constant dense<0.000000e+00> : vector<32x8xf32>
    %78 = tpu.matmul %76, %77, %cst_27 {dimension_numbers = #tpu.dot_dimension_numbers<[1], [0], [0], [1], [0, 0, 1, 1], [], []>} : vector<32x16xbf16>, vector<16x8xbf16>, vector<32x8xf32> -> vector<32x8xf32>
    %79 = vector.extract_strided_slice %58 {offsets = [0, 2], sizes = [32, 1], strides = [1, 1]} : vector<32x4xf32> to vector<32x1xf32>
    %80 = vector.broadcast %79 : vector<32x1xf32> to vector<32x16xf32>
    %81 = arith.subf %44, %80 : vector<32x16xf32>
    %82 = math.exp %81 : vector<32x16xf32>
    %cst_28 = arith.constant dense<0.000000e+00> : vector<32xf32>
    %83 = vector.multi_reduction <add>, %82, %cst_28 [1] : vector<32x16xf32> to vector<32xf32>
    %84 = vector.shape_cast %83 : vector<32xf32> to vector<32x1xf32>
    %85 = arith.truncf %82 : vector<32x16xf32> to vector<32x16xbf16>
    %86 = vector.extract_strided_slice %14 {offsets = [0, 16], sizes = [16, 8], strides = [1, 1]} : vector<16x32xbf16> to vector<16x8xbf16>
    %cst_29 = arith.constant dense<0.000000e+00> : vector<32x8xf32>
    %87 = tpu.matmul %85, %86, %cst_29 {dimension_numbers = #tpu.dot_dimension_numbers<[1], [0], [0], [1], [0, 0, 1, 1], [], []>} : vector<32x16xbf16>, vector<16x8xbf16>, vector<32x8xf32> -> vector<32x8xf32>
    %88 = vector.extract_strided_slice %58 {offsets = [0, 3], sizes = [32, 1], strides = [1, 1]} : vector<32x4xf32> to vector<32x1xf32>
    %89 = vector.broadcast %88 : vector<32x1xf32> to vector<32x16xf32>
    %90 = arith.subf %53, %89 : vector<32x16xf32>
    %91 = math.exp %90 : vector<32x16xf32>
    %cst_30 = arith.constant dense<0.000000e+00> : vector<32xf32>
    %92 = vector.multi_reduction <add>, %91, %cst_30 [1] : vector<32x16xf32> to vector<32xf32>
    %93 = vector.shape_cast %92 : vector<32xf32> to vector<32x1xf32>
    %94 = arith.truncf %91 : vector<32x16xf32> to vector<32x16xbf16>
    %95 = vector.extract_strided_slice %14 {offsets = [0, 24], sizes = [16, 8], strides = [1, 1]} : vector<16x32xbf16> to vector<16x8xbf16>
    %cst_31 = arith.constant dense<0.000000e+00> : vector<32x8xf32>
    %96 = tpu.matmul %94, %95, %cst_31 {dimension_numbers = #tpu.dot_dimension_numbers<[1], [0], [0], [1], [0, 0, 1, 1], [], []>} : vector<32x16xbf16>, vector<16x8xbf16>, vector<32x8xf32> -> vector<32x8xf32>
    %c0_32 = arith.constant 0 : index
    %c0_33 = arith.constant 0 : index
    %97 = vector.load %arg21[%c0_32, %c0_33] : memref<32x4xf32, #tpu.memory_space<vmem>>, vector<32x4xf32>
    tpu.vector_store %arg21[%c0_32, %c0_33], %58 {strides = array<i32>} : memref<32x4xf32, #tpu.memory_space<vmem>>, vector<32x4xf32>,
    %c0_34 = arith.constant 0 : index
    %c0_35 = arith.constant 0 : index
    %98 = vector.load %arg22[%c0_34, %c0_35] : memref<32x4xf32, #tpu.memory_space<vmem>>, vector<32x4xf32>
    %99 = arith.mulf %60, %98 : vector<32x4xf32>
    %100 = tpu.concatenate %66, %75, %84, %93 in 1 : vector<32x1xf32>, vector<32x1xf32>, vector<32x1xf32>, vector<32x1xf32> -> vector<32x4xf32>
    %101 = arith.addf %99, %100 : vector<32x4xf32>
    %c0_36 = arith.constant 0 : index
    %c0_37 = arith.constant 0 : index
    %102 = vector.load %arg22[%c0_36, %c0_37] : memref<32x4xf32, #tpu.memory_space<vmem>>, vector<32x4xf32>
    tpu.vector_store %arg22[%c0_36, %c0_37], %101 {strides = array<i32>} : memref<32x4xf32, #tpu.memory_space<vmem>>, vector<32x4xf32>,
    %103 = vector.extract_strided_slice %60 {offsets = [0, 0], sizes = [32, 1], strides = [1, 1]} : vector<32x4xf32> to vector<32x1xf32>
    %104 = vector.shape_cast %103 : vector<32x1xf32> to vector<32x1xf32>
    %105 = vector.broadcast %104 : vector<32x1xf32> to vector<32x8xf32>
    %106 = vector.extract_strided_slice %60 {offsets = [0, 1], sizes = [32, 1], strides = [1, 1]} : vector<32x4xf32> to vector<32x1xf32>
    %107 = vector.shape_cast %106 : vector<32x1xf32> to vector<32x1xf32>
    %108 = vector.broadcast %107 : vector<32x1xf32> to vector<32x8xf32>
    %109 = vector.extract_strided_slice %60 {offsets = [0, 2], sizes = [32, 1], strides = [1, 1]} : vector<32x4xf32> to vector<32x1xf32>
    %110 = vector.shape_cast %109 : vector<32x1xf32> to vector<32x1xf32>
    %111 = vector.broadcast %110 : vector<32x1xf32> to vector<32x8xf32>
    %112 = vector.extract_strided_slice %60 {offsets = [0, 3], sizes = [32, 1], strides = [1, 1]} : vector<32x4xf32> to vector<32x1xf32>
    %113 = vector.shape_cast %112 : vector<32x1xf32> to vector<32x1xf32>
    %114 = vector.broadcast %113 : vector<32x1xf32> to vector<32x8xf32>
    %115 = tpu.concatenate %105, %108, %111, %114 in 1 : vector<32x8xf32>, vector<32x8xf32>, vector<32x8xf32>, vector<32x8xf32> -> vector<32x32xf32>
    %c0_38 = arith.constant 0 : index
    %c0_39 = arith.constant 0 : index
    %116 = vector.load %arg23[%c0_38, %c0_39] : memref<32x32xf32, #tpu.memory_space<vmem>>, vector<32x32xf32>
    %117 = arith.mulf %115, %116 : vector<32x32xf32>
    %118 = tpu.concatenate %69, %78, %87, %96 in 1 : vector<32x8xf32>, vector<32x8xf32>, vector<32x8xf32>, vector<32x8xf32> -> vector<32x32xf32>
    %119 = arith.addf %117, %118 : vector<32x32xf32>
    %c0_40 = arith.constant 0 : index
    %c0_41 = arith.constant 0 : index
    %120 = vector.load %arg23[%c0_40, %c0_41] : memref<32x32xf32, #tpu.memory_space<vmem>>, vector<32x32xf32>
    tpu.vector_store %arg23[%c0_40, %c0_41], %119 {strides = array<i32>} : memref<32x32xf32, #tpu.memory_space<vmem>>, vector<32x32xf32>,
    %c1_i32 = arith.constant 1 : i32
    %121 = arith.cmpi eq, %arg2, %c1_i32 : i32
    %122 = arith.extui %121 : i1 to i32
    %c0_i32_42 = arith.constant 0 : i32
    %123 = arith.cmpi ne, %122, %c0_i32_42 : i32
    scf.if %123 {
      %c0_43 = arith.constant 0 : index
      %c0_44 = arith.constant 0 : index
      %124 = vector.load %arg22[%c0_43, %c0_44] : memref<32x4xf32, #tpu.memory_space<vmem>>, vector<32x4xf32>
      %125 = tpu.reciprocal %124 {approx = true} : vector<32x4xf32> -> vector<32x4xf32>
      %126 = vector.extract_strided_slice %125 {offsets = [0, 0], sizes = [32, 1], strides = [1, 1]} : vector<32x4xf32> to vector<32x1xf32>
      %127 = vector.shape_cast %126 : vector<32x1xf32> to vector<32x1xf32>
      %128 = vector.broadcast %127 : vector<32x1xf32> to vector<32x8xf32>
      %129 = vector.extract_strided_slice %125 {offsets = [0, 1], sizes = [32, 1], strides = [1, 1]} : vector<32x4xf32> to vector<32x1xf32>
      %130 = vector.shape_cast %129 : vector<32x1xf32> to vector<32x1xf32>
      %131 = vector.broadcast %130 : vector<32x1xf32> to vector<32x8xf32>
      %132 = vector.extract_strided_slice %125 {offsets = [0, 2], sizes = [32, 1], strides = [1, 1]} : vector<32x4xf32> to vector<32x1xf32>
      %133 = vector.shape_cast %132 : vector<32x1xf32> to vector<32x1xf32>
      %134 = vector.broadcast %133 : vector<32x1xf32> to vector<32x8xf32>
      %135 = vector.extract_strided_slice %125 {offsets = [0, 3], sizes = [32, 1], strides = [1, 1]} : vector<32x4xf32> to vector<32x1xf32>
      %136 = vector.shape_cast %135 : vector<32x1xf32> to vector<32x1xf32>
      %137 = vector.broadcast %136 : vector<32x1xf32> to vector<32x8xf32>
      %138 = tpu.concatenate %128, %131, %134, %137 in 1 : vector<32x8xf32>, vector<32x8xf32>, vector<32x8xf32>, vector<32x8xf32> -> vector<32x32xf32>
      %c0_45 = arith.constant 0 : index
      %c0_46 = arith.constant 0 : index
      %139 = vector.load %arg23[%c0_45, %c0_46] : memref<32x32xf32, #tpu.memory_space<vmem>>, vector<32x32xf32>
      %140 = arith.mulf %139, %138 : vector<32x32xf32>
      %141 = arith.truncf %140 : vector<32x32xf32> to vector<32x32xbf16>
      %c0_47 = arith.constant 0 : index
      %c0_48 = arith.constant 0 : index
      %c0_49 = arith.constant 0 : index
      %142 = vector.load %arg8[%c0_47, %c0_48, %c0_49] : memref<1x32x32xbf16, #tpu.memory_space<vmem>>, vector<1x32x32xbf16>
      %143 = vector.shape_cast %142 : vector<1x32x32xbf16> to vector<32x32xbf16>
      %cst_50 = arith.constant dense<0.000000e+00> : vector<32x32xf32>
      %144 = tpu.matmul %141, %143, %cst_50 {dimension_numbers = #tpu.dot_dimension_numbers<[1], [0], [0], [1], [0, 0, 1, 1], [], []>} : vector<32x32xbf16>, vector<32x32xbf16>, vector<32x32xf32> -> vector<32x32xf32>
      %c0_51 = arith.constant 0 : index
      %c0_52 = arith.constant 0 : index
      %c0_53 = arith.constant 0 : index
      %145 = vector.load %arg9[%c0_51, %c0_52, %c0_53] : memref<1x1x32xf32, #tpu.memory_space<vmem>>, vector<1x1x32xf32>
      %146 = vector.shape_cast %145 : vector<1x1x32xf32> to vector<1x32xf32>
      %147 = vector.broadcast %146 : vector<1x32xf32> to vector<32x32xf32>
      %148 = arith.addf %144, %147 : vector<32x32xf32>
      %c0_54 = arith.constant 0 : index
      %c0_55 = arith.constant 0 : index
      %149 = vector.load %arg17[%c0_54, %c0_55] : memref<32x32xf32, #tpu.memory_space<vmem>>, vector<32x32xf32>
      %150 = arith.addf %149, %148 : vector<32x32xf32>
      %c0_56 = arith.constant 0 : index
      %c0_57 = arith.constant 0 : index
      %c0_58 = arith.constant 0 : index
      %151 = vector.load %arg10[%c0_56, %c0_57, %c0_58] : memref<1x1x32xf32, #tpu.memory_space<vmem>>, vector<1x1x32xf32>
      %152 = vector.shape_cast %151 : vector<1x1x32xf32> to vector<1x32xf32>
      %c0_59 = arith.constant 0 : index
      %c0_60 = arith.constant 0 : index
      %c0_61 = arith.constant 0 : index
      %153 = vector.load %arg11[%c0_59, %c0_60, %c0_61] : memref<1x1x32xf32, #tpu.memory_space<vmem>>, vector<1x1x32xf32>
      %154 = vector.shape_cast %153 : vector<1x1x32xf32> to vector<1x32xf32>
      %cst_62 = arith.constant dense<0.000000e+00> : vector<32xf32>
      %155 = vector.multi_reduction <add>, %150, %cst_62 [1] : vector<32x32xf32> to vector<32xf32>
      %156 = vector.shape_cast %155 : vector<32xf32> to vector<32x1xf32>
      %cst_63 = arith.constant 3.200000e+01 : f32
      %157 = vector.broadcast %cst_63 : f32 to vector<32x1xf32>
      %158 = arith.divf %156, %157 : vector<32x1xf32>
      %159 = vector.broadcast %158 : vector<32x1xf32> to vector<32x32xf32>
      %160 = arith.subf %150, %159 : vector<32x32xf32>
      %161 = arith.mulf %160, %160 : vector<32x32xf32>
      %cst_64 = arith.constant dense<0.000000e+00> : vector<32xf32>
      %162 = vector.multi_reduction <add>, %161, %cst_64 [1] : vector<32x32xf32> to vector<32xf32>
      %163 = vector.shape_cast %162 : vector<32xf32> to vector<32x1xf32>
      %cst_65 = arith.constant 3.200000e+01 : f32
      %164 = vector.broadcast %cst_65 : f32 to vector<32x1xf32>
      %165 = arith.divf %163, %164 : vector<32x1xf32>
      %cst_66 = arith.constant 9.99999974E-6 : f32
      %166 = vector.broadcast %cst_66 : f32 to vector<32x1xf32>
      %167 = arith.addf %165, %166 : vector<32x1xf32>
      %168 = math.rsqrt %167 : vector<32x1xf32>
      %169 = vector.broadcast %168 : vector<32x1xf32> to vector<32x32xf32>
      %170 = arith.mulf %160, %169 : vector<32x32xf32>
      %171 = vector.broadcast %152 : vector<1x32xf32> to vector<32x32xf32>
      %172 = arith.mulf %170, %171 : vector<32x32xf32>
      %173 = vector.broadcast %154 : vector<1x32xf32> to vector<32x32xf32>
      %174 = arith.addf %172, %173 : vector<32x32xf32>
      %175 = arith.truncf %174 : vector<32x32xf32> to vector<32x32xbf16>
      %c0_67 = arith.constant 0 : index
      %c0_68 = arith.constant 0 : index
      %c0_69 = arith.constant 0 : index
      %176 = vector.load %arg12[%c0_67, %c0_68, %c0_69] : memref<1x32x128xbf16, #tpu.memory_space<vmem>>, vector<1x32x128xbf16>
      %177 = vector.shape_cast %176 : vector<1x32x128xbf16> to vector<32x128xbf16>
      %cst_70 = arith.constant dense<0.000000e+00> : vector<32x128xf32>
      %178 = tpu.matmul %175, %177, %cst_70 {dimension_numbers = #tpu.dot_dimension_numbers<[1], [0], [0], [1], [0, 0, 1, 1], [], []>} : vector<32x32xbf16>, vector<32x128xbf16>, vector<32x128xf32> -> vector<32x128xf32>
      %c0_71 = arith.constant 0 : index
      %c0_72 = arith.constant 0 : index
      %c0_73 = arith.constant 0 : index
      %179 = vector.load %arg13[%c0_71, %c0_72, %c0_73] : memref<1x1x128xf32, #tpu.memory_space<vmem>>, vector<1x1x128xf32>
      %180 = vector.shape_cast %179 : vector<1x1x128xf32> to vector<1x128xf32>
      %181 = vector.broadcast %180 : vector<1x128xf32> to vector<32x128xf32>
      %182 = arith.addf %178, %181 : vector<32x128xf32>
      %cst_74 = arith.constant 5.000000e-01 : f32
      %183 = vector.broadcast %cst_74 : f32 to vector<32x128xf32>
      %184 = arith.mulf %183, %182 : vector<32x128xf32>
      %cst_75 = arith.constant 4.471500e-02 : f32
      %185 = vector.broadcast %cst_75 : f32 to vector<32x128xf32>
      %186 = arith.mulf %185, %182 : vector<32x128xf32>
      %187 = arith.mulf %186, %182 : vector<32x128xf32>
      %188 = arith.mulf %187, %182 : vector<32x128xf32>
      %189 = arith.addf %182, %188 : vector<32x128xf32>
      %cst_76 = arith.constant 0.797884583 : f32
      %190 = vector.broadcast %cst_76 : f32 to vector<32x128xf32>
      %191 = arith.mulf %190, %189 : vector<32x128xf32>
      %192 = math.tanh %191 : vector<32x128xf32>
      %cst_77 = arith.constant 1.000000e+00 : f32
      %193 = vector.broadcast %cst_77 : f32 to vector<32x128xf32>
      %194 = arith.addf %193, %192 : vector<32x128xf32>
      %195 = arith.mulf %184, %194 : vector<32x128xf32>
      %196 = arith.truncf %195 : vector<32x128xf32> to vector<32x128xbf16>
      %c0_78 = arith.constant 0 : index
      %c0_79 = arith.constant 0 : index
      %c0_80 = arith.constant 0 : index
      %197 = vector.load %arg14[%c0_78, %c0_79, %c0_80] : memref<1x128x32xbf16, #tpu.memory_space<vmem>>, vector<1x128x32xbf16>
      %198 = vector.shape_cast %197 : vector<1x128x32xbf16> to vector<128x32xbf16>
      %cst_81 = arith.constant dense<0.000000e+00> : vector<32x32xf32>
      %199 = tpu.matmul %196, %198, %cst_81 {dimension_numbers = #tpu.dot_dimension_numbers<[1], [0], [0], [1], [0, 0, 1, 1], [], []>} : vector<32x128xbf16>, vector<128x32xbf16>, vector<32x32xf32> -> vector<32x32xf32>
      %c0_82 = arith.constant 0 : index
      %c0_83 = arith.constant 0 : index
      %c0_84 = arith.constant 0 : index
      %200 = vector.load %arg15[%c0_82, %c0_83, %c0_84] : memref<1x1x32xf32, #tpu.memory_space<vmem>>, vector<1x1x32xf32>
      %201 = vector.shape_cast %200 : vector<1x1x32xf32> to vector<1x32xf32>
      %202 = vector.broadcast %201 : vector<1x32xf32> to vector<32x32xf32>
      %203 = arith.addf %199, %202 : vector<32x32xf32>
      %204 = arith.addf %150, %203 : vector<32x32xf32>
      %c0_85 = arith.constant 0 : index
      %c0_86 = arith.constant 0 : index
      %205 = vector.load %arg17[%c0_85, %c0_86] : memref<32x32xf32, #tpu.memory_space<vmem>>, vector<32x32xf32>
      tpu.vector_store %arg17[%c0_85, %c0_86], %204 {strides = array<i32>} : memref<32x32xf32, #tpu.memory_space<vmem>>, vector<32x32xf32>,
      %c1_i32_87 = arith.constant 1 : i32
      %206 = arith.cmpi eq, %arg1, %c1_i32_87 : i32
      %207 = arith.extui %206 : i1 to i32
      %c0_i32_88 = arith.constant 0 : i32
      %208 = arith.cmpi ne, %207, %c0_i32_88 : i32
      scf.if %208 {
        %c0_89 = arith.constant 0 : index
        %c0_90 = arith.constant 0 : index
        %c0_91 = arith.constant 0 : index
        %209 = vector.load %arg16[%c0_89, %c0_90, %c0_91] : memref<1x32x32xf32, #tpu.memory_space<vmem>>, vector<1x32x32xf32>
        %210 = vector.shape_cast %209 : vector<1x32x32xf32> to vector<32x32xf32>
        %211 = vector.shape_cast %204 : vector<32x32xf32> to vector<1x32x32xf32>
        tpu.vector_store %arg16[%c0_89, %c0_90, %c0_91], %211 {strides = array<i32>} : memref<1x32x32xf32, #tpu.memory_space<vmem>>, vector<1x32x32xf32>,
      } else {
      }
    } else {
    }
    return
  }
  func.func @transform_0(%arg0: i32, %arg1: i32, %arg2: i32) -> (i32, i32, i32) {
    %c0_i32 = arith.constant 0 : i32
    %c0_i32_0 = arith.constant 0 : i32
    %c0_i32_1 = arith.constant 0 : i32
    return %arg0, %c0_i32, %c0_i32_0 : i32, i32, i32
  }
  func.func @transform_1(%arg0: i32, %arg1: i32, %arg2: i32) -> (i32, i32, i32, i32) {
    %c0_i32 = arith.constant 0 : i32
    %c0_i32_0 = arith.constant 0 : i32
    %c0_i32_1 = arith.constant 0 : i32
    return %arg0, %c0_i32, %arg2, %c0_i32_0 : i32, i32, i32, i32
  }
  func.func @transform_2(%arg0: i32, %arg1: i32, %arg2: i32) -> (i32, i32, i32) {
    %c0_i32 = arith.constant 0 : i32
    %c0_i32_0 = arith.constant 0 : i32
    %c0_i32_1 = arith.constant 0 : i32
    return %arg1, %c0_i32, %c0_i32_0 : i32, i32, i32
  }
  func.func @transform_3(%arg0: i32, %arg1: i32, %arg2: i32) -> (i32, i32, i32) {
    %c0_i32 = arith.constant 0 : i32
    %c0_i32_0 = arith.constant 0 : i32
    %c0_i32_1 = arith.constant 0 : i32
    return %arg1, %c0_i32, %c0_i32_0 : i32, i32, i32
  }
  func.func @transform_4(%arg0: i32, %arg1: i32, %arg2: i32) -> (i32, i32, i32) {
    %c0_i32 = arith.constant 0 : i32
    %c0_i32_0 = arith.constant 0 : i32
    %c0_i32_1 = arith.constant 0 : i32
    return %arg1, %c0_i32, %c0_i32_0 : i32, i32, i32
  }
  func.func @transform_5(%arg0: i32, %arg1: i32, %arg2: i32) -> (i32, i32, i32) {
    %c0_i32 = arith.constant 0 : i32
    %c0_i32_0 = arith.constant 0 : i32
    %c0_i32_1 = arith.constant 0 : i32
    return %arg1, %c0_i32, %c0_i32_0 : i32, i32, i32
  }
  func.func @transform_6(%arg0: i32, %arg1: i32, %arg2: i32) -> (i32, i32, i32) {
    %c0_i32 = arith.constant 0 : i32
    %c0_i32_0 = arith.constant 0 : i32
    %c0_i32_1 = arith.constant 0 : i32
    return %arg1, %c0_i32, %c0_i32_0 : i32, i32, i32
  }
  func.func @transform_7(%arg0: i32, %arg1: i32, %arg2: i32) -> (i32, i32, i32) {
    %c0_i32 = arith.constant 0 : i32
    %c0_i32_0 = arith.constant 0 : i32
    %c0_i32_1 = arith.constant 0 : i32
    return %arg1, %c0_i32, %c0_i32_0 : i32, i32, i32
  }
  func.func @transform_8(%arg0: i32, %arg1: i32, %arg2: i32) -> (i32, i32, i32) {
    %c0_i32 = arith.constant 0 : i32
    %c0_i32_0 = arith.constant 0 : i32
    %c0_i32_1 = arith.constant 0 : i32
    return %arg1, %c0_i32, %c0_i32_0 : i32, i32, i32
  }
  func.func @transform_9(%arg0: i32, %arg1: i32, %arg2: i32) -> (i32, i32, i32) {
    %c0_i32 = arith.constant 0 : i32
    %c0_i32_0 = arith.constant 0 : i32
    %c0_i32_1 = arith.constant 0 : i32
    return %arg1, %c0_i32, %c0_i32_0 : i32, i32, i32
  }
  func.func @transform_10(%arg0: i32, %arg1: i32, %arg2: i32) -> (i32, i32, i32) {
    %c0_i32 = arith.constant 0 : i32
    %c0_i32_0 = arith.constant 0 : i32
    %c0_i32_1 = arith.constant 0 : i32
    return %arg1, %c0_i32, %c0_i32_0 : i32, i32, i32
  }
  func.func @transform_11(%arg0: i32, %arg1: i32, %arg2: i32) -> (i32, i32, i32) {
    %c0_i32 = arith.constant 0 : i32
    %c0_i32_0 = arith.constant 0 : i32
    %c0_i32_1 = arith.constant 0 : i32
    return %arg1, %c0_i32, %c0_i32_0 : i32, i32, i32
  }
  func.func @transform_12(%arg0: i32, %arg1: i32, %arg2: i32) -> (i32, i32, i32) {
    %c0_i32 = arith.constant 0 : i32
    %c0_i32_0 = arith.constant 0 : i32
    %c0_i32_1 = arith.constant 0 : i32
    return %arg1, %c0_i32, %c0_i32_0 : i32, i32, i32
  }
  func.func @transform_13(%arg0: i32, %arg1: i32, %arg2: i32) -> (i32, i32, i32) {
    %c0_i32 = arith.constant 0 : i32
    %c0_i32_0 = arith.constant 0 : i32
    %c0_i32_1 = arith.constant 0 : i32
    return %arg0, %c0_i32, %c0_i32_0 : i32, i32, i32
  }
}

</mosaic_0001>

<llo_original>
// kernel: tpu_custom_call.1
$region0: #{tpu_custom_call.1}
  #allocation0 [shape = 'u32[]', space=smem, size = 0x4, offset = 0x4, fixed_abs, tag = 'smem constant byte address 0x4 - core index']
  #allocation1 [shape = 'u32[144,128]{1,0:T(1,128)}', space=vmem, size = 0x12000, scoped, tag = 'internal scratch']
  #allocation2 [shape = 'f32[32,32]{1,0:T(8,128)}', space=vmem, size = 0x4000, scoped, tag = 'scratch operand']
  #allocation3 [shape = 'bf16[32,32]{1,0:T(16,128)(2,1)}', space=vmem, size = 0x2000, scoped, tag = 'scratch operand']
  #allocation4 [shape = 'bf16[32,32]{1,0:T(16,128)(2,1)}', space=vmem, size = 0x2000, scoped, tag = 'scratch operand']
  #allocation5 [shape = 'bf16[32,32]{1,0:T(16,128)(2,1)}', space=vmem, size = 0x2000, scoped, tag = 'scratch operand']
  #allocation6 [shape = 'f32[32,4]{1,0:T(8,128)}', space=vmem, size = 0x4000, scoped, tag = 'scratch operand']
  #allocation7 [shape = 'f32[32,4]{1,0:T(8,128)}', space=vmem, size = 0x4000, scoped, tag = 'scratch operand']
  #allocation8 [shape = 'f32[32,32]{1,0:T(8,128)}', space=vmem, size = 0x4000, scoped, tag = 'scratch operand']
  #allocation16 [shape = 's32[]', space=sflag, size = 0x4, offset = 0, fixed_abs, tag = 'sflag constant byte address 0x0 - dummy sync flag']
  %s0 = inlined_call_operand.vmem [shape: f32[2,32,32], index: 0, kind: input, shape index: {}]
  %s1 = inlined_call_operand.hbm [shape: bf16[2,32,32,32], index: 1, kind: input, shape index: {}]
  %s2 = inlined_call_operand.vmem [shape: f32[2,1,32], index: 2, kind: input, shape index: {}]
  %s3 = inlined_call_operand.vmem [shape: f32[2,1,32], index: 3, kind: input, shape index: {}]
  %s4 = inlined_call_operand.vmem [shape: bf16[2,32,96], index: 4, kind: input, shape index: {}]
  %s5 = inlined_call_operand.vmem [shape: bf16[2,32,32], index: 5, kind: input, shape index: {}]
  %s6 = inlined_call_operand.vmem [shape: f32[2,1,32], index: 6, kind: input, shape index: {}]
  %s7 = inlined_call_operand.vmem [shape: f32[2,1,32], index: 7, kind: input, shape index: {}]
  %s8 = inlined_call_operand.hbm [shape: f32[2,1,32], index: 8, kind: input, shape index: {}]
  %s9 = inlined_call_operand.vmem [shape: bf16[2,32,128], index: 9, kind: input, shape index: {}]
  %s10 = inlined_call_operand.hbm [shape: f32[2,1,128], index: 10, kind: input, shape index: {}]
  %s11 = inlined_call_operand.vmem [shape: bf16[2,128,32], index: 11, kind: input, shape index: {}]
  %s12 = inlined_call_operand.vmem [shape: f32[2,1,32], index: 12, kind: input, shape index: {}]
  %s13 = inlined_call_operand.hbm [shape: f32[2,32,32], index: 13, kind: output, shape index: {}]
  %s14 = sld [smem:[#allocation0]]
  $region113: #{tpu_custom_call.1} parent=0
    _
  %s16 = ssub.s32 1, %s14
  %s17 = scalar_select 0, %s16, %s14
  $region1: #{tpu_custom_call.1} parent=0
    #allocation9 [shape = 'u8[262144]{0}', space=vmem, size = 0x40000, scoped, tag = 'input window, operand 1']
    #allocation10 [shape = 's32[2]{0}', space=sflag, size = 0x8, scoped, tag = 'scoped memory for tpu_custom_call.1']
    #allocation11 [shape = 's32[2]{0}', space=sflag, size = 0x8, scoped, tag = 'scoped memory for tpu_custom_call.1']
    #allocation12 [shape = 'u8[1024]{0}', space=vmem, size = 0x400, scoped, tag = 'input window, operand 8']
    #allocation13 [shape = 's32[2]{0}', space=sflag, size = 0x8, scoped, tag = 'scoped memory for tpu_custom_call.1']
    #allocation14 [shape = 'u8[1024]{0}', space=vmem, size = 0x400, scoped, tag = 'input window, operand 10']
    #allocation15 [shape = 'u8[32768]{0}', space=vmem, size = 0x8000, scoped, tag = 'output window, operand 0']
    %18 = vsyncpa [#allocation10], 0
    %s19 = scalar_lea.sflag [#allocation10], 1
    %20 = vsyncpa %s19, 0
    %21 = vsyncpa [#allocation13], 0
    %s22 = scalar_lea.sflag [#allocation13], 1
    %23 = vsyncpa %s22, 0
    %24 = vsyncpa [#allocation11], 0
    %s25 = scalar_lea.sflag [#allocation11], 1
    %26 = vsyncpa %s25, 0
    loop: start=0, step=1, limit=10
    $region2: #{tpu_custom_call.1} parent=1 // loop_pre_header
      _
    $region3: #{tpu_custom_call.1} parent=1 // loop_header
      %s28 = sphi 0, %s32
      %p29 = scmp.ge.s32.totalorder %s28, 10
      %s35 = sphi 0, %s54
      %s36 = sphi 0, %s50
      %s37 = sphi 0, %s46
      %s38 = sphi 0, %s35
      %s39 = sphi 0, %s36
      %s40 = sphi 0, %s37
      %s41 = sphi 0, %s38
      %s42 = sphi 0, %s39
      %s43 = sphi 0, %s40
      %s57 = sphi 0, %s59
      %s60 = sphi 0, %s57
      %s61 = sphi 0, %s60
      %s77 = sphi 0, %s61
      %s85 = sphi 0, %s87
      %s88 = sphi 0, %s85
      %s89 = sphi 0, %s88
      %s105 = sphi 0, %s89
      %s111 = sphi 0, %s113
      %s114 = sphi 0, %s111
      %s115 = sphi 0, %s114
      %s131 = sphi 0, %s115
      %s137 = sphi 0, %s139
      %s140 = sphi 0, %s137
      %s141 = sphi 0, %s140
      %s157 = sphi 0, %s141
      %s163 = sphi 0, %s165
      %s166 = sphi 0, %s163
      %s167 = sphi 0, %s166
      %s183 = sphi 0, %s167
      %s189 = sphi 0, %s191
      %s192 = sphi 0, %s189
      %s193 = sphi 0, %s192
      %s209 = sphi 0, %s193
      %s215 = sphi 0, %s217
      %s218 = sphi 0, %s215
      %s219 = sphi 0, %s218
      %s235 = sphi 0, %s219
      %s241 = sphi 0, %s243
      %s244 = sphi 0, %s241
      %s245 = sphi 0, %s244
      %s261 = sphi 0, %s245
      %s267 = sphi 0, %s269
      %s270 = sphi 0, %s267
      %s271 = sphi 0, %s270
      %s287 = sphi 0, %s271
      %s293 = sphi 0, %s295
      %s296 = sphi 0, %s293
      %s297 = sphi 0, %s296
      %s313 = sphi 0, %s297
      %s319 = sphi 0, %s321
      %s322 = sphi 0, %s319
      %s323 = sphi 0, %s322
      %s339 = sphi 0, %s323
      %s345 = sphi 0, %s347
      %s348 = sphi 0, %s345
      %s349 = sphi 0, %s348
      %s365 = sphi 0, %s349
      %s371 = sphi 0, %s373
      %s374 = sphi 0, %s371
      %s375 = sphi 0, %s374
      %s391 = sphi 0, %s375
      %s397 = sphi 0, %s399
      %s400 = sphi 0, %s397
      %s401 = sphi 0, %s400
      %s417 = sphi 0, %s401
    $region4: #{tpu_custom_call.1} parent=1 // loop_header_branch
      %31 = sbr.rel (%p29) target = $region8
    $region5: #{tpu_custom_call.1} parent=1 // loop_body
      %s33 = ssub.s32 %s28, 1
      %s34 = ssub.s32 %s28, 2
      %s44 = sadd.s32 1, %s37
      %p45 = scmp.ge.s32.totalorder %s44, 2
      %s46 = scalar_select %p45, 0, %s44
      %s47 = sadd.s32 1, %s36
      %s48 = scalar_select %p45, %s47, %s36
      %p49 = scmp.ge.s32.totalorder %s48, 2
      %s50 = scalar_select %p49, 0, %s48
      %s51 = sadd.s32 1, %s35
      %s52 = scalar_select %p49, %s51, %s35
      %p53 = scmp.ge.s32.totalorder %s52, 2
      %s54 = scalar_select %p53, 0, %s52
      %s55 = ssub.s32 %s35, %s54
      %p56 = scmp.eq.s32.totalorder %s55, 0
      %s58 = sadd.s32 %s57, 1
      %s59 = scalar_select %p56, %s57, %s58
      %p62 = pneg %p56
      %p63 = scmp.eq.s32.totalorder %s28, 7
      %p64 = por %p62, %p63
      %p65 = scmp.ne.s32.totalorder %s57, %s60
      %p66 = scmp.eq.s32.totalorder %s28, 0
      %p67 = por %p65, %p66
      %p68 = scmp.ne.s32.totalorder %s57, %s60
      %p69 = scmp.eq.s32.totalorder %s33, 7
      %p70 = por %p68, %p69
      %p71 = scmp.ne.s32.totalorder %s60, %s61
      %p72 = scmp.eq.s32.totalorder %s33, 0
      %p73 = por %p71, %p72
      %p74 = scmp.ne.s32.totalorder %s60, %s61
      %p75 = scmp.eq.s32.totalorder %s34, 7
      %p76 = por %p74, %p75
      %p78 = scmp.ne.s32.totalorder %s61, %s77
      %p79 = scmp.eq.s32.totalorder %s34, 0
      %p80 = por %p78, %p79
      %s81 = ssub.s32 %s35, %s54
      %s82 = ssub.s32 %s37, %s46
      %s83 = sor.u32 %s81, %s82
      %p84 = scmp.eq.s32.totalorder %s83, 0
      %s86 = sadd.s32 %s85, 1
      %s87 = scalar_select %p84, %s85, %s86
      %p90 = pneg %p84
      %p91 = scmp.eq.s32.totalorder %s28, 7
      %p92 = por %p90, %p91
      %p93 = scmp.ne.s32.totalorder %s85, %s88
      %p94 = scmp.eq.s32.totalorder %s28, 0
      %p95 = por %p93, %p94
      %p96 = scmp.ne.s32.totalorder %s85, %s88
      %p97 = scmp.eq.s32.totalorder %s33, 7
      %p98 = por %p96, %p97
      %p99 = scmp.ne.s32.totalorder %s88, %s89
      %p100 = scmp.eq.s32.totalorder %s33, 0
      %p101 = por %p99, %p100
      %p102 = scmp.ne.s32.totalorder %s88, %s89
      %p103 = scmp.eq.s32.totalorder %s34, 7
      %p104 = por %p102, %p103
      %p106 = scmp.ne.s32.totalorder %s89, %s105
      %p107 = scmp.eq.s32.totalorder %s34, 0
      %p108 = por %p106, %p107
      %s109 = ssub.s32 %s36, %s50
      %p110 = scmp.eq.s32.totalorder %s109, 0
      %s112 = sadd.s32 %s111, 1
      %s113 = scalar_select %p110, %s111, %s112
      %p116 = pneg %p110
      %p117 = scmp.eq.s32.totalorder %s28, 7
      %p118 = por %p116, %p117
      %p119 = scmp.ne.s32.totalorder %s111, %s114
      %p120 = scmp.eq.s32.totalorder %s28, 0
      %p121 = por %p119, %p120
      %p122 = scmp.ne.s32.totalorder %s111, %s114
      %p123 = scmp.eq.s32.totalorder %s33, 7
      %p124 = por %p122, %p123
      %p125 = scmp.ne.s32.totalorder %s114, %s115
      %p126 = scmp.eq.s32.totalorder %s33, 0
      %p127 = por %p125, %p126
      %p128 = scmp.ne.s32.totalorder %s114, %s115
      %p129 = scmp.eq.s32.totalorder %s34, 7
      %p130 = por %p128, %p129
      %p132 = scmp.ne.s32.totalorder %s115, %s131
      %p133 = scmp.eq.s32.totalorder %s34, 0
      %p134 = por %p132, %p133
      %s135 = ssub.s32 %s36, %s50
      %p136 = scmp.eq.s32.totalorder %s135, 0
      %s138 = sadd.s32 %s137, 1
      %s139 = scalar_select %p136, %s137, %s138
      %p142 = pneg %p136
      %p143 = scmp.eq.s32.totalorder %s28, 7
      %p144 = por %p142, %p143
      %p145 = scmp.ne.s32.totalorder %s137, %s140
      %p146 = scmp.eq.s32.totalorder %s28, 0
      %p147 = por %p145, %p146
      %p148 = scmp.ne.s32.totalorder %s137, %s140
      %p149 = scmp.eq.s32.totalorder %s33, 7
      %p150 = por %p148, %p149
      %p151 = scmp.ne.s32.totalorder %s140, %s141
      %p152 = scmp.eq.s32.totalorder %s33, 0
      %p153 = por %p151, %p152
      %p154 = scmp.ne.s32.totalorder %s140, %s141
      %p155 = scmp.eq.s32.totalorder %s34, 7
      %p156 = por %p154, %p155
      %p158 = scmp.ne.s32.totalorder %s141, %s157
      %p159 = scmp.eq.s32.totalorder %s34, 0
      %p160 = por %p158, %p159
      %s161 = ssub.s32 %s36, %s50
      %p162 = scmp.eq.s32.totalorder %s161, 0
      %s164 = sadd.s32 %s163, 1
      %s165 = scalar_select %p162, %s163, %s164
      %p168 = pneg %p162
      %p169 = scmp.eq.s32.totalorder %s28, 7
      %p170 = por %p168, %p169
      %p171 = scmp.ne.s32.totalorder %s163, %s166
      %p172 = scmp.eq.s32.totalorder %s28, 0
      %p173 = por %p171, %p172
      %p174 = scmp.ne.s32.totalorder %s163, %s166
      %p175 = scmp.eq.s32.totalorder %s33, 7
      %p176 = por %p174, %p175
      %p177 = scmp.ne.s32.totalorder %s166, %s167
      %p178 = scmp.eq.s32.totalorder %s33, 0
      %p179 = por %p177, %p178
      %p180 = scmp.ne.s32.totalorder %s166, %s167
      %p181 = scmp.eq.s32.totalorder %s34, 7
      %p182 = por %p180, %p181
      %p184 = scmp.ne.s32.totalorder %s167, %s183
      %p185 = scmp.eq.s32.totalorder %s34, 0
      %p186 = por %p184, %p185
      %s187 = ssub.s32 %s36, %s50
      %p188 = scmp.eq.s32.totalorder %s187, 0
      %s190 = sadd.s32 %s189, 1
      %s191 = scalar_select %p188, %s189, %s190
      %p194 = pneg %p188
      %p195 = scmp.eq.s32.totalorder %s28, 7
      %p196 = por %p194, %p195
      %p197 = scmp.ne.s32.totalorder %s189, %s192
      %p198 = scmp.eq.s32.totalorder %s28, 0
      %p199 = por %p197, %p198
      %p200 = scmp.ne.s32.totalorder %s189, %s192
      %p201 = scmp.eq.s32.totalorder %s33, 7
      %p202 = por %p200, %p201
      %p203 = scmp.ne.s32.totalorder %s192, %s193
      %p204 = scmp.eq.s32.totalorder %s33, 0
      %p205 = por %p203, %p204
      %p206 = scmp.ne.s32.totalorder %s192, %s193
      %p207 = scmp.eq.s32.totalorder %s34, 7
      %p208 = por %p206, %p207
      %p210 = scmp.ne.s32.totalorder %s193, %s209
      %p211 = scmp.eq.s32.totalorder %s34, 0
      %p212 = por %p210, %p211
      %s213 = ssub.s32 %s36, %s50
      %p214 = scmp.eq.s32.totalorder %s213, 0
      %s216 = sadd.s32 %s215, 1
      %s217 = scalar_select %p214, %s215, %s216
      %p220 = pneg %p214
      %p221 = scmp.eq.s32.totalorder %s28, 7
      %p222 = por %p220, %p221
      %p223 = scmp.ne.s32.totalorder %s215, %s218
      %p224 = scmp.eq.s32.totalorder %s28, 0
      %p225 = por %p223, %p224
      %p226 = scmp.ne.s32.totalorder %s215, %s218
      %p227 = scmp.eq.s32.totalorder %s33, 7
      %p228 = por %p226, %p227
      %p229 = scmp.ne.s32.totalorder %s218, %s219
      %p230 = scmp.eq.s32.totalorder %s33, 0
      %p231 = por %p229, %p230
      %p232 = scmp.ne.s32.totalorder %s218, %s219
      %p233 = scmp.eq.s32.totalorder %s34, 7
      %p234 = por %p232, %p233
      %p236 = scmp.ne.s32.totalorder %s219, %s235
      %p237 = scmp.eq.s32.totalorder %s34, 0
      %p238 = por %p236, %p237
      %s239 = ssub.s32 %s36, %s50
      %p240 = scmp.eq.s32.totalorder %s239, 0
      %s242 = sadd.s32 %s241, 1
      %s243 = scalar_select %p240, %s241, %s242
      %p246 = pneg %p240
      %p247 = scmp.eq.s32.totalorder %s28, 7
      %p248 = por %p246, %p247
      %p249 = scmp.ne.s32.totalorder %s241, %s244
      %p250 = scmp.eq.s32.totalorder %s28, 0
      %p251 = por %p249, %p250
      %p252 = scmp.ne.s32.totalorder %s241, %s244
      %p253 = scmp.eq.s32.totalorder %s33, 7
      %p254 = por %p252, %p253
      %p255 = scmp.ne.s32.totalorder %s244, %s245
      %p256 = scmp.eq.s32.totalorder %s33, 0
      %p257 = por %p255, %p256
      %p258 = scmp.ne.s32.totalorder %s244, %s245
      %p259 = scmp.eq.s32.totalorder %s34, 7
      %p260 = por %p258, %p259
      %p262 = scmp.ne.s32.totalorder %s245, %s261
      %p263 = scmp.eq.s32.totalorder %s34, 0
      %p264 = por %p262, %p263
      %s265 = ssub.s32 %s36, %s50
      %p266 = scmp.eq.s32.totalorder %s265, 0
      %s268 = sadd.s32 %s267, 1
      %s269 = scalar_select %p266, %s267, %s268
      %p272 = pneg %p266
      %p273 = scmp.eq.s32.totalorder %s28, 7
      %p274 = por %p272, %p273
      %p275 = scmp.ne.s32.totalorder %s267, %s270
      %p276 = scmp.eq.s32.totalorder %s28, 0
      %p277 = por %p275, %p276
      %p278 = scmp.ne.s32.totalorder %s267, %s270
      %p279 = scmp.eq.s32.totalorder %s33, 7
      %p280 = por %p278, %p279
      %p281 = scmp.ne.s32.totalorder %s270, %s271
      %p282 = scmp.eq.s32.totalorder %s33, 0
      %p283 = por %p281, %p282
      %p284 = scmp.ne.s32.totalorder %s270, %s271
      %p285 = scmp.eq.s32.totalorder %s34, 7
      %p286 = por %p284, %p285
      %p288 = scmp.ne.s32.totalorder %s271, %s287
      %p289 = scmp.eq.s32.totalorder %s34, 0
      %p290 = por %p288, %p289
      %s291 = ssub.s32 %s36, %s50
      %p292 = scmp.eq.s32.totalorder %s291, 0
      %s294 = sadd.s32 %s293, 1
      %s295 = scalar_select %p292, %s293, %s294
      %p298 = pneg %p292
      %p299 = scmp.eq.s32.totalorder %s28, 7
      %p300 = por %p298, %p299
      %p301 = scmp.ne.s32.totalorder %s293, %s296
      %p302 = scmp.eq.s32.totalorder %s28, 0
      %p303 = por %p301, %p302
      %p304 = scmp.ne.s32.totalorder %s293, %s296
      %p305 = scmp.eq.s32.totalorder %s33, 7
      %p306 = por %p304, %p305
      %p307 = scmp.ne.s32.totalorder %s296, %s297
      %p308 = scmp.eq.s32.totalorder %s33, 0
      %p309 = por %p307, %p308
      %p310 = scmp.ne.s32.totalorder %s296, %s297
      %p311 = scmp.eq.s32.totalorder %s34, 7
      %p312 = por %p310, %p311
      %p314 = scmp.ne.s32.totalorder %s297, %s313
      %p315 = scmp.eq.s32.totalorder %s34, 0
      %p316 = por %p314, %p315
      %s317 = ssub.s32 %s36, %s50
      %p318 = scmp.eq.s32.totalorder %s317, 0
      %s320 = sadd.s32 %s319, 1
      %s321 = scalar_select %p318, %s319, %s320
      %p324 = pneg %p318
      %p325 = scmp.eq.s32.totalorder %s28, 7
      %p326 = por %p324, %p325
      %p327 = scmp.ne.s32.totalorder %s319, %s322
      %p328 = scmp.eq.s32.totalorder %s28, 0
      %p329 = por %p327, %p328
      %p330 = scmp.ne.s32.totalorder %s319, %s322
      %p331 = scmp.eq.s32.totalorder %s33, 7
      %p332 = por %p330, %p331
      %p333 = scmp.ne.s32.totalorder %s322, %s323
      %p334 = scmp.eq.s32.totalorder %s33, 0
      %p335 = por %p333, %p334
      %p336 = scmp.ne.s32.totalorder %s322, %s323
      %p337 = scmp.eq.s32.totalorder %s34, 7
      %p338 = por %p336, %p337
      %p340 = scmp.ne.s32.totalorder %s323, %s339
      %p341 = scmp.eq.s32.totalorder %s34, 0
      %p342 = por %p340, %p341
      %s343 = ssub.s32 %s36, %s50
      %p344 = scmp.eq.s32.totalorder %s343, 0
      %s346 = sadd.s32 %s345, 1
      %s347 = scalar_select %p344, %s345, %s346
      %p350 = pneg %p344
      %p351 = scmp.eq.s32.totalorder %s28, 7
      %p352 = por %p350, %p351
      %p353 = scmp.ne.s32.totalorder %s345, %s348
      %p354 = scmp.eq.s32.totalorder %s28, 0
      %p355 = por %p353, %p354
      %p356 = scmp.ne.s32.totalorder %s345, %s348
      %p357 = scmp.eq.s32.totalorder %s33, 7
      %p358 = por %p356, %p357
      %p359 = scmp.ne.s32.totalorder %s348, %s349
      %p360 = scmp.eq.s32.totalorder %s33, 0
      %p361 = por %p359, %p360
      %p362 = scmp.ne.s32.totalorder %s348, %s349
      %p363 = scmp.eq.s32.totalorder %s34, 7
      %p364 = por %p362, %p363
      %p366 = scmp.ne.s32.totalorder %s349, %s365
      %p367 = scmp.eq.s32.totalorder %s34, 0
      %p368 = por %p366, %p367
      %s369 = ssub.s32 %s36, %s50
      %p370 = scmp.eq.s32.totalorder %s369, 0
      %s372 = sadd.s32 %s371, 1
      %s373 = scalar_select %p370, %s371, %s372
      %p376 = pneg %p370
      %p377 = scmp.eq.s32.totalorder %s28, 7
      %p378 = por %p376, %p377
      %p379 = scmp.ne.s32.totalorder %s371, %s374
      %p380 = scmp.eq.s32.totalorder %s28, 0
      %p381 = por %p379, %p380
      %p382 = scmp.ne.s32.totalorder %s371, %s374
      %p383 = scmp.eq.s32.totalorder %s33, 7
      %p384 = por %p382, %p383
      %p385 = scmp.ne.s32.totalorder %s374, %s375
      %p386 = scmp.eq.s32.totalorder %s33, 0
      %p387 = por %p385, %p386
      %p388 = scmp.ne.s32.totalorder %s374, %s375
      %p389 = scmp.eq.s32.totalorder %s34, 7
      %p390 = por %p388, %p389
      %p392 = scmp.ne.s32.totalorder %s375, %s391
      %p393 = scmp.eq.s32.totalorder %s34, 0
      %p394 = por %p392, %p393
      %s395 = ssub.s32 %s35, %s54
      %p396 = scmp.eq.s32.totalorder %s395, 0
      %s398 = sadd.s32 %s397, 1
      %s399 = scalar_select %p396, %s397, %s398
      %p402 = pneg %p396
      %p403 = scmp.eq.s32.totalorder %s28, 7
      %p404 = por %p402, %p403
      %p405 = scmp.ne.s32.totalorder %s397, %s400
      %p406 = scmp.eq.s32.totalorder %s28, 0
      %p407 = por %p405, %p406
      %p408 = scmp.ne.s32.totalorder %s397, %s400
      %p409 = scmp.eq.s32.totalorder %s33, 7
      %p410 = por %p408, %p409
      %p411 = scmp.ne.s32.totalorder %s400, %s401
      %p412 = scmp.eq.s32.totalorder %s33, 0
      %p413 = por %p411, %p412
      %p414 = scmp.ne.s32.totalorder %s400, %s401
      %p415 = scmp.eq.s32.totalorder %s34, 7
      %p416 = por %p414, %p415
      %p418 = scmp.ne.s32.totalorder %s401, %s417
      %p419 = scmp.eq.s32.totalorder %s34, 0
      %p420 = por %p418, %p419
      %p421 = scmp.le.s32.totalorder 1, %s28
      %p422 = scmp.lt.s32.totalorder %s28, 9
      %p423 = pnand %p421, %p422
      %p424 = pneg %p423
      // Predicated region
      $region9: #{tpu_custom_call.1} parent=5 // pred_check
        _
      $region10: #{tpu_custom_call.1} parent=5 // pred_check_branch
        %426 = sbr.rel (%p423) target = $region12
      $region11: #{tpu_custom_call.1} parent=5 // pred_region
        %s427 = ssub.s32 %s28, 1
      $region12: #{tpu_custom_call.1} parent=5 // pred_fallthru
        _
      %p428 = scmp.lt.s32.totalorder %s28, 8
      // Predicated region
      $region13: #{tpu_custom_call.1} parent=5 // pred_check
        %p429 = pneg %p428
      $region14: #{tpu_custom_call.1} parent=5 // pred_check_branch
        %431 = sbr.rel (%p429) target = $region16
      $region15: #{tpu_custom_call.1} parent=5 // pred_region
        // Predicated region
        $region17: #{tpu_custom_call.1} parent=15 // pred_check
          %p432 = pneg %p67
        $region18: #{tpu_custom_call.1} parent=15 // pred_check_branch
          %434 = sbr.rel (%p432) target = $region20
        $region19: #{tpu_custom_call.1} parent=15 // pred_region
          %p435 = scmp.lt.s32.totalorder %s35, 1
          %s436 = scalar_select %p435, %s35, 1
          %s437 = smul.addr %s436, 4
          %s438 = smul.addr %s437, 8
          %s439 = scalar_lea.vmem %s0, %s438
        $region20: #{tpu_custom_call.1} parent=15 // pred_fallthru
          _
        // Predicated region
        $region21: #{tpu_custom_call.1} parent=15 // pred_check
          %p440 = pneg %p95
        $region22: #{tpu_custom_call.1} parent=15 // pred_check_branch
          %442 = sbr.rel (%p440) target = $region24
        $region23: #{tpu_custom_call.1} parent=15 // pred_region
          #allocation17 [shape = 'u32[6]{0}', space=smem, size = 0x18, scoped, tag = 'DMA stride descriptor']
          %s443 = sand.u32 %s85, 1
          %s444 = scalar_lea.sflag [#allocation10], %s443
          %s445 = sand.u32 %s85, 1
          %s446 = smul.addr %s445, 256
          %s447 = scalar_lea.vmem [#allocation9], %s446
          %s448 = smul.u32 2, %s37
          %s450 = ssub.s32 4096, 4096
          %451 = vsyncadd %s444, %s450
          %s452 = smul.addr %s35, 128
          %s453 = sadd.s32 %s448, %s452
          %s454 = smul.addr %s453, 64
          %s455 = scalar_lea.hbm %s1, %s454
          %s457 = sshll.u32 1, 14
          %s458 = sxor.u32 4294967295, %s457
          %s460 = sld [smem:[#allocation0]]
          %s461 = sadd.s32 2, %s460
          %s463 = sshll.u32 7, 26
          %s464 = sxor.u32 4294967295, %s463
          %s465 = sand.u32 0, %s464
          %s466 = sshll.u32 %s461, 26
          %s467 = sor.u32 %s465, %s466
          %s468 = sshll.u32 %s447, 4
          %s469 = int_to_ptr.vmem [resolvable:$true] %s468
          %475 = sst [smem:[#allocation17]] 256
          %s476 = scalar_lea.smem [#allocation17], 1
          %477 = sst [smem:[%s476]] 128
          %s478 = scalar_lea.smem [#allocation17], 2
          %479 = sst [smem:[%s478]] 2
          %s480 = scalar_lea.smem [#allocation17], 3
          %481 = sst [smem:[%s480]] 64
          %s482 = scalar_lea.smem [#allocation17], 4
          %483 = sst [smem:[%s482]] 64
          %s484 = scalar_lea.smem [#allocation17], 5
          %485 = sst [smem:[%s484]] 4
          %487 = dma.general %s455, 4096, %s469, %s444, [#allocation16], [#allocation17], %s467, 0
        $region24: #{tpu_custom_call.1} parent=15 // pred_fallthru
          _
        // Predicated region
        $region25: #{tpu_custom_call.1} parent=15 // pred_check
          %p488 = pneg %p121
        $region26: #{tpu_custom_call.1} parent=15 // pred_check_branch
          %490 = sbr.rel (%p488) target = $region28
        $region27: #{tpu_custom_call.1} parent=15 // pred_region
          %p491 = scmp.lt.s32.totalorder %s36, 1
          %s492 = scalar_select %p491, %s36, 1
          %s493 = scalar_lea.vmem %s2, %s492
        $region28: #{tpu_custom_call.1} parent=15 // pred_fallthru
          _
        // Predicated region
        $region29: #{tpu_custom_call.1} parent=15 // pred_check
          %p494 = pneg %p147
        $region30: #{tpu_custom_call.1} parent=15 // pred_check_branch
          %496 = sbr.rel (%p494) target = $region32
        $region31: #{tpu_custom_call.1} parent=15 // pred_region
          %p497 = scmp.lt.s32.totalorder %s36, 1
          %s498 = scalar_select %p497, %s36, 1
          %s499 = scalar_lea.vmem %s3, %s498
        $region32: #{tpu_custom_call.1} parent=15 // pred_fallthru
          _
        // Predicated region
        $region33: #{tpu_custom_call.1} parent=15 // pred_check
          %p500 = pneg %p173
        $region34: #{tpu_custom_call.1} parent=15 // pred_check_branch
          %502 = sbr.rel (%p500) target = $region36
        $region35: #{tpu_custom_call.1} parent=15 // pred_region
          %p503 = scmp.lt.s32.totalorder %s36, 1
          %s504 = scalar_select %p503, %s36, 1
          %s505 = smul.addr %s504, 4
          %s506 = smul.addr %s505, 4
          %s507 = scalar_lea.vmem %s4, %s506
        $region36: #{tpu_custom_call.1} parent=15 // pred_fallthru
          _
        // Predicated region
        $region37: #{tpu_custom_call.1} parent=15 // pred_check
          %p508 = pneg %p199
        $region38: #{tpu_custom_call.1} parent=15 // pred_check_branch
          %510 = sbr.rel (%p508) target = $region40
        $region39: #{tpu_custom_call.1} parent=15 // pred_region
          %p511 = scmp.lt.s32.totalorder %s36, 1
          %s512 = scalar_select %p511, %s36, 1
          %s513 = smul.addr %s512, 4
          %s514 = smul.addr %s513, 4
          %s515 = scalar_lea.vmem %s5, %s514
        $region40: #{tpu_custom_call.1} parent=15 // pred_fallthru
          _
        // Predicated region
        $region41: #{tpu_custom_call.1} parent=15 // pred_check
          %p516 = pneg %p225
        $region42: #{tpu_custom_call.1} parent=15 // pred_check_branch
          %518 = sbr.rel (%p516) target = $region44
        $region43: #{tpu_custom_call.1} parent=15 // pred_region
          %p519 = scmp.lt.s32.totalorder %s36, 1
          %s520 = scalar_select %p519, %s36, 1
          %s521 = scalar_lea.vmem %s6, %s520
        $region44: #{tpu_custom_call.1} parent=15 // pred_fallthru
          _
        // Predicated region
        $region45: #{tpu_custom_call.1} parent=15 // pred_check
          %p522 = pneg %p251
        $region46: #{tpu_custom_call.1} parent=15 // pred_check_branch
          %524 = sbr.rel (%p522) target = $region48
        $region47: #{tpu_custom_call.1} parent=15 // pred_region
          %p525 = scmp.lt.s32.totalorder %s36, 1
          %s526 = scalar_select %p525, %s36, 1
          %s527 = scalar_lea.vmem %s7, %s526
        $region48: #{tpu_custom_call.1} parent=15 // pred_fallthru
          _
        // Predicated region
        $region49: #{tpu_custom_call.1} parent=15 // pred_check
          %p528 = pneg %p277
        $region50: #{tpu_custom_call.1} parent=15 // pred_check_branch
          %530 = sbr.rel (%p528) target = $region52
        $region51: #{tpu_custom_call.1} parent=15 // pred_region
          %s531 = sand.u32 %s28, 1
          %s532 = scalar_lea.sflag [#allocation13], %s531
          %s533 = sand.u32 %s267, 1
          %s534 = scalar_lea.vmem [#allocation12], %s533
          %s536 = ssub.s32 16, 16
          %537 = vsyncadd %s532, %s536
          %s538 = smul.addr %s36, 16
          %s539 = scalar_lea.hbm %s8, %s538
          %s541 = sshll.u32 %s534, 4
          %s542 = int_to_ptr.vmem [resolvable:$true] %s541
          %544 = dma.hbm_to_vmem [thread:$0]  %s539, 16, %s542, %s532
        $region52: #{tpu_custom_call.1} parent=15 // pred_fallthru
          _
        // Predicated region
        $region53: #{tpu_custom_call.1} parent=15 // pred_check
          %p545 = pneg %p303
        $region54: #{tpu_custom_call.1} parent=15 // pred_check_branch
          %547 = sbr.rel (%p545) target = $region56
        $region55: #{tpu_custom_call.1} parent=15 // pred_region
          %p548 = scmp.lt.s32.totalorder %s36, 1
          %s549 = scalar_select %p548, %s36, 1
          %s550 = smul.addr %s549, 4
          %s551 = smul.addr %s550, 4
          %s552 = scalar_lea.vmem %s9, %s551
        $region56: #{tpu_custom_call.1} parent=15 // pred_fallthru
          _
        // Predicated region
        $region57: #{tpu_custom_call.1} parent=15 // pred_check
          %p553 = pneg %p329
        $region58: #{tpu_custom_call.1} parent=15 // pred_check_branch
          %555 = sbr.rel (%p553) target = $region60
        $region59: #{tpu_custom_call.1} parent=15 // pred_region
          %s556 = sand.u32 %s28, 1
          %s557 = scalar_lea.sflag [#allocation13], %s556
          %s558 = sand.u32 %s319, 1
          %s559 = scalar_lea.vmem [#allocation14], %s558
          %s561 = ssub.s32 16, 16
          %562 = vsyncadd %s557, %s561
          %s563 = smul.addr %s36, 16
          %s564 = scalar_lea.hbm %s10, %s563
          %s566 = sshll.u32 %s559, 4
          %s567 = int_to_ptr.vmem [resolvable:$true] %s566
          %569 = dma.hbm_to_vmem [thread:$0]  %s564, 16, %s567, %s557
        $region60: #{tpu_custom_call.1} parent=15 // pred_fallthru
          _
        // Predicated region
        $region61: #{tpu_custom_call.1} parent=15 // pred_check
          %p570 = pneg %p355
        $region62: #{tpu_custom_call.1} parent=15 // pred_check_branch
          %572 = sbr.rel (%p570) target = $region64
        $region63: #{tpu_custom_call.1} parent=15 // pred_region
          %p573 = scmp.lt.s32.totalorder %s36, 1
          %s574 = scalar_select %p573, %s36, 1
          %s575 = smul.addr %s574, 16
          %s576 = smul.addr %s575, 4
          %s577 = scalar_lea.vmem %s11, %s576
        $region64: #{tpu_custom_call.1} parent=15 // pred_fallthru
          _
        // Predicated region
        $region65: #{tpu_custom_call.1} parent=15 // pred_check
          %p578 = pneg %p381
        $region66: #{tpu_custom_call.1} parent=15 // pred_check_branch
          %580 = sbr.rel (%p578) target = $region68
        $region67: #{tpu_custom_call.1} parent=15 // pred_region
          %p581 = scmp.lt.s32.totalorder %s36, 1
          %s582 = scalar_select %p581, %s36, 1
          %s583 = scalar_lea.vmem %s12, %s582
        $region68: #{tpu_custom_call.1} parent=15 // pred_fallthru
          _
      $region16: #{tpu_custom_call.1} parent=5 // pred_fallthru
        _
      %p584 = scmp.le.s32.totalorder 1, %s28
      %p585 = scmp.lt.s32.totalorder %s28, 9
      %p586 = pnand %p584, %p585
      %p587 = pneg %p586
      // Predicated region
      $region69: #{tpu_custom_call.1} parent=5 // pred_check
        _
      $region70: #{tpu_custom_call.1} parent=5 // pred_check_branch
        %589 = sbr.rel (%p586) target = $region72
      $region71: #{tpu_custom_call.1} parent=5 // pred_region
        %s590 = ssub.s32 %s28, 1
        %s591 = sand.u32 %s88, 1
        %s592 = scalar_lea.sflag [#allocation10], %s591
        %s593 = sand.u32 %s88, 1
        %s594 = smul.addr %s593, 256
        %s595 = scalar_lea.vmem [#allocation9], %s594
        // Predicated region
        $region73: #{tpu_custom_call.1} parent=71 // pred_check
          %p596 = pneg %p101
        $region74: #{tpu_custom_call.1} parent=71 // pred_check_branch
          %598 = sbr.rel (%p596) target = $region76
        $region75: #{tpu_custom_call.1} parent=71 // pred_region
          %599 = dma.done %s592, 4096
        $region76: #{tpu_custom_call.1} parent=71 // pred_fallthru
          _
        %s600 = sand.u32 %s33, 1
        %s601 = scalar_lea.sflag [#allocation13], %s600
        %s602 = sand.u32 %s270, 1
        %s603 = scalar_lea.vmem [#allocation12], %s602
        // Predicated region
        $region77: #{tpu_custom_call.1} parent=71 // pred_check
          %p604 = pneg %p283
        $region78: #{tpu_custom_call.1} parent=71 // pred_check_branch
          %606 = sbr.rel (%p604) target = $region80
        $region79: #{tpu_custom_call.1} parent=71 // pred_region
          %607 = dma.done %s601, 16
        $region80: #{tpu_custom_call.1} parent=71 // pred_fallthru
          _
        %s608 = sand.u32 %s33, 1
        %s609 = scalar_lea.sflag [#allocation13], %s608
        %s610 = sand.u32 %s322, 1
        %s611 = scalar_lea.vmem [#allocation14], %s610
        // Predicated region
        $region81: #{tpu_custom_call.1} parent=71 // pred_check
          %p612 = pneg %p335
        $region82: #{tpu_custom_call.1} parent=71 // pred_check_branch
          %614 = sbr.rel (%p612) target = $region84
        $region83: #{tpu_custom_call.1} parent=71 // pred_region
          %615 = dma.done %s609, 16
        $region84: #{tpu_custom_call.1} parent=71 // pred_fallthru
          _
        %p616 = scmp.lt.s32.totalorder %s38, 1
        %s617 = scalar_select %p616, %s38, 1
        %s618 = smul.addr %s617, 4
        %s619 = smul.addr %s618, 8
        %s620 = scalar_lea.vmem %s0, %s619
        %p621 = pneg %p73
        %p622 = pneg %p70
        %s623 = sand.u32 %s88, 1
        %s624 = scalar_lea.sflag [#allocation10], %s623
        %s625 = sand.u32 %s88, 1
        %s626 = smul.addr %s625, 256
        %s627 = scalar_lea.vmem [#allocation9], %s626
        %p628 = pneg %p101
        %p629 = pneg %p98
        %p630 = scmp.lt.s32.totalorder %s39, 1
        %s631 = scalar_select %p630, %s39, 1
        %s632 = scalar_lea.vmem %s2, %s631
        %p633 = pneg %p127
        %p634 = pneg %p124
        %p635 = scmp.lt.s32.totalorder %s39, 1
        %s636 = scalar_select %p635, %s39, 1
        %s637 = scalar_lea.vmem %s3, %s636
        %p638 = pneg %p153
        %p639 = pneg %p150
        %p640 = scmp.lt.s32.totalorder %s39, 1
        %s641 = scalar_select %p640, %s39, 1
        %s642 = smul.addr %s641, 4
        %s643 = smul.addr %s642, 4
        %s644 = scalar_lea.vmem %s4, %s643
        %p645 = pneg %p179
        %p646 = pneg %p176
        %p647 = scmp.lt.s32.totalorder %s39, 1
        %s648 = scalar_select %p647, %s39, 1
        %s649 = smul.addr %s648, 4
        %s650 = smul.addr %s649, 4
        %s651 = scalar_lea.vmem %s5, %s650
        %p652 = pneg %p205
        %p653 = pneg %p202
        %p654 = scmp.lt.s32.totalorder %s39, 1
        %s655 = scalar_select %p654, %s39, 1
        %s656 = scalar_lea.vmem %s6, %s655
        %p657 = pneg %p231
        %p658 = pneg %p228
        %p659 = scmp.lt.s32.totalorder %s39, 1
        %s660 = scalar_select %p659, %s39, 1
        %s661 = scalar_lea.vmem %s7, %s660
        %p662 = pneg %p257
        %p663 = pneg %p254
        %s664 = sand.u32 %s33, 1
        %s665 = scalar_lea.sflag [#allocation13], %s664
        %s666 = sand.u32 %s270, 1
        %s667 = scalar_lea.vmem [#allocation12], %s666
        %p668 = pneg %p283
        %p669 = pneg %p280
        %p670 = scmp.lt.s32.totalorder %s39, 1
        %s671 = scalar_select %p670, %s39, 1
        %s672 = smul.addr %s671, 4
        %s673 = smul.addr %s672, 4
        %s674 = scalar_lea.vmem %s9, %s673
        %p675 = pneg %p309
        %p676 = pneg %p306
        %s677 = sand.u32 %s33, 1
        %s678 = scalar_lea.sflag [#allocation13], %s677
        %s679 = sand.u32 %s322, 1
        %s680 = scalar_lea.vmem [#allocation14], %s679
        %p681 = pneg %p335
        %p682 = pneg %p332
        %p683 = scmp.lt.s32.totalorder %s39, 1
        %s684 = scalar_select %p683, %s39, 1
        %s685 = smul.addr %s684, 16
        %s686 = smul.addr %s685, 4
        %s687 = scalar_lea.vmem %s11, %s686
        %p688 = pneg %p361
        %p689 = pneg %p358
        %p690 = scmp.lt.s32.totalorder %s39, 1
        %s691 = scalar_select %p690, %s39, 1
        %s692 = scalar_lea.vmem %s12, %s691
        %p693 = pneg %p387
        %p694 = pneg %p384
        %p695 = pneg %p413
        %p696 = pneg %p410
        %s697 = sand.u32 %s400, 1
        %s698 = scalar_lea.sflag [#allocation11], %s697
        %s699 = sand.u32 %s400, 1
        %s700 = smul.addr %s699, 32
        %s701 = scalar_lea.vmem [#allocation15], %s700
        %p702 = scmp.lt.s32.totalorder %s38, 1
        %s703 = scalar_select %p702, %s38, 1
        %s704 = smul.addr %s703, 4
        %s705 = smul.addr %s704, 8
        %s706 = scalar_lea.vmem %s0, %s705
        %s707 = smul.u32 2, %s40
        %p708 = scmp.lt.s32.totalorder %s39, 1
        %s709 = scalar_select %p708, %s39, 1
        %s710 = scalar_lea.vmem %s2, %s709
        %p711 = scmp.lt.s32.totalorder %s39, 1
        %s712 = scalar_select %p711, %s39, 1
        %s713 = scalar_lea.vmem %s3, %s712
        %p714 = scmp.lt.s32.totalorder %s39, 1
        %s715 = scalar_select %p714, %s39, 1
        %s716 = smul.addr %s715, 4
        %s717 = smul.addr %s716, 4
        %s718 = scalar_lea.vmem %s4, %s717
        %p719 = scmp.lt.s32.totalorder %s39, 1
        %s720 = scalar_select %p719, %s39, 1
        %s721 = smul.addr %s720, 4
        %s722 = smul.addr %s721, 4
        %s723 = scalar_lea.vmem %s5, %s722
        %p724 = scmp.lt.s32.totalorder %s39, 1
        %s725 = scalar_select %p724, %s39, 1
        %s726 = scalar_lea.vmem %s6, %s725
        %p727 = scmp.lt.s32.totalorder %s39, 1
        %s728 = scalar_select %p727, %s39, 1
        %s729 = scalar_lea.vmem %s7, %s728
        %p730 = scmp.lt.s32.totalorder %s39, 1
        %s731 = scalar_select %p730, %s39, 1
        %s732 = smul.addr %s731, 4
        %s733 = smul.addr %s732, 4
        %s734 = scalar_lea.vmem %s9, %s733
        %p735 = scmp.lt.s32.totalorder %s39, 1
        %s736 = scalar_select %p735, %s39, 1
        %s737 = smul.addr %s736, 16
        %s738 = smul.addr %s737, 4
        %s739 = scalar_lea.vmem %s11, %s738
        %p740 = scmp.lt.s32.totalorder %s39, 1
        %s741 = scalar_select %p740, %s39, 1
        %s742 = scalar_lea.vmem %s12, %s741
        %p744 = scmp.eq.s32.totalorder %s39, 0
        %p745 = scmp.eq.s32.totalorder %s40, 0
        %p746 = pnand %p744, %p745
        %p747 = pneg %p746
        // Predicated region
        $region85: #{tpu_custom_call.1} parent=71 // pred_check
          _
        $region86: #{tpu_custom_call.1} parent=71 // pred_check_branch
          %749 = sbr.rel (%p746) target = $region88
        $region87: #{tpu_custom_call.1} parent=71 // pred_region
          %v750 = vld [vmem:[%s706] sm:$0xff]
          %v751 = vld [vmem:[%s706 + $0x8] sm:$0xff]
          %v752 = vld [vmem:[%s706 + $0x10] sm:$0xff]
          %v753 = vld [vmem:[%s706 + $0x18] sm:$0xff]
          %vm754 = vcmask 261120
          %755 = vst.msk [vmem:[#allocation2] sm:$0xff] %vm754, %v750
          %756 = vst.msk [vmem:[#allocation2 + $0x8] sm:$0xff] %vm754, %v751
          %757 = vst.msk [vmem:[#allocation2 + $0x10] sm:$0xff] %vm754, %v752
          %758 = vst.msk [vmem:[#allocation2 + $0x18] sm:$0xff] %vm754, %v753
        $region88: #{tpu_custom_call.1} parent=71 // pred_fallthru
          _
        // Predicated region
        $region89: #{tpu_custom_call.1} parent=71 // pred_check
          %p759 = pneg %p745
        $region90: #{tpu_custom_call.1} parent=71 // pred_check_branch
          %761 = sbr.rel (%p759) target = $region92
        $region91: #{tpu_custom_call.1} parent=71 // pred_region
          %v762 = vld [vmem:[#allocation2] sm:$0xff]
          %v763 = vld [vmem:[#allocation2 + $0x8] sm:$0xff]
          %v764 = vld [vmem:[#allocation2 + $0x10] sm:$0xff]
          %v765 = vld [vmem:[#allocation2 + $0x18] sm:$0xff]
          %v766 = vld [vmem:[%s710] sm:$0x1]
          %v767 = vld [vmem:[%s713] sm:$0x1]
          %vm768 = vcmask 261120
          %v769 = vsel %vm768, %v762, 0.0
          %770 = vadd.xlane.f32.xlu0 %v769
          %v771 = vpop.xlane.xlu0 %770
          %v772 = vsel %vm768, %v763, 0.0
          %773 = vadd.xlane.f32.xlu0 %v772
          %v774 = vpop.xlane.xlu0 %773
          %v775 = vsel %vm768, %v764, 0.0
          %776 = vadd.xlane.f32.xlu0 %v775
          %v777 = vpop.xlane.xlu0 %776
          %v778 = vsel %vm768, %v765, 0.0
          %779 = vadd.xlane.f32.xlu0 %v778
          %v780 = vpop.xlane.xlu0 %779
          %v781 = vrcp.pop 32.0
          %v782 = vmul.f32 %v771, %v781
          %v783 = vmul.f32 %v774, %v781
          %v784 = vmul.f32 %v777, %v781
          %v785 = vmul.f32 %v780, %v781
          %v786 = vsub.f32 %v762, %v782
          %v787 = vsub.f32 %v763, %v783
          %v788 = vsub.f32 %v764, %v784
          %v789 = vsub.f32 %v765, %v785
          %v790 = vmul.f32 %v786, %v786
          %v791 = vmul.f32 %v787, %v787
          %v792 = vmul.f32 %v788, %v788
          %v793 = vmul.f32 %v789, %v789
          %v794 = vsel %vm768, %v790, 0.0
          %795 = vadd.xlane.f32.xlu0 %v794
          %v796 = vpop.xlane.xlu0 %795
          %v797 = vsel %vm768, %v791, 0.0
          %798 = vadd.xlane.f32.xlu0 %v797
          %v799 = vpop.xlane.xlu0 %798
          %v800 = vsel %vm768, %v792, 0.0
          %801 = vadd.xlane.f32.xlu0 %v800
          %v802 = vpop.xlane.xlu0 %801
          %v803 = vsel %vm768, %v793, 0.0
          %804 = vadd.xlane.f32.xlu0 %v803
          %v805 = vpop.xlane.xlu0 %804
          %v806 = vmul.f32 %v796, %v781
          %v807 = vmul.f32 %v799, %v781
          %v808 = vmul.f32 %v802, %v781
          %v809 = vmul.f32 %v805, %v781
          %v810 = vadd.f32 %v806, 1e-05
          %v811 = vadd.f32 %v807, 1e-05
          %v812 = vadd.f32 %v808, 1e-05
          %v813 = vadd.f32 %v809, 1e-05
          %v814 = vrsqrt.pop %v810
          %v815 = vrsqrt.pop %v811
          %v816 = vrsqrt.pop %v812
          %v817 = vrsqrt.pop %v813
          %v818 = vmul.f32 %v786, %v814
          %v819 = vmul.f32 %v787, %v815
          %v820 = vmul.f32 %v788, %v816
          %v821 = vmul.f32 %v789, %v817
          %v823 = vlaneseq
          %v824 = vshrl.u32 %v823, 7
          %v825 = vsub.s32 0, %v824
          %v826 = vrot.slane %v766, %v825
          %v828 = vmul.f32 %v818, %v826
          %v829 = vmul.f32 %v819, %v826
          %v830 = vmul.f32 %v820, %v826
          %v831 = vmul.f32 %v821, %v826
          %v833 = vlaneseq
          %v834 = vshrl.u32 %v833, 7
          %v835 = vsub.s32 0, %v834
          %v836 = vrot.slane %v767, %v835
          %v838 = vadd.f32 %v828, %v836
          %v839 = vadd.f32 %v829, %v836
          %v840 = vadd.f32 %v830, %v836
          %v841 = vadd.f32 %v831, %v836
          %v842 = vpack.c.bf16 %v839, %v838
          %v843 = vpack.c.bf16 %v841, %v840
          %v844 = vld [vmem:[%s718] sm:$0xf]
          %v845 = vld [vmem:[%s718 + $0x4] sm:$0xf]
          %v846 = vld [vmem:[%s718 + $0x8] sm:$0xf]
          %v847 = vld [vmem:[%s718 + $0xc] sm:$0xf]
          %v852 = vunpack.c.l.b16 %v844
          %v853 = vunpack.c.l.b16 %v845
          %v854 = vunpack.c.l.b16 %v846
          %v855 = vunpack.c.l.b16 %v847
          %v856 = vpack.c.b16 %v853, %v852
          %v857 = vpack.c.b16 %v855, %v854
          %v861 = vsel %vm768, %v842, 0
          %v864 = vsel %vm768, %v843, 0
          %866 = vmatprep.subr.bf16.mxu0 0
          %867 = vmatpush1.bf16.msra.mxu0 %v856
          %868 = vmatprep.subr.bf16.mxu0 0
          %869 = vmatpush1.bf16.msra.mxu0 %v857
          %870 = vmatprep.subr.bf16.mxu0 0
          %871 = vmatpush1.bf16.msra.mxu0 0
          %872 = vmatprep.subr.bf16.mxu0 0
          %873 = vmatpush1.bf16.msra.mxu0 0
          %874 = vmatprep.subr.bf16.mxu0 0
          %875 = vmatpush1.bf16.msra.mxu0 0
          %876 = vmatprep.subr.bf16.mxu0 0
          %877 = vmatpush1.bf16.msra.mxu0 0
          %878 = vmatprep.subr.bf16.mxu0 0
          %879 = vmatpush1.bf16.msra.mxu0 0
          %880 = vmatprep.subr.bf16.mxu0 0
          %881 = vmatpush1.bf16.msra.mxu0 0
          %882 = vmatprep.subr.bf16.mxu0 0
          %883 = vmatpush1.bf16.msra.mxu0 0
          %884 = vmatprep.subr.bf16.mxu0 0
          %885 = vmatpush1.bf16.msra.mxu0 0
          %886 = vmatprep.subr.bf16.mxu0 0
          %887 = vmatpush1.bf16.msra.mxu0 0
          %888 = vmatprep.subr.bf16.mxu0 0
          %889 = vmatpush1.bf16.msra.mxu0 0
          %890 = vmatprep.subr.bf16.mxu0 0
          %891 = vmatpush1.bf16.msra.mxu0 0
          %892 = vmatprep.subr.bf16.mxu0 0
          %893 = vmatpush1.bf16.msra.mxu0 0
          %894 = vmatprep.subr.bf16.mxu0 0
          %895 = vmatpush1.bf16.msra.mxu0 0
          %896 = vmatprep.subr.bf16.mxu0 0
          %897 = vmatpush1.bf16.msra.mxu0 0
          %898 = vmatprep.mubr.bf16.mxu0 0
          %899 = vmatmul.mubr.bf16.gmra.mrb[0].mxu0 %v861
          %v900 = vpop.f32.mrb[0].mxu0
          %v901 = vadd.f32 0.0, %v900
          %v902 = vpop.f32.mrb[0].mxu0
          %v903 = vpop.f32.mrb[0].mxu0
          %v904 = vadd.f32 0.0, %v903
          %v905 = vpop.f32.mrb[0].mxu0
          %906 = vmatprep.mubr.bf16.mxu0 0
          %907 = vmatmul.mubr.bf16.gmra.mrb[0].mxu0 %v864
          %v908 = vpop.f32.mrb[0].mxu0
          %v909 = vadd.f32 0.0, %v908
          %v910 = vpop.f32.mrb[0].mxu0
          %v911 = vpop.f32.mrb[0].mxu0
          %v912 = vadd.f32 0.0, %v911
          %v913 = vpop.f32.mrb[0].mxu0
          %914 = vdwg.mxu0
          %v915 = vmul.f32 %v901, 0.35355338
          %v916 = vmul.f32 %v904, 0.35355338
          %v917 = vmul.f32 %v909, 0.35355338
          %v918 = vmul.f32 %v912, 0.35355338
          %v919 = vpack.c.bf16 %v916, %v915
          %v920 = vpack.c.bf16 %v918, %v917
          %921 = vst.msk [vmem:[#allocation3] sm:$0xff] %vm768, %v919
          %922 = vst.msk [vmem:[#allocation3 + $0x8] sm:$0xff] %vm768, %v920
          %v923 = vpack.c.bf16 %v904, %v901
          %v924 = vpack.c.bf16 %v912, %v909
          %927 = vrot.lane.b32.xlu0 %v923, 96
          %v928 = vpop.permute.xlu0 %927
          %929 = vrot.lane.b32.xlu0 %v924, 96
          %v930 = vpop.permute.xlu0 %929
          %933 = vst.msk [vmem:[#allocation4] sm:$0xff] %vm768, %v928
          %934 = vst.msk [vmem:[#allocation4 + $0x8] sm:$0xff] %vm768, %v930
          %935 = vrot.lane.b32.xlu0 %v923, 64
          %v936 = vpop.permute.xlu0 %935
          %937 = vrot.lane.b32.xlu0 %v924, 64
          %v938 = vpop.permute.xlu0 %937
          %941 = vst.msk [vmem:[#allocation5] sm:$0xff] %vm768, %v936
          %942 = vst.msk [vmem:[#allocation5 + $0x8] sm:$0xff] %vm768, %v938
          %vm943 = vcmask 31744
          %944 = vst.msk [vmem:[#allocation6] sm:$0xff] %vm943, -inf
          %945 = vst.msk [vmem:[#allocation6 + $0x8] sm:$0xff] %vm943, -inf
          %946 = vst.msk [vmem:[#allocation6 + $0x10] sm:$0xff] %vm943, -inf
          %947 = vst.msk [vmem:[#allocation6 + $0x18] sm:$0xff] %vm943, -inf
          %948 = vst.msk [vmem:[#allocation7] sm:$0xff] %vm943, 0.0
          %949 = vst.msk [vmem:[#allocation7 + $0x8] sm:$0xff] %vm943, 0.0
          %950 = vst.msk [vmem:[#allocation7 + $0x10] sm:$0xff] %vm943, 0.0
          %951 = vst.msk [vmem:[#allocation7 + $0x18] sm:$0xff] %vm943, 0.0
          %952 = vst.msk [vmem:[#allocation8] sm:$0xff] %vm768, 0.0
          %953 = vst.msk [vmem:[#allocation8 + $0x8] sm:$0xff] %vm768, 0.0
          %954 = vst.msk [vmem:[#allocation8 + $0x10] sm:$0xff] %vm768, 0.0
          %955 = vst.msk [vmem:[#allocation8 + $0x18] sm:$0xff] %vm768, 0.0
        $region92: #{tpu_custom_call.1} parent=71 // pred_fallthru
          _
        %s956 = smul.u32 %s40, 16
        %v957 = vld [vmem:[#allocation3] sm:$0xff]
        %v958 = vld [vmem:[#allocation3 + $0x8] sm:$0xff]
        %s959 = sshra.s32 %s956, 4
        %s960 = sand.u32 %s956, 15
        %s961 = smul.addr %s959, 8
        %s962 = scalar_lea.vmem [#allocation4], %s961
        %v963 = vld [vmem:[%s962] sm:$0xff]
        %s964 = smul.addr %s959, 8
        %s965 = scalar_lea.vmem [#allocation5], %s964
        %v966 = vld [vmem:[%s965] sm:$0xff]
        %v967 = vld [vmem:[%s595] sm:$0xf]
        %v968 = vld [vmem:[%s595 + $0x4] sm:$0xf]
        %v969 = vld [vmem:[%s595 + $0x8] sm:$0xf]
        %v970 = vld [vmem:[%s595 + $0xc] sm:$0xf]
        %v971 = vld [vmem:[%s595 + $0x10] sm:$0xf]
        %v972 = vld [vmem:[%s595 + $0x14] sm:$0xf]
        %v973 = vld [vmem:[%s595 + $0x18] sm:$0xf]
        %v974 = vld [vmem:[%s595 + $0x1c] sm:$0xf]
        %v975 = vld [vmem:[%s595 + $0x20] sm:$0xf]
        %v976 = vld [vmem:[%s595 + $0x24] sm:$0xf]
        %v977 = vld [vmem:[%s595 + $0x28] sm:$0xf]
        %v978 = vld [vmem:[%s595 + $0x2c] sm:$0xf]
        %v979 = vld [vmem:[%s595 + $0x30] sm:$0xf]
        %v980 = vld [vmem:[%s595 + $0x34] sm:$0xf]
        %v981 = vld [vmem:[%s595 + $0x38] sm:$0xf]
        %v982 = vld [vmem:[%s595 + $0x3c] sm:$0xf]
        %v983 = vld [vmem:[%s595 + $0x40] sm:$0xf]
        %v984 = vld [vmem:[%s595 + $0x44] sm:$0xf]
        %v985 = vld [vmem:[%s595 + $0x48] sm:$0xf]
        %v986 = vld [vmem:[%s595 + $0x4c] sm:$0xf]
        %v987 = vld [vmem:[%s595 + $0x50] sm:$0xf]
        %v988 = vld [vmem:[%s595 + $0x54] sm:$0xf]
        %v989 = vld [vmem:[%s595 + $0x58] sm:$0xf]
        %v990 = vld [vmem:[%s595 + $0x5c] sm:$0xf]
        %v991 = vld [vmem:[%s595 + $0x60] sm:$0xf]
        %v992 = vld [vmem:[%s595 + $0x64] sm:$0xf]
        %v993 = vld [vmem:[%s595 + $0x68] sm:$0xf]
        %v994 = vld [vmem:[%s595 + $0x6c] sm:$0xf]
        %v995 = vld [vmem:[%s595 + $0x70] sm:$0xf]
        %v996 = vld [vmem:[%s595 + $0x74] sm:$0xf]
        %v997 = vld [vmem:[%s595 + $0x78] sm:$0xf]
        %v998 = vld [vmem:[%s595 + $0x7c] sm:$0xf]
        %v999 = vld [vmem:[%s595 + $0x80] sm:$0xf]
        %v1000 = vld [vmem:[%s595 + $0x84] sm:$0xf]
        %v1001 = vld [vmem:[%s595 + $0x88] sm:$0xf]
        %v1002 = vld [vmem:[%s595 + $0x8c] sm:$0xf]
        %v1003 = vld [vmem:[%s595 + $0x90] sm:$0xf]
        %v1004 = vld [vmem:[%s595 + $0x94] sm:$0xf]
        %v1005 = vld [vmem:[%s595 + $0x98] sm:$0xf]
        %v1006 = vld [vmem:[%s595 + $0x9c] sm:$0xf]
        %v1007 = vld [vmem:[%s595 + $0xa0] sm:$0xf]
        %v1008 = vld [vmem:[%s595 + $0xa4] sm:$0xf]
        %v1009 = vld [vmem:[%s595 + $0xa8] sm:$0xf]
        %v1010 = vld [vmem:[%s595 + $0xac] sm:$0xf]
        %v1011 = vld [vmem:[%s595 + $0xb0] sm:$0xf]
        %v1012 = vld [vmem:[%s595 + $0xb4] sm:$0xf]
        %v1013 = vld [vmem:[%s595 + $0xb8] sm:$0xf]
        %v1014 = vld [vmem:[%s595 + $0xbc] sm:$0xf]
        %v1015 = vld [vmem:[%s595 + $0xc0] sm:$0xf]
        %v1016 = vld [vmem:[%s595 + $0xc4] sm:$0xf]
        %v1017 = vld [vmem:[%s595 + $0xc8] sm:$0xf]
        %v1018 = vld [vmem:[%s595 + $0xcc] sm:$0xf]
        %v1019 = vld [vmem:[%s595 + $0xd0] sm:$0xf]
        %v1020 = vld [vmem:[%s595 + $0xd4] sm:$0xf]
        %v1021 = vld [vmem:[%s595 + $0xd8] sm:$0xf]
        %v1022 = vld [vmem:[%s595 + $0xdc] sm:$0xf]
        %v1023 = vld [vmem:[%s595 + $0xe0] sm:$0xf]
        %v1024 = vld [vmem:[%s595 + $0xe4] sm:$0xf]
        %v1025 = vld [vmem:[%s595 + $0xe8] sm:$0xf]
        %v1026 = vld [vmem:[%s595 + $0xec] sm:$0xf]
        %v1027 = vld [vmem:[%s595 + $0xf0] sm:$0xf]
        %v1028 = vld [vmem:[%s595 + $0xf4] sm:$0xf]
        %v1029 = vld [vmem:[%s595 + $0xf8] sm:$0xf]
        %v1030 = vld [vmem:[%s595 + $0xfc] sm:$0xf]
        %v1033 = vcombine.high %v957, %v957
        %v1035 = vunpack.c.l.s4 1966171168
        %v1036 = vunpack.c.0.s8 %v1035
        %v1037 = vlaneseq
        %v1038 = vshrl.u32 %v1037, 7
        %v1039 = vsub.s32 %v1036, %v1038
        %v1040 = vrot.slane %v957, %v1039
        %v1042 = vunpack.c.l.s4 1966171168
        %v1043 = vunpack.c.0.s8 %v1042
        %v1044 = vlaneseq
        %v1045 = vshrl.u32 %v1044, 7
        %v1046 = vsub.s32 %v1043, %v1045
        %v1047 = vrot.slane %v1033, %v1046
        %v1048 = vcombine.high %v1040, %v1040
        %v1049 = vcombine.high %v1047, %v1047
        %v1051 = vunpack.c.l.s4 1966171168
        %v1052 = vunpack.c.0.s8 %v1051
        %v1053 = vlaneseq
        %v1054 = vshrl.u32 %v1053, 7
        %v1055 = vsub.s32 %v1052, %v1054
        %v1056 = vrot.slane %v1040, %v1055
        %v1058 = vunpack.c.l.s4 1966171168
        %v1059 = vunpack.c.0.s8 %v1058
        %v1060 = vlaneseq
        %v1061 = vshrl.u32 %v1060, 7
        %v1062 = vsub.s32 %v1059, %v1061
        %v1063 = vrot.slane %v1047, %v1062
        %v1065 = vunpack.c.l.s4 1966171168
        %v1066 = vunpack.c.0.s8 %v1065
        %v1067 = vlaneseq
        %v1068 = vshrl.u32 %v1067, 7
        %v1069 = vsub.s32 %v1066, %v1068
        %v1070 = vrot.slane %v1048, %v1069
        %v1072 = vunpack.c.l.s4 1966171168
        %v1073 = vunpack.c.0.s8 %v1072
        %v1074 = vlaneseq
        %v1075 = vshrl.u32 %v1074, 7
        %v1076 = vsub.s32 %v1073, %v1075
        %v1077 = vrot.slane %v1049, %v1076
        %v1078 = vcombine.high %v1056, %v1056
        %v1079 = vcombine.high %v1063, %v1063
        %v1080 = vcombine.high %v1070, %v1070
        %v1081 = vcombine.high %v1077, %v1077
        %v1082 = vcombine.high %v958, %v958
        %v1084 = vunpack.c.l.s4 1966171168
        %v1085 = vunpack.c.0.s8 %v1084
        %v1086 = vlaneseq
        %v1087 = vshrl.u32 %v1086, 7
        %v1088 = vsub.s32 %v1085, %v1087
        %v1089 = vrot.slane %v958, %v1088
        %v1091 = vunpack.c.l.s4 1966171168
        %v1092 = vunpack.c.0.s8 %v1091
        %v1093 = vlaneseq
        %v1094 = vshrl.u32 %v1093, 7
        %v1095 = vsub.s32 %v1092, %v1094
        %v1096 = vrot.slane %v1082, %v1095
        %v1097 = vcombine.high %v1089, %v1089
        %v1098 = vcombine.high %v1096, %v1096
        %v1100 = vunpack.c.l.s4 1966171168
        %v1101 = vunpack.c.0.s8 %v1100
        %v1102 = vlaneseq
        %v1103 = vshrl.u32 %v1102, 7
        %v1104 = vsub.s32 %v1101, %v1103
        %v1105 = vrot.slane %v1089, %v1104
        %v1107 = vunpack.c.l.s4 1966171168
        %v1108 = vunpack.c.0.s8 %v1107
        %v1109 = vlaneseq
        %v1110 = vshrl.u32 %v1109, 7
        %v1111 = vsub.s32 %v1108, %v1110
        %v1112 = vrot.slane %v1096, %v1111
        %v1114 = vunpack.c.l.s4 1966171168
        %v1115 = vunpack.c.0.s8 %v1114
        %v1116 = vlaneseq
        %v1117 = vshrl.u32 %v1116, 7
        %v1118 = vsub.s32 %v1115, %v1117
        %v1119 = vrot.slane %v1097, %v1118
        %v1121 = vunpack.c.l.s4 1966171168
        %v1122 = vunpack.c.0.s8 %v1121
        %v1123 = vlaneseq
        %v1124 = vshrl.u32 %v1123, 7
        %v1125 = vsub.s32 %v1122, %v1124
        %v1126 = vrot.slane %v1098, %v1125
        %v1127 = vcombine.high %v1105, %v1105
        %v1128 = vcombine.high %v1112, %v1112
        %v1129 = vcombine.high %v1119, %v1119
        %v1130 = vcombine.high %v1126, %v1126
        %v1131 = vunpack.i.l.s16 %v1056
        %v1132 = vunpack.i.h.s16 %v1056
        %v1133 = vunpack.i.l.s16 %v1070
        %v1134 = vunpack.i.h.s16 %v1070
        %v1135 = vunpack.i.l.s16 %v1078
        %v1136 = vunpack.i.h.s16 %v1078
        %v1137 = vunpack.i.l.s16 %v1080
        %v1138 = vunpack.i.h.s16 %v1080
        %v1139 = vunpack.i.l.s16 %v1063
        %v1140 = vunpack.i.h.s16 %v1063
        %v1141 = vunpack.i.l.s16 %v1077
        %v1142 = vunpack.i.h.s16 %v1077
        %v1143 = vunpack.i.l.s16 %v1079
        %v1144 = vunpack.i.h.s16 %v1079
        %v1145 = vunpack.i.l.s16 %v1081
        %v1146 = vunpack.i.h.s16 %v1081
        %v1147 = vunpack.i.l.s16 %v1105
        %v1148 = vunpack.i.h.s16 %v1105
        %v1149 = vunpack.i.l.s16 %v1119
        %v1150 = vunpack.i.h.s16 %v1119
        %v1151 = vunpack.i.l.s16 %v1127
        %v1152 = vunpack.i.h.s16 %v1127
        %v1153 = vunpack.i.l.s16 %v1129
        %v1154 = vunpack.i.h.s16 %v1129
        %v1155 = vunpack.i.l.s16 %v1112
        %v1156 = vunpack.i.h.s16 %v1112
        %v1157 = vunpack.i.l.s16 %v1126
        %v1158 = vunpack.i.h.s16 %v1126
        %v1159 = vunpack.i.l.s16 %v1128
        %v1160 = vunpack.i.h.s16 %v1128
        %v1161 = vunpack.i.l.s16 %v1130
        %v1162 = vunpack.i.h.s16 %v1130
        %v1163 = vpack.i.b16 %v1131, %v1131
        %v1164 = vpack.i.b16 %v1132, %v1132
        %v1165 = vpack.i.b16 %v1133, %v1133
        %v1166 = vpack.i.b16 %v1134, %v1134
        %v1167 = vpack.i.b16 %v1135, %v1135
        %v1168 = vpack.i.b16 %v1136, %v1136
        %v1169 = vpack.i.b16 %v1137, %v1137
        %v1170 = vpack.i.b16 %v1138, %v1138
        %v1171 = vpack.i.b16 %v1139, %v1139
        %v1172 = vpack.i.b16 %v1140, %v1140
        %v1173 = vpack.i.b16 %v1141, %v1141
        %v1174 = vpack.i.b16 %v1142, %v1142
        %v1175 = vpack.i.b16 %v1143, %v1143
        %v1176 = vpack.i.b16 %v1144, %v1144
        %v1177 = vpack.i.b16 %v1145, %v1145
        %v1178 = vpack.i.b16 %v1146, %v1146
        %v1179 = vpack.i.b16 %v1147, %v1147
        %v1180 = vpack.i.b16 %v1148, %v1148
        %v1181 = vpack.i.b16 %v1149, %v1149
        %v1182 = vpack.i.b16 %v1150, %v1150
        %v1183 = vpack.i.b16 %v1151, %v1151
        %v1184 = vpack.i.b16 %v1152, %v1152
        %v1185 = vpack.i.b16 %v1153, %v1153
        %v1186 = vpack.i.b16 %v1154, %v1154
        %v1187 = vpack.i.b16 %v1155, %v1155
        %v1188 = vpack.i.b16 %v1156, %v1156
        %v1189 = vpack.i.b16 %v1157, %v1157
        %v1190 = vpack.i.b16 %v1158, %v1158
        %v1191 = vpack.i.b16 %v1159, %v1159
        %v1192 = vpack.i.b16 %v1160, %v1160
        %v1193 = vpack.i.b16 %v1161, %v1161
        %v1194 = vpack.i.b16 %v1162, %v1162
        %v1195 = vlaneseq
        %v1196 = vshrl.u32 %v1195, 7
        %v1197 = vsub.s32 0, %v1196
        %v1198 = vrot.slane %v1163, %v1197
        %v1199 = vlaneseq
        %v1200 = vshrl.u32 %v1199, 7
        %v1201 = vsub.s32 0, %v1200
        %v1202 = vrot.slane %v1164, %v1201
        %v1203 = vlaneseq
        %v1204 = vshrl.u32 %v1203, 7
        %v1205 = vsub.s32 0, %v1204
        %v1206 = vrot.slane %v1165, %v1205
        %v1207 = vlaneseq
        %v1208 = vshrl.u32 %v1207, 7
        %v1209 = vsub.s32 0, %v1208
        %v1210 = vrot.slane %v1166, %v1209
        %v1211 = vlaneseq
        %v1212 = vshrl.u32 %v1211, 7
        %v1213 = vsub.s32 0, %v1212
        %v1214 = vrot.slane %v1167, %v1213
        %v1215 = vlaneseq
        %v1216 = vshrl.u32 %v1215, 7
        %v1217 = vsub.s32 0, %v1216
        %v1218 = vrot.slane %v1168, %v1217
        %v1219 = vlaneseq
        %v1220 = vshrl.u32 %v1219, 7
        %v1221 = vsub.s32 0, %v1220
        %v1222 = vrot.slane %v1169, %v1221
        %v1223 = vlaneseq
        %v1224 = vshrl.u32 %v1223, 7
        %v1225 = vsub.s32 0, %v1224
        %v1226 = vrot.slane %v1170, %v1225
        %v1227 = vlaneseq
        %v1228 = vshrl.u32 %v1227, 7
        %v1229 = vsub.s32 0, %v1228
        %v1230 = vrot.slane %v1171, %v1229
        %v1231 = vlaneseq
        %v1232 = vshrl.u32 %v1231, 7
        %v1233 = vsub.s32 0, %v1232
        %v1234 = vrot.slane %v1172, %v1233
        %v1235 = vlaneseq
        %v1236 = vshrl.u32 %v1235, 7
        %v1237 = vsub.s32 0, %v1236
        %v1238 = vrot.slane %v1173, %v1237
        %v1239 = vlaneseq
        %v1240 = vshrl.u32 %v1239, 7
        %v1241 = vsub.s32 0, %v1240
        %v1242 = vrot.slane %v1174, %v1241
        %v1243 = vlaneseq
        %v1244 = vshrl.u32 %v1243, 7
        %v1245 = vsub.s32 0, %v1244
        %v1246 = vrot.slane %v1175, %v1245
        %v1247 = vlaneseq
        %v1248 = vshrl.u32 %v1247, 7
        %v1249 = vsub.s32 0, %v1248
        %v1250 = vrot.slane %v1176, %v1249
        %v1251 = vlaneseq
        %v1252 = vshrl.u32 %v1251, 7
        %v1253 = vsub.s32 0, %v1252
        %v1254 = vrot.slane %v1177, %v1253
        %v1255 = vlaneseq
        %v1256 = vshrl.u32 %v1255, 7
        %v1257 = vsub.s32 0, %v1256
        %v1258 = vrot.slane %v1178, %v1257
        %v1259 = vlaneseq
        %v1260 = vshrl.u32 %v1259, 7
        %v1261 = vsub.s32 0, %v1260
        %v1262 = vrot.slane %v1179, %v1261
        %v1263 = vlaneseq
        %v1264 = vshrl.u32 %v1263, 7
        %v1265 = vsub.s32 0, %v1264
        %v1266 = vrot.slane %v1180, %v1265
        %v1267 = vlaneseq
        %v1268 = vshrl.u32 %v1267, 7
        %v1269 = vsub.s32 0, %v1268
        %v1270 = vrot.slane %v1181, %v1269
        %v1271 = vlaneseq
        %v1272 = vshrl.u32 %v1271, 7
        %v1273 = vsub.s32 0, %v1272
        %v1274 = vrot.slane %v1182, %v1273
        %v1275 = vlaneseq
        %v1276 = vshrl.u32 %v1275, 7
        %v1277 = vsub.s32 0, %v1276
        %v1278 = vrot.slane %v1183, %v1277
        %v1279 = vlaneseq
        %v1280 = vshrl.u32 %v1279, 7
        %v1281 = vsub.s32 0, %v1280
        %v1282 = vrot.slane %v1184, %v1281
        %v1283 = vlaneseq
        %v1284 = vshrl.u32 %v1283, 7
        %v1285 = vsub.s32 0, %v1284
        %v1286 = vrot.slane %v1185, %v1285
        %v1287 = vlaneseq
        %v1288 = vshrl.u32 %v1287, 7
        %v1289 = vsub.s32 0, %v1288
        %v1290 = vrot.slane %v1186, %v1289
        %v1291 = vlaneseq
        %v1292 = vshrl.u32 %v1291, 7
        %v1293 = vsub.s32 0, %v1292
        %v1294 = vrot.slane %v1187, %v1293
        %v1295 = vlaneseq
        %v1296 = vshrl.u32 %v1295, 7
        %v1297 = vsub.s32 0, %v1296
        %v1298 = vrot.slane %v1188, %v1297
        %v1299 = vlaneseq
        %v1300 = vshrl.u32 %v1299, 7
        %v1301 = vsub.s32 0, %v1300
        %v1302 = vrot.slane %v1189, %v1301
        %v1303 = vlaneseq
        %v1304 = vshrl.u32 %v1303, 7
        %v1305 = vsub.s32 0, %v1304
        %v1306 = vrot.slane %v1190, %v1305
        %v1307 = vlaneseq
        %v1308 = vshrl.u32 %v1307, 7
        %v1309 = vsub.s32 0, %v1308
        %v1310 = vrot.slane %v1191, %v1309
        %v1311 = vlaneseq
        %v1312 = vshrl.u32 %v1311, 7
        %v1313 = vsub.s32 0, %v1312
        %v1314 = vrot.slane %v1192, %v1313
        %v1315 = vlaneseq
        %v1316 = vshrl.u32 %v1315, 7
        %v1317 = vsub.s32 0, %v1316
        %v1318 = vrot.slane %v1193, %v1317
        %v1319 = vlaneseq
        %v1320 = vshrl.u32 %v1319, 7
        %v1321 = vsub.s32 0, %v1320
        %v1322 = vrot.slane %v1194, %v1321
        %v1324 = vpack.i.b16 %v1198, %v1198
        %v1326 = vlaneseq
        %v1327 = vshrl.u32 %v1326, 7
        %v1328 = vsub.s32 0, %v1327
        %v1329 = vrot.slane %v1324, %v1328
        %v1331 = vpack.i.b16 %v1202, %v1202
        %v1333 = vlaneseq
        %v1334 = vshrl.u32 %v1333, 7
        %v1335 = vsub.s32 0, %v1334
        %v1336 = vrot.slane %v1331, %v1335
        %v1338 = vpack.i.b16 %v1206, %v1206
        %v1340 = vlaneseq
        %v1341 = vshrl.u32 %v1340, 7
        %v1342 = vsub.s32 0, %v1341
        %v1343 = vrot.slane %v1338, %v1342
        %v1345 = vpack.i.b16 %v1210, %v1210
        %v1347 = vlaneseq
        %v1348 = vshrl.u32 %v1347, 7
        %v1349 = vsub.s32 0, %v1348
        %v1350 = vrot.slane %v1345, %v1349
        %v1352 = vpack.i.b16 %v1214, %v1214
        %v1354 = vlaneseq
        %v1355 = vshrl.u32 %v1354, 7
        %v1356 = vsub.s32 0, %v1355
        %v1357 = vrot.slane %v1352, %v1356
        %v1359 = vpack.i.b16 %v1218, %v1218
        %v1361 = vlaneseq
        %v1362 = vshrl.u32 %v1361, 7
        %v1363 = vsub.s32 0, %v1362
        %v1364 = vrot.slane %v1359, %v1363
        %v1366 = vpack.i.b16 %v1222, %v1222
        %v1368 = vlaneseq
        %v1369 = vshrl.u32 %v1368, 7
        %v1370 = vsub.s32 0, %v1369
        %v1371 = vrot.slane %v1366, %v1370
        %v1373 = vpack.i.b16 %v1226, %v1226
        %v1375 = vlaneseq
        %v1376 = vshrl.u32 %v1375, 7
        %v1377 = vsub.s32 0, %v1376
        %v1378 = vrot.slane %v1373, %v1377
        %v1380 = vpack.i.b16 %v1230, %v1230
        %v1382 = vlaneseq
        %v1383 = vshrl.u32 %v1382, 7
        %v1384 = vsub.s32 0, %v1383
        %v1385 = vrot.slane %v1380, %v1384
        %v1387 = vpack.i.b16 %v1234, %v1234
        %v1389 = vlaneseq
        %v1390 = vshrl.u32 %v1389, 7
        %v1391 = vsub.s32 0, %v1390
        %v1392 = vrot.slane %v1387, %v1391
        %v1394 = vpack.i.b16 %v1238, %v1238
        %v1396 = vlaneseq
        %v1397 = vshrl.u32 %v1396, 7
        %v1398 = vsub.s32 0, %v1397
        %v1399 = vrot.slane %v1394, %v1398
        %v1401 = vpack.i.b16 %v1242, %v1242
        %v1403 = vlaneseq
        %v1404 = vshrl.u32 %v1403, 7
        %v1405 = vsub.s32 0, %v1404
        %v1406 = vrot.slane %v1401, %v1405
        %v1408 = vpack.i.b16 %v1246, %v1246
        %v1410 = vlaneseq
        %v1411 = vshrl.u32 %v1410, 7
        %v1412 = vsub.s32 0, %v1411
        %v1413 = vrot.slane %v1408, %v1412
        %v1415 = vpack.i.b16 %v1250, %v1250
        %v1417 = vlaneseq
        %v1418 = vshrl.u32 %v1417, 7
        %v1419 = vsub.s32 0, %v1418
        %v1420 = vrot.slane %v1415, %v1419
        %v1422 = vpack.i.b16 %v1254, %v1254
        %v1424 = vlaneseq
        %v1425 = vshrl.u32 %v1424, 7
        %v1426 = vsub.s32 0, %v1425
        %v1427 = vrot.slane %v1422, %v1426
        %v1429 = vpack.i.b16 %v1258, %v1258
        %v1431 = vlaneseq
        %v1432 = vshrl.u32 %v1431, 7
        %v1433 = vsub.s32 0, %v1432
        %v1434 = vrot.slane %v1429, %v1433
        %v1436 = vpack.i.b16 %v1262, %v1262
        %v1438 = vlaneseq
        %v1439 = vshrl.u32 %v1438, 7
        %v1440 = vsub.s32 0, %v1439
        %v1441 = vrot.slane %v1436, %v1440
        %v1443 = vpack.i.b16 %v1266, %v1266
        %v1445 = vlaneseq
        %v1446 = vshrl.u32 %v1445, 7
        %v1447 = vsub.s32 0, %v1446
        %v1448 = vrot.slane %v1443, %v1447
        %v1450 = vpack.i.b16 %v1270, %v1270
        %v1452 = vlaneseq
        %v1453 = vshrl.u32 %v1452, 7
        %v1454 = vsub.s32 0, %v1453
        %v1455 = vrot.slane %v1450, %v1454
        %v1457 = vpack.i.b16 %v1274, %v1274
        %v1459 = vlaneseq
        %v1460 = vshrl.u32 %v1459, 7
        %v1461 = vsub.s32 0, %v1460
        %v1462 = vrot.slane %v1457, %v1461
        %v1464 = vpack.i.b16 %v1278, %v1278
        %v1466 = vlaneseq
        %v1467 = vshrl.u32 %v1466, 7
        %v1468 = vsub.s32 0, %v1467
        %v1469 = vrot.slane %v1464, %v1468
        %v1471 = vpack.i.b16 %v1282, %v1282
        %v1473 = vlaneseq
        %v1474 = vshrl.u32 %v1473, 7
        %v1475 = vsub.s32 0, %v1474
        %v1476 = vrot.slane %v1471, %v1475
        %v1478 = vpack.i.b16 %v1286, %v1286
        %v1480 = vlaneseq
        %v1481 = vshrl.u32 %v1480, 7
        %v1482 = vsub.s32 0, %v1481
        %v1483 = vrot.slane %v1478, %v1482
        %v1485 = vpack.i.b16 %v1290, %v1290
        %v1487 = vlaneseq
        %v1488 = vshrl.u32 %v1487, 7
        %v1489 = vsub.s32 0, %v1488
        %v1490 = vrot.slane %v1485, %v1489
        %v1492 = vpack.i.b16 %v1294, %v1294
        %v1494 = vlaneseq
        %v1495 = vshrl.u32 %v1494, 7
        %v1496 = vsub.s32 0, %v1495
        %v1497 = vrot.slane %v1492, %v1496
        %v1499 = vpack.i.b16 %v1298, %v1298
        %v1501 = vlaneseq
        %v1502 = vshrl.u32 %v1501, 7
        %v1503 = vsub.s32 0, %v1502
        %v1504 = vrot.slane %v1499, %v1503
        %v1506 = vpack.i.b16 %v1302, %v1302
        %v1508 = vlaneseq
        %v1509 = vshrl.u32 %v1508, 7
        %v1510 = vsub.s32 0, %v1509
        %v1511 = vrot.slane %v1506, %v1510
        %v1513 = vpack.i.b16 %v1306, %v1306
        %v1515 = vlaneseq
        %v1516 = vshrl.u32 %v1515, 7
        %v1517 = vsub.s32 0, %v1516
        %v1518 = vrot.slane %v1513, %v1517
        %v1520 = vpack.i.b16 %v1310, %v1310
        %v1522 = vlaneseq
        %v1523 = vshrl.u32 %v1522, 7
        %v1524 = vsub.s32 0, %v1523
        %v1525 = vrot.slane %v1520, %v1524
        %v1527 = vpack.i.b16 %v1314, %v1314
        %v1529 = vlaneseq
        %v1530 = vshrl.u32 %v1529, 7
        %v1531 = vsub.s32 0, %v1530
        %v1532 = vrot.slane %v1527, %v1531
        %v1534 = vpack.i.b16 %v1318, %v1318
        %v1536 = vlaneseq
        %v1537 = vshrl.u32 %v1536, 7
        %v1538 = vsub.s32 0, %v1537
        %v1539 = vrot.slane %v1534, %v1538
        %v1541 = vpack.i.b16 %v1322, %v1322
        %v1543 = vlaneseq
        %v1544 = vshrl.u32 %v1543, 7
        %v1545 = vsub.s32 0, %v1544
        %v1546 = vrot.slane %v1541, %v1545
        %v1579 = vunpack.c.l.b16 %v1329
        %v1580 = vunpack.c.l.b16 %v1336
        %v1581 = vunpack.c.l.b16 %v1343
        %v1582 = vunpack.c.l.b16 %v1350
        %v1583 = vunpack.c.l.b16 %v1357
        %v1584 = vunpack.c.l.b16 %v1364
        %v1585 = vunpack.c.l.b16 %v1371
        %v1586 = vunpack.c.l.b16 %v1378
        %v1587 = vunpack.c.l.b16 %v1385
        %v1588 = vunpack.c.l.b16 %v1392
        %v1589 = vunpack.c.l.b16 %v1399
        %v1590 = vunpack.c.l.b16 %v1406
        %v1591 = vunpack.c.l.b16 %v1413
        %v1592 = vunpack.c.l.b16 %v1420
        %v1593 = vunpack.c.l.b16 %v1427
        %v1594 = vunpack.c.l.b16 %v1434
        %v1595 = vunpack.c.l.b16 %v1441
        %v1596 = vunpack.c.l.b16 %v1448
        %v1597 = vunpack.c.l.b16 %v1455
        %v1598 = vunpack.c.l.b16 %v1462
        %v1599 = vunpack.c.l.b16 %v1469
        %v1600 = vunpack.c.l.b16 %v1476
        %v1601 = vunpack.c.l.b16 %v1483
        %v1602 = vunpack.c.l.b16 %v1490
        %v1603 = vunpack.c.l.b16 %v1497
        %v1604 = vunpack.c.l.b16 %v1504
        %v1605 = vunpack.c.l.b16 %v1511
        %v1606 = vunpack.c.l.b16 %v1518
        %v1607 = vunpack.c.l.b16 %v1525
        %v1608 = vunpack.c.l.b16 %v1532
        %v1609 = vunpack.c.l.b16 %v1539
        %v1610 = vunpack.c.l.b16 %v1546
        %v1611 = vpack.c.b16 %v1579, %v1579
        %v1612 = vpack.c.b16 %v1580, %v1580
        %v1613 = vpack.c.b16 %v1581, %v1581
        %v1614 = vpack.c.b16 %v1582, %v1582
        %v1615 = vpack.c.b16 %v1583, %v1583
        %v1616 = vpack.c.b16 %v1584, %v1584
        %v1617 = vpack.c.b16 %v1585, %v1585
        %v1618 = vpack.c.b16 %v1586, %v1586
        %v1619 = vpack.c.b16 %v1587, %v1587
        %v1620 = vpack.c.b16 %v1588, %v1588
        %v1621 = vpack.c.b16 %v1589, %v1589
        %v1622 = vpack.c.b16 %v1590, %v1590
        %v1623 = vpack.c.b16 %v1591, %v1591
        %v1624 = vpack.c.b16 %v1592, %v1592
        %v1625 = vpack.c.b16 %v1593, %v1593
        %v1626 = vpack.c.b16 %v1594, %v1594
        %v1627 = vpack.c.b16 %v1595, %v1595
        %v1628 = vpack.c.b16 %v1596, %v1596
        %v1629 = vpack.c.b16 %v1597, %v1597
        %v1630 = vpack.c.b16 %v1598, %v1598
        %v1631 = vpack.c.b16 %v1599, %v1599
        %v1632 = vpack.c.b16 %v1600, %v1600
        %v1633 = vpack.c.b16 %v1601, %v1601
        %v1634 = vpack.c.b16 %v1602, %v1602
        %v1635 = vpack.c.b16 %v1603, %v1603
        %v1636 = vpack.c.b16 %v1604, %v1604
        %v1637 = vpack.c.b16 %v1605, %v1605
        %v1638 = vpack.c.b16 %v1606, %v1606
        %v1639 = vpack.c.b16 %v1607, %v1607
        %v1640 = vpack.c.b16 %v1608, %v1608
        %v1641 = vpack.c.b16 %v1609, %v1609
        %v1642 = vpack.c.b16 %v1610, %v1610
        %v1675 = vmul.bf16 %v967, %v1611
        %v1676 = vmul.bf16 %v968, %v1611
        %v1677 = vmul.bf16 %v969, %v1612
        %v1678 = vmul.bf16 %v970, %v1612
        %v1679 = vmul.bf16 %v971, %v1613
        %v1680 = vmul.bf16 %v972, %v1613
        %v1681 = vmul.bf16 %v973, %v1614
        %v1682 = vmul.bf16 %v974, %v1614
        %v1683 = vmul.bf16 %v975, %v1615
        %v1684 = vmul.bf16 %v976, %v1615
        %v1685 = vmul.bf16 %v977, %v1616
        %v1686 = vmul.bf16 %v978, %v1616
        %v1687 = vmul.bf16 %v979, %v1617
        %v1688 = vmul.bf16 %v980, %v1617
        %v1689 = vmul.bf16 %v981, %v1618
        %v1690 = vmul.bf16 %v982, %v1618
        %v1691 = vmul.bf16 %v983, %v1619
        %v1692 = vmul.bf16 %v984, %v1619
        %v1693 = vmul.bf16 %v985, %v1620
        %v1694 = vmul.bf16 %v986, %v1620
        %v1695 = vmul.bf16 %v987, %v1621
        %v1696 = vmul.bf16 %v988, %v1621
        %v1697 = vmul.bf16 %v989, %v1622
        %v1698 = vmul.bf16 %v990, %v1622
        %v1699 = vmul.bf16 %v991, %v1623
        %v1700 = vmul.bf16 %v992, %v1623
        %v1701 = vmul.bf16 %v993, %v1624
        %v1702 = vmul.bf16 %v994, %v1624
        %v1703 = vmul.bf16 %v995, %v1625
        %v1704 = vmul.bf16 %v996, %v1625
        %v1705 = vmul.bf16 %v997, %v1626
        %v1706 = vmul.bf16 %v998, %v1626
        %v1707 = vmul.bf16 %v999, %v1627
        %v1708 = vmul.bf16 %v1000, %v1627
        %v1709 = vmul.bf16 %v1001, %v1628
        %v1710 = vmul.bf16 %v1002, %v1628
        %v1711 = vmul.bf16 %v1003, %v1629
        %v1712 = vmul.bf16 %v1004, %v1629
        %v1713 = vmul.bf16 %v1005, %v1630
        %v1714 = vmul.bf16 %v1006, %v1630
        %v1715 = vmul.bf16 %v1007, %v1631
        %v1716 = vmul.bf16 %v1008, %v1631
        %v1717 = vmul.bf16 %v1009, %v1632
        %v1718 = vmul.bf16 %v1010, %v1632
        %v1719 = vmul.bf16 %v1011, %v1633
        %v1720 = vmul.bf16 %v1012, %v1633
        %v1721 = vmul.bf16 %v1013, %v1634
        %v1722 = vmul.bf16 %v1014, %v1634
        %v1723 = vmul.bf16 %v1015, %v1635
        %v1724 = vmul.bf16 %v1016, %v1635
        %v1725 = vmul.bf16 %v1017, %v1636
        %v1726 = vmul.bf16 %v1018, %v1636
        %v1727 = vmul.bf16 %v1019, %v1637
        %v1728 = vmul.bf16 %v1020, %v1637
        %v1729 = vmul.bf16 %v1021, %v1638
        %v1730 = vmul.bf16 %v1022, %v1638
        %v1731 = vmul.bf16 %v1023, %v1639
        %v1732 = vmul.bf16 %v1024, %v1639
        %v1733 = vmul.bf16 %v1025, %v1640
        %v1734 = vmul.bf16 %v1026, %v1640
        %v1735 = vmul.bf16 %v1027, %v1641
        %v1736 = vmul.bf16 %v1028, %v1641
        %v1737 = vmul.bf16 %v1029, %v1642
        %v1738 = vmul.bf16 %v1030, %v1642
        %v1739 = vunpack.c.l.bf16 %v1675
        %v1740 = vunpack.c.l.bf16 %v1676
        %v1741 = vunpack.c.l.bf16 %v1677
        %v1742 = vunpack.c.l.bf16 %v1678
        %v1743 = vunpack.c.l.bf16 %v1679
        %v1744 = vunpack.c.l.bf16 %v1680
        %v1745 = vunpack.c.l.bf16 %v1681
        %v1746 = vunpack.c.l.bf16 %v1682
        %v1747 = vunpack.c.l.bf16 %v1683
        %v1748 = vunpack.c.l.bf16 %v1684
        %v1749 = vunpack.c.l.bf16 %v1685
        %v1750 = vunpack.c.l.bf16 %v1686
        %v1751 = vunpack.c.l.bf16 %v1687
        %v1752 = vunpack.c.l.bf16 %v1688
        %v1753 = vunpack.c.l.bf16 %v1689
        %v1754 = vunpack.c.l.bf16 %v1690
        %v1755 = vunpack.c.l.bf16 %v1691
        %v1756 = vunpack.c.l.bf16 %v1692
        %v1757 = vunpack.c.l.bf16 %v1693
        %v1758 = vunpack.c.l.bf16 %v1694
        %v1759 = vunpack.c.l.bf16 %v1695
        %v1760 = vunpack.c.l.bf16 %v1696
        %v1761 = vunpack.c.l.bf16 %v1697
        %v1762 = vunpack.c.l.bf16 %v1698
        %v1763 = vunpack.c.l.bf16 %v1699
        %v1764 = vunpack.c.l.bf16 %v1700
        %v1765 = vunpack.c.l.bf16 %v1701
        %v1766 = vunpack.c.l.bf16 %v1702
        %v1767 = vunpack.c.l.bf16 %v1703
        %v1768 = vunpack.c.l.bf16 %v1704
        %v1769 = vunpack.c.l.bf16 %v1705
        %v1770 = vunpack.c.l.bf16 %v1706
        %v1771 = vunpack.c.l.bf16 %v1707
        %v1772 = vunpack.c.l.bf16 %v1708
        %v1773 = vunpack.c.l.bf16 %v1709
        %v1774 = vunpack.c.l.bf16 %v1710
        %v1775 = vunpack.c.l.bf16 %v1711
        %v1776 = vunpack.c.l.bf16 %v1712
        %v1777 = vunpack.c.l.bf16 %v1713
        %v1778 = vunpack.c.l.bf16 %v1714
        %v1779 = vunpack.c.l.bf16 %v1715
        %v1780 = vunpack.c.l.bf16 %v1716
        %v1781 = vunpack.c.l.bf16 %v1717
        %v1782 = vunpack.c.l.bf16 %v1718
        %v1783 = vunpack.c.l.bf16 %v1719
        %v1784 = vunpack.c.l.bf16 %v1720
        %v1785 = vunpack.c.l.bf16 %v1721
        %v1786 = vunpack.c.l.bf16 %v1722
        %v1787 = vunpack.c.l.bf16 %v1723
        %v1788 = vunpack.c.l.bf16 %v1724
        %v1789 = vunpack.c.l.bf16 %v1725
        %v1790 = vunpack.c.l.bf16 %v1726
        %v1791 = vunpack.c.l.bf16 %v1727
        %v1792 = vunpack.c.l.bf16 %v1728
        %v1793 = vunpack.c.l.bf16 %v1729
        %v1794 = vunpack.c.l.bf16 %v1730
        %v1795 = vunpack.c.l.bf16 %v1731
        %v1796 = vunpack.c.l.bf16 %v1732
        %v1797 = vunpack.c.l.bf16 %v1733
        %v1798 = vunpack.c.l.bf16 %v1734
        %v1799 = vunpack.c.l.bf16 %v1735
        %v1800 = vunpack.c.l.bf16 %v1736
        %v1801 = vunpack.c.l.bf16 %v1737
        %v1802 = vunpack.c.l.bf16 %v1738
        %vm1803 = vcmask 64512
        %v1804 = vsel %vm1803, %v1739, 0.0
        %1805 = vadd.xlane.f32.xlu0 %v1804
        %v1806 = vpop.xlane.xlu0 %1805
        %v1807 = vsel %vm1803, %v1740, 0.0
        %1808 = vadd.xlane.f32.xlu0 %v1807
        %v1809 = vpop.xlane.xlu0 %1808
        %v1810 = vsel %vm1803, %v1741, 0.0
        %1811 = vadd.xlane.f32.xlu0 %v1810
        %v1812 = vpop.xlane.xlu0 %1811
        %v1813 = vsel %vm1803, %v1742, 0.0
        %1814 = vadd.xlane.f32.xlu0 %v1813
        %v1815 = vpop.xlane.xlu0 %1814
        %v1816 = vsel %vm1803, %v1743, 0.0
        %1817 = vadd.xlane.f32.xlu0 %v1816
        %v1818 = vpop.xlane.xlu0 %1817
        %v1819 = vsel %vm1803, %v1744, 0.0
        %1820 = vadd.xlane.f32.xlu0 %v1819
        %v1821 = vpop.xlane.xlu0 %1820
        %v1822 = vsel %vm1803, %v1745, 0.0
        %1823 = vadd.xlane.f32.xlu0 %v1822
        %v1824 = vpop.xlane.xlu0 %1823
        %v1825 = vsel %vm1803, %v1746, 0.0
        %1826 = vadd.xlane.f32.xlu0 %v1825
        %v1827 = vpop.xlane.xlu0 %1826
        %v1828 = vsel %vm1803, %v1747, 0.0
        %1829 = vadd.xlane.f32.xlu0 %v1828
        %v1830 = vpop.xlane.xlu0 %1829
        %v1831 = vsel %vm1803, %v1748, 0.0
        %1832 = vadd.xlane.f32.xlu0 %v1831
        %v1833 = vpop.xlane.xlu0 %1832
        %v1834 = vsel %vm1803, %v1749, 0.0
        %1835 = vadd.xlane.f32.xlu0 %v1834
        %v1836 = vpop.xlane.xlu0 %1835
        %v1837 = vsel %vm1803, %v1750, 0.0
        %1838 = vadd.xlane.f32.xlu0 %v1837
        %v1839 = vpop.xlane.xlu0 %1838
        %v1840 = vsel %vm1803, %v1751, 0.0
        %1841 = vadd.xlane.f32.xlu0 %v1840
        %v1842 = vpop.xlane.xlu0 %1841
        %v1843 = vsel %vm1803, %v1752, 0.0
        %1844 = vadd.xlane.f32.xlu0 %v1843
        %v1845 = vpop.xlane.xlu0 %1844
        %v1846 = vsel %vm1803, %v1753, 0.0
        %1847 = vadd.xlane.f32.xlu0 %v1846
        %v1848 = vpop.xlane.xlu0 %1847
        %v1849 = vsel %vm1803, %v1754, 0.0
        %1850 = vadd.xlane.f32.xlu0 %v1849
        %v1851 = vpop.xlane.xlu0 %1850
        %v1852 = vsel %vm1803, %v1755, 0.0
        %1853 = vadd.xlane.f32.xlu0 %v1852
        %v1854 = vpop.xlane.xlu0 %1853
        %v1855 = vsel %vm1803, %v1756, 0.0
        %1856 = vadd.xlane.f32.xlu0 %v1855
        %v1857 = vpop.xlane.xlu0 %1856
        %v1858 = vsel %vm1803, %v1757, 0.0
        %1859 = vadd.xlane.f32.xlu0 %v1858
        %v1860 = vpop.xlane.xlu0 %1859
        %v1861 = vsel %vm1803, %v1758, 0.0
        %1862 = vadd.xlane.f32.xlu0 %v1861
        %v1863 = vpop.xlane.xlu0 %1862
        %v1864 = vsel %vm1803, %v1759, 0.0
        %1865 = vadd.xlane.f32.xlu0 %v1864
        %v1866 = vpop.xlane.xlu0 %1865
        %v1867 = vsel %vm1803, %v1760, 0.0
        %1868 = vadd.xlane.f32.xlu0 %v1867
        %v1869 = vpop.xlane.xlu0 %1868
        %v1870 = vsel %vm1803, %v1761, 0.0
        %1871 = vadd.xlane.f32.xlu0 %v1870
        %v1872 = vpop.xlane.xlu0 %1871
        %v1873 = vsel %vm1803, %v1762, 0.0
        %1874 = vadd.xlane.f32.xlu0 %v1873
        %v1875 = vpop.xlane.xlu0 %1874
        %v1876 = vsel %vm1803, %v1763, 0.0
        %1877 = vadd.xlane.f32.xlu0 %v1876
        %v1878 = vpop.xlane.xlu0 %1877
        %v1879 = vsel %vm1803, %v1764, 0.0
        %1880 = vadd.xlane.f32.xlu0 %v1879
        %v1881 = vpop.xlane.xlu0 %1880
        %v1882 = vsel %vm1803, %v1765, 0.0
        %1883 = vadd.xlane.f32.xlu0 %v1882
        %v1884 = vpop.xlane.xlu0 %1883
        %v1885 = vsel %vm1803, %v1766, 0.0
        %1886 = vadd.xlane.f32.xlu0 %v1885
        %v1887 = vpop.xlane.xlu0 %1886
        %v1888 = vsel %vm1803, %v1767, 0.0
        %1889 = vadd.xlane.f32.xlu0 %v1888
        %v1890 = vpop.xlane.xlu0 %1889
        %v1891 = vsel %vm1803, %v1768, 0.0
        %1892 = vadd.xlane.f32.xlu0 %v1891
        %v1893 = vpop.xlane.xlu0 %1892
        %v1894 = vsel %vm1803, %v1769, 0.0
        %1895 = vadd.xlane.f32.xlu0 %v1894
        %v1896 = vpop.xlane.xlu0 %1895
        %v1897 = vsel %vm1803, %v1770, 0.0
        %1898 = vadd.xlane.f32.xlu0 %v1897
        %v1899 = vpop.xlane.xlu0 %1898
        %v1900 = vsel %vm1803, %v1771, 0.0
        %1901 = vadd.xlane.f32.xlu0 %v1900
        %v1902 = vpop.xlane.xlu0 %1901
        %v1903 = vsel %vm1803, %v1772, 0.0
        %1904 = vadd.xlane.f32.xlu0 %v1903
        %v1905 = vpop.xlane.xlu0 %1904
        %v1906 = vsel %vm1803, %v1773, 0.0
        %1907 = vadd.xlane.f32.xlu0 %v1906
        %v1908 = vpop.xlane.xlu0 %1907
        %v1909 = vsel %vm1803, %v1774, 0.0
        %1910 = vadd.xlane.f32.xlu0 %v1909
        %v1911 = vpop.xlane.xlu0 %1910
        %v1912 = vsel %vm1803, %v1775, 0.0
        %1913 = vadd.xlane.f32.xlu0 %v1912
        %v1914 = vpop.xlane.xlu0 %1913
        %v1915 = vsel %vm1803, %v1776, 0.0
        %1916 = vadd.xlane.f32.xlu0 %v1915
        %v1917 = vpop.xlane.xlu0 %1916
        %v1918 = vsel %vm1803, %v1777, 0.0
        %1919 = vadd.xlane.f32.xlu0 %v1918
        %v1920 = vpop.xlane.xlu0 %1919
        %v1921 = vsel %vm1803, %v1778, 0.0
        %1922 = vadd.xlane.f32.xlu0 %v1921
        %v1923 = vpop.xlane.xlu0 %1922
        %v1924 = vsel %vm1803, %v1779, 0.0
        %1925 = vadd.xlane.f32.xlu0 %v1924
        %v1926 = vpop.xlane.xlu0 %1925
        %v1927 = vsel %vm1803, %v1780, 0.0
        %1928 = vadd.xlane.f32.xlu0 %v1927
        %v1929 = vpop.xlane.xlu0 %1928
        %v1930 = vsel %vm1803, %v1781, 0.0
        %1931 = vadd.xlane.f32.xlu0 %v1930
        %v1932 = vpop.xlane.xlu0 %1931
        %v1933 = vsel %vm1803, %v1782, 0.0
        %1934 = vadd.xlane.f32.xlu0 %v1933
        %v1935 = vpop.xlane.xlu0 %1934
        %v1936 = vsel %vm1803, %v1783, 0.0
        %1937 = vadd.xlane.f32.xlu0 %v1936
        %v1938 = vpop.xlane.xlu0 %1937
        %v1939 = vsel %vm1803, %v1784, 0.0
        %1940 = vadd.xlane.f32.xlu0 %v1939
        %v1941 = vpop.xlane.xlu0 %1940
        %v1942 = vsel %vm1803, %v1785, 0.0
        %1943 = vadd.xlane.f32.xlu0 %v1942
        %v1944 = vpop.xlane.xlu0 %1943
        %v1945 = vsel %vm1803, %v1786, 0.0
        %1946 = vadd.xlane.f32.xlu0 %v1945
        %v1947 = vpop.xlane.xlu0 %1946
        %v1948 = vsel %vm1803, %v1787, 0.0
        %1949 = vadd.xlane.f32.xlu0 %v1948
        %v1950 = vpop.xlane.xlu0 %1949
        %v1951 = vsel %vm1803, %v1788, 0.0
        %1952 = vadd.xlane.f32.xlu0 %v1951
        %v1953 = vpop.xlane.xlu0 %1952
        %v1954 = vsel %vm1803, %v1789, 0.0
        %1955 = vadd.xlane.f32.xlu0 %v1954
        %v1956 = vpop.xlane.xlu0 %1955
        %v1957 = vsel %vm1803, %v1790, 0.0
        %1958 = vadd.xlane.f32.xlu0 %v1957
        %v1959 = vpop.xlane.xlu0 %1958
        %v1960 = vsel %vm1803, %v1791, 0.0
        %1961 = vadd.xlane.f32.xlu0 %v1960
        %v1962 = vpop.xlane.xlu0 %1961
        %v1963 = vsel %vm1803, %v1792, 0.0
        %1964 = vadd.xlane.f32.xlu0 %v1963
        %v1965 = vpop.xlane.xlu0 %1964
        %v1966 = vsel %vm1803, %v1793, 0.0
        %1967 = vadd.xlane.f32.xlu0 %v1966
        %v1968 = vpop.xlane.xlu0 %1967
        %v1969 = vsel %vm1803, %v1794, 0.0
        %1970 = vadd.xlane.f32.xlu0 %v1969
        %v1971 = vpop.xlane.xlu0 %1970
        %v1972 = vsel %vm1803, %v1795, 0.0
        %1973 = vadd.xlane.f32.xlu0 %v1972
        %v1974 = vpop.xlane.xlu0 %1973
        %v1975 = vsel %vm1803, %v1796, 0.0
        %1976 = vadd.xlane.f32.xlu0 %v1975
        %v1977 = vpop.xlane.xlu0 %1976
        %v1978 = vsel %vm1803, %v1797, 0.0
        %1979 = vadd.xlane.f32.xlu0 %v1978
        %v1980 = vpop.xlane.xlu0 %1979
        %v1981 = vsel %vm1803, %v1798, 0.0
        %1982 = vadd.xlane.f32.xlu0 %v1981
        %v1983 = vpop.xlane.xlu0 %1982
        %v1984 = vsel %vm1803, %v1799, 0.0
        %1985 = vadd.xlane.f32.xlu0 %v1984
        %v1986 = vpop.xlane.xlu0 %1985
        %v1987 = vsel %vm1803, %v1800, 0.0
        %1988 = vadd.xlane.f32.xlu0 %v1987
        %v1989 = vpop.xlane.xlu0 %1988
        %v1990 = vsel %vm1803, %v1801, 0.0
        %1991 = vadd.xlane.f32.xlu0 %v1990
        %v1992 = vpop.xlane.xlu0 %1991
        %v1993 = vsel %vm1803, %v1802, 0.0
        %1994 = vadd.xlane.f32.xlu0 %v1993
        %v1995 = vpop.xlane.xlu0 %1994
        %v2060 = vlaneseq
        %v2061 = vand.u32 %v2060, 127
        %v2062 = vlaneseq
        %v2063 = vshrl.u32 %v2062, 7
        %v2064 = vsub.s32 %v2061, %v2063
        %v2065 = vrot.slane %v1806, %v2064
        %v2066 = vadd.s32 %v2061, 4294967288
        %v2067 = vlaneseq
        %v2068 = vshrl.u32 %v2067, 7
        %v2069 = vsub.s32 %v2066, %v2068
        %v2070 = vrot.slane %v1809, %v2069
        %vm2071 = vcmask 130112
        %v2072 = vsel %vm2071, %v2070, %v2065
        %v2073 = vlaneseq
        %v2074 = vshrl.u32 %v2073, 7
        %v2075 = vsub.s32 %v2061, %v2074
        %v2076 = vrot.slane %v1812, %v2075
        %v2077 = vlaneseq
        %v2078 = vshrl.u32 %v2077, 7
        %v2079 = vsub.s32 %v2066, %v2078
        %v2080 = vrot.slane %v1815, %v2079
        %v2081 = vsel %vm2071, %v2080, %v2076
        %v2082 = vlaneseq
        %v2083 = vshrl.u32 %v2082, 7
        %v2084 = vsub.s32 %v2061, %v2083
        %v2085 = vrot.slane %v1818, %v2084
        %v2086 = vlaneseq
        %v2087 = vshrl.u32 %v2086, 7
        %v2088 = vsub.s32 %v2066, %v2087
        %v2089 = vrot.slane %v1821, %v2088
        %v2090 = vsel %vm2071, %v2089, %v2085
        %v2091 = vlaneseq
        %v2092 = vshrl.u32 %v2091, 7
        %v2093 = vsub.s32 %v2061, %v2092
        %v2094 = vrot.slane %v1824, %v2093
        %v2095 = vlaneseq
        %v2096 = vshrl.u32 %v2095, 7
        %v2097 = vsub.s32 %v2066, %v2096
        %v2098 = vrot.slane %v1827, %v2097
        %v2099 = vsel %vm2071, %v2098, %v2094
        %v2100 = vlaneseq
        %v2101 = vshrl.u32 %v2100, 7
        %v2102 = vsub.s32 %v2061, %v2101
        %v2103 = vrot.slane %v1830, %v2102
        %v2104 = vlaneseq
        %v2105 = vshrl.u32 %v2104, 7
        %v2106 = vsub.s32 %v2066, %v2105
        %v2107 = vrot.slane %v1833, %v2106
        %v2108 = vsel %vm2071, %v2107, %v2103
        %v2109 = vlaneseq
        %v2110 = vshrl.u32 %v2109, 7
        %v2111 = vsub.s32 %v2061, %v2110
        %v2112 = vrot.slane %v1836, %v2111
        %v2113 = vlaneseq
        %v2114 = vshrl.u32 %v2113, 7
        %v2115 = vsub.s32 %v2066, %v2114
        %v2116 = vrot.slane %v1839, %v2115
        %v2117 = vsel %vm2071, %v2116, %v2112
        %v2118 = vlaneseq
        %v2119 = vshrl.u32 %v2118, 7
        %v2120 = vsub.s32 %v2061, %v2119
        %v2121 = vrot.slane %v1842, %v2120
        %v2122 = vlaneseq
        %v2123 = vshrl.u32 %v2122, 7
        %v2124 = vsub.s32 %v2066, %v2123
        %v2125 = vrot.slane %v1845, %v2124
        %v2126 = vsel %vm2071, %v2125, %v2121
        %v2127 = vlaneseq
        %v2128 = vshrl.u32 %v2127, 7
        %v2129 = vsub.s32 %v2061, %v2128
        %v2130 = vrot.slane %v1848, %v2129
        %v2131 = vlaneseq
        %v2132 = vshrl.u32 %v2131, 7
        %v2133 = vsub.s32 %v2066, %v2132
        %v2134 = vrot.slane %v1851, %v2133
        %v2135 = vsel %vm2071, %v2134, %v2130
        %v2136 = vlaneseq
        %v2137 = vshrl.u32 %v2136, 7
        %v2138 = vsub.s32 %v2061, %v2137
        %v2139 = vrot.slane %v1854, %v2138
        %v2140 = vlaneseq
        %v2141 = vshrl.u32 %v2140, 7
        %v2142 = vsub.s32 %v2066, %v2141
        %v2143 = vrot.slane %v1857, %v2142
        %v2144 = vsel %vm2071, %v2143, %v2139
        %v2145 = vlaneseq
        %v2146 = vshrl.u32 %v2145, 7
        %v2147 = vsub.s32 %v2061, %v2146
        %v2148 = vrot.slane %v1860, %v2147
        %v2149 = vlaneseq
        %v2150 = vshrl.u32 %v2149, 7
        %v2151 = vsub.s32 %v2066, %v2150
        %v2152 = vrot.slane %v1863, %v2151
        %v2153 = vsel %vm2071, %v2152, %v2148
        %v2154 = vlaneseq
        %v2155 = vshrl.u32 %v2154, 7
        %v2156 = vsub.s32 %v2061, %v2155
        %v2157 = vrot.slane %v1866, %v2156
        %v2158 = vlaneseq
        %v2159 = vshrl.u32 %v2158, 7
        %v2160 = vsub.s32 %v2066, %v2159
        %v2161 = vrot.slane %v1869, %v2160
        %v2162 = vsel %vm2071, %v2161, %v2157
        %v2163 = vlaneseq
        %v2164 = vshrl.u32 %v2163, 7
        %v2165 = vsub.s32 %v2061, %v2164
        %v2166 = vrot.slane %v1872, %v2165
        %v2167 = vlaneseq
        %v2168 = vshrl.u32 %v2167, 7
        %v2169 = vsub.s32 %v2066, %v2168
        %v2170 = vrot.slane %v1875, %v2169
        %v2171 = vsel %vm2071, %v2170, %v2166
        %v2172 = vlaneseq
        %v2173 = vshrl.u32 %v2172, 7
        %v2174 = vsub.s32 %v2061, %v2173
        %v2175 = vrot.slane %v1878, %v2174
        %v2176 = vlaneseq
        %v2177 = vshrl.u32 %v2176, 7
        %v2178 = vsub.s32 %v2066, %v2177
        %v2179 = vrot.slane %v1881, %v2178
        %v2180 = vsel %vm2071, %v2179, %v2175
        %v2181 = vlaneseq
        %v2182 = vshrl.u32 %v2181, 7
        %v2183 = vsub.s32 %v2061, %v2182
        %v2184 = vrot.slane %v1884, %v2183
        %v2185 = vlaneseq
        %v2186 = vshrl.u32 %v2185, 7
        %v2187 = vsub.s32 %v2066, %v2186
        %v2188 = vrot.slane %v1887, %v2187
        %v2189 = vsel %vm2071, %v2188, %v2184
        %v2190 = vlaneseq
        %v2191 = vshrl.u32 %v2190, 7
        %v2192 = vsub.s32 %v2061, %v2191
        %v2193 = vrot.slane %v1890, %v2192
        %v2194 = vlaneseq
        %v2195 = vshrl.u32 %v2194, 7
        %v2196 = vsub.s32 %v2066, %v2195
        %v2197 = vrot.slane %v1893, %v2196
        %v2198 = vsel %vm2071, %v2197, %v2193
        %v2199 = vlaneseq
        %v2200 = vshrl.u32 %v2199, 7
        %v2201 = vsub.s32 %v2061, %v2200
        %v2202 = vrot.slane %v1896, %v2201
        %v2203 = vlaneseq
        %v2204 = vshrl.u32 %v2203, 7
        %v2205 = vsub.s32 %v2066, %v2204
        %v2206 = vrot.slane %v1899, %v2205
        %v2207 = vsel %vm2071, %v2206, %v2202
        %v2208 = vlaneseq
        %v2209 = vshrl.u32 %v2208, 7
        %v2210 = vsub.s32 %v2061, %v2209
        %v2211 = vrot.slane %v1902, %v2210
        %v2212 = vlaneseq
        %v2213 = vshrl.u32 %v2212, 7
        %v2214 = vsub.s32 %v2066, %v2213
        %v2215 = vrot.slane %v1905, %v2214
        %v2216 = vsel %vm2071, %v2215, %v2211
        %v2217 = vlaneseq
        %v2218 = vshrl.u32 %v2217, 7
        %v2219 = vsub.s32 %v2061, %v2218
        %v2220 = vrot.slane %v1908, %v2219
        %v2221 = vlaneseq
        %v2222 = vshrl.u32 %v2221, 7
        %v2223 = vsub.s32 %v2066, %v2222
        %v2224 = vrot.slane %v1911, %v2223
        %v2225 = vsel %vm2071, %v2224, %v2220
        %v2226 = vlaneseq
        %v2227 = vshrl.u32 %v2226, 7
        %v2228 = vsub.s32 %v2061, %v2227
        %v2229 = vrot.slane %v1914, %v2228
        %v2230 = vlaneseq
        %v2231 = vshrl.u32 %v2230, 7
        %v2232 = vsub.s32 %v2066, %v2231
        %v2233 = vrot.slane %v1917, %v2232
        %v2234 = vsel %vm2071, %v2233, %v2229
        %v2235 = vlaneseq
        %v2236 = vshrl.u32 %v2235, 7
        %v2237 = vsub.s32 %v2061, %v2236
        %v2238 = vrot.slane %v1920, %v2237
        %v2239 = vlaneseq
        %v2240 = vshrl.u32 %v2239, 7
        %v2241 = vsub.s32 %v2066, %v2240
        %v2242 = vrot.slane %v1923, %v2241
        %v2243 = vsel %vm2071, %v2242, %v2238
        %v2244 = vlaneseq
        %v2245 = vshrl.u32 %v2244, 7
        %v2246 = vsub.s32 %v2061, %v2245
        %v2247 = vrot.slane %v1926, %v2246
        %v2248 = vlaneseq
        %v2249 = vshrl.u32 %v2248, 7
        %v2250 = vsub.s32 %v2066, %v2249
        %v2251 = vrot.slane %v1929, %v2250
        %v2252 = vsel %vm2071, %v2251, %v2247
        %v2253 = vlaneseq
        %v2254 = vshrl.u32 %v2253, 7
        %v2255 = vsub.s32 %v2061, %v2254
        %v2256 = vrot.slane %v1932, %v2255
        %v2257 = vlaneseq
        %v2258 = vshrl.u32 %v2257, 7
        %v2259 = vsub.s32 %v2066, %v2258
        %v2260 = vrot.slane %v1935, %v2259
        %v2261 = vsel %vm2071, %v2260, %v2256
        %v2262 = vlaneseq
        %v2263 = vshrl.u32 %v2262, 7
        %v2264 = vsub.s32 %v2061, %v2263
        %v2265 = vrot.slane %v1938, %v2264
        %v2266 = vlaneseq
        %v2267 = vshrl.u32 %v2266, 7
        %v2268 = vsub.s32 %v2066, %v2267
        %v2269 = vrot.slane %v1941, %v2268
        %v2270 = vsel %vm2071, %v2269, %v2265
        %v2271 = vlaneseq
        %v2272 = vshrl.u32 %v2271, 7
        %v2273 = vsub.s32 %v2061, %v2272
        %v2274 = vrot.slane %v1944, %v2273
        %v2275 = vlaneseq
        %v2276 = vshrl.u32 %v2275, 7
        %v2277 = vsub.s32 %v2066, %v2276
        %v2278 = vrot.slane %v1947, %v2277
        %v2279 = vsel %vm2071, %v2278, %v2274
        %v2280 = vlaneseq
        %v2281 = vshrl.u32 %v2280, 7
        %v2282 = vsub.s32 %v2061, %v2281
        %v2283 = vrot.slane %v1950, %v2282
        %v2284 = vlaneseq
        %v2285 = vshrl.u32 %v2284, 7
        %v2286 = vsub.s32 %v2066, %v2285
        %v2287 = vrot.slane %v1953, %v2286
        %v2288 = vsel %vm2071, %v2287, %v2283
        %v2289 = vlaneseq
        %v2290 = vshrl.u32 %v2289, 7
        %v2291 = vsub.s32 %v2061, %v2290
        %v2292 = vrot.slane %v1956, %v2291
        %v2293 = vlaneseq
        %v2294 = vshrl.u32 %v2293, 7
        %v2295 = vsub.s32 %v2066, %v2294
        %v2296 = vrot.slane %v1959, %v2295
        %v2297 = vsel %vm2071, %v2296, %v2292
        %v2298 = vlaneseq
        %v2299 = vshrl.u32 %v2298, 7
        %v2300 = vsub.s32 %v2061, %v2299
        %v2301 = vrot.slane %v1962, %v2300
        %v2302 = vlaneseq
        %v2303 = vshrl.u32 %v2302, 7
        %v2304 = vsub.s32 %v2066, %v2303
        %v2305 = vrot.slane %v1965, %v2304
        %v2306 = vsel %vm2071, %v2305, %v2301
        %v2307 = vlaneseq
        %v2308 = vshrl.u32 %v2307, 7
        %v2309 = vsub.s32 %v2061, %v2308
        %v2310 = vrot.slane %v1968, %v2309
        %v2311 = vlaneseq
        %v2312 = vshrl.u32 %v2311, 7
        %v2313 = vsub.s32 %v2066, %v2312
        %v2314 = vrot.slane %v1971, %v2313
        %v2315 = vsel %vm2071, %v2314, %v2310
        %v2316 = vlaneseq
        %v2317 = vshrl.u32 %v2316, 7
        %v2318 = vsub.s32 %v2061, %v2317
        %v2319 = vrot.slane %v1974, %v2318
        %v2320 = vlaneseq
        %v2321 = vshrl.u32 %v2320, 7
        %v2322 = vsub.s32 %v2066, %v2321
        %v2323 = vrot.slane %v1977, %v2322
        %v2324 = vsel %vm2071, %v2323, %v2319
        %v2325 = vlaneseq
        %v2326 = vshrl.u32 %v2325, 7
        %v2327 = vsub.s32 %v2061, %v2326
        %v2328 = vrot.slane %v1980, %v2327
        %v2329 = vlaneseq
        %v2330 = vshrl.u32 %v2329, 7
        %v2331 = vsub.s32 %v2066, %v2330
        %v2332 = vrot.slane %v1983, %v2331
        %v2333 = vsel %vm2071, %v2332, %v2328
        %v2334 = vlaneseq
        %v2335 = vshrl.u32 %v2334, 7
        %v2336 = vsub.s32 %v2061, %v2335
        %v2337 = vrot.slane %v1986, %v2336
        %v2338 = vlaneseq
        %v2339 = vshrl.u32 %v2338, 7
        %v2340 = vsub.s32 %v2066, %v2339
        %v2341 = vrot.slane %v1989, %v2340
        %v2342 = vsel %vm2071, %v2341, %v2337
        %v2343 = vlaneseq
        %v2344 = vshrl.u32 %v2343, 7
        %v2345 = vsub.s32 %v2061, %v2344
        %v2346 = vrot.slane %v1992, %v2345
        %v2347 = vlaneseq
        %v2348 = vshrl.u32 %v2347, 7
        %v2349 = vsub.s32 %v2066, %v2348
        %v2350 = vrot.slane %v1995, %v2349
        %v2351 = vsel %vm2071, %v2350, %v2346
        %vm2352 = vcmask 1041409
        %v2353 = vsel %vm2352, %v2081, %v2072
        %vm2354 = vcmask 1042434
        %v2355 = vsel %vm2354, %v2090, %v2353
        %vm2356 = vcmask 1043459
        %v2357 = vsel %vm2356, %v2099, %v2355
        %vm2358 = vcmask 1044484
        %v2359 = vsel %vm2358, %v2108, %v2357
        %vm2360 = vcmask 1045509
        %v2361 = vsel %vm2360, %v2117, %v2359
        %vm2362 = vcmask 1046534
        %v2363 = vsel %vm2362, %v2126, %v2361
        %vm2364 = vcmask 1047559
        %v2365 = vsel %vm2364, %v2135, %v2363
        %v2366 = vsel %vm2352, %v2153, %v2144
        %v2367 = vsel %vm2354, %v2162, %v2366
        %v2368 = vsel %vm2356, %v2171, %v2367
        %v2369 = vsel %vm2358, %v2180, %v2368
        %v2370 = vsel %vm2360, %v2189, %v2369
        %v2371 = vsel %vm2362, %v2198, %v2370
        %v2372 = vsel %vm2364, %v2207, %v2371
        %v2373 = vsel %vm2352, %v2225, %v2216
        %v2374 = vsel %vm2354, %v2234, %v2373
        %v2375 = vsel %vm2356, %v2243, %v2374
        %v2376 = vsel %vm2358, %v2252, %v2375
        %v2377 = vsel %vm2360, %v2261, %v2376
        %v2378 = vsel %vm2362, %v2270, %v2377
        %v2379 = vsel %vm2364, %v2279, %v2378
        %v2380 = vsel %vm2352, %v2297, %v2288
        %v2381 = vsel %vm2354, %v2306, %v2380
        %v2382 = vsel %vm2356, %v2315, %v2381
        %v2383 = vsel %vm2358, %v2324, %v2382
        %v2384 = vsel %vm2360, %v2333, %v2383
        %v2385 = vsel %vm2362, %v2342, %v2384
        %v2386 = vsel %vm2364, %v2351, %v2385
        %v2392 = vsel %vm1803, %v957, 0
        %v2395 = vsel %vm1803, %v958, 0
        %v2398 = vsel %vm1803, %v963, 0
        %2400 = vmatprep.subr.bf16.mxu0 0
        %2401 = vmatpush1.bf16.xpose.msra.mxu0 %v2398
        %2402 = vmatprep.subr.bf16.mxu0 0
        %2403 = vmatpush1.bf16.xpose.msra.mxu0 0
        %2404 = vmatprep.subr.bf16.mxu0 0
        %2405 = vmatpush1.bf16.xpose.msra.mxu0 0
        %2406 = vmatprep.subr.bf16.mxu0 0
        %2407 = vmatpush1.bf16.xpose.msra.mxu0 0
        %2408 = vmatprep.subr.bf16.mxu0 0
        %2409 = vmatpush1.bf16.xpose.msra.mxu0 0
        %2410 = vmatprep.subr.bf16.mxu0 0
        %2411 = vmatpush1.bf16.xpose.msra.mxu0 0
        %2412 = vmatprep.subr.bf16.mxu0 0
        %2413 = vmatpush1.bf16.xpose.msra.mxu0 0
        %2414 = vmatprep.subr.bf16.mxu0 0
        %2415 = vmatpush1.bf16.xpose.msra.mxu0 0
        %2416 = vmatprep.subr.bf16.mxu0 0
        %2417 = vmatpush1.bf16.xpose.msra.mxu0 0
        %2418 = vmatprep.subr.bf16.mxu0 0
        %2419 = vmatpush1.bf16.xpose.msra.mxu0 0
        %2420 = vmatprep.subr.bf16.mxu0 0
        %2421 = vmatpush1.bf16.xpose.msra.mxu0 0
        %2422 = vmatprep.subr.bf16.mxu0 0
        %2423 = vmatpush1.bf16.xpose.msra.mxu0 0
        %2424 = vmatprep.subr.bf16.mxu0 0
        %2425 = vmatpush1.bf16.xpose.msra.mxu0 0
        %2426 = vmatprep.subr.bf16.mxu0 0
        %2427 = vmatpush1.bf16.xpose.msra.mxu0 0
        %2428 = vmatprep.subr.bf16.mxu0 0
        %2429 = vmatpush1.bf16.xpose.msra.mxu0 0
        %2430 = vmatprep.subr.bf16.mxu0 0
        %2431 = vmatpush1.bf16.xpose.msra.mxu0 0
        %2432 = vmatprep.mubr.bf16.mxu0 0
        %2433 = vmatmul.mubr.bf16.gmra.mrb[0].mxu0 %v2392
        %v2434 = vpop.f32.mrb[0].mxu0
        %v2435 = vadd.f32 %v2365, %v2434
        %v2436 = vpop.f32.mrb[0].mxu0
        %v2437 = vpop.f32.mrb[0].mxu0
        %v2438 = vadd.f32 %v2372, %v2437
        %v2439 = vpop.f32.mrb[0].mxu0
        %2440 = vmatprep.mubr.bf16.mxu0 0
        %2441 = vmatmul.mubr.bf16.gmra.mrb[0].mxu0 %v2395
        %v2442 = vpop.f32.mrb[0].mxu0
        %v2443 = vadd.f32 %v2379, %v2442
        %v2444 = vpop.f32.mrb[0].mxu0
        %v2445 = vpop.f32.mrb[0].mxu0
        %v2446 = vadd.f32 %v2386, %v2445
        %v2447 = vpop.f32.mrb[0].mxu0
        %2448 = vdwg.mxu0
        %vm2449 = vcmask 130048
        %v2450 = vsel %vm2449, %v2435, -inf
        %2451 = vmax.xlane.f32.xlu0 %v2450
        %v2452 = vpop.xlane.xlu0 %2451
        %v2453 = vsel %vm2449, %v2438, -inf
        %2454 = vmax.xlane.f32.xlu0 %v2453
        %v2455 = vpop.xlane.xlu0 %2454
        %v2456 = vsel %vm2449, %v2443, -inf
        %2457 = vmax.xlane.f32.xlu0 %v2456
        %v2458 = vpop.xlane.xlu0 %2457
        %v2459 = vsel %vm2449, %v2446, -inf
        %2460 = vmax.xlane.f32.xlu0 %v2459
        %v2461 = vpop.xlane.xlu0 %2460
        %2526 = vrot.lane.b32.xlu0 %v1739, 120
        %v2527 = vpop.permute.xlu0 %2526
        %2528 = vrot.lane.b32.xlu0 %v1740, 120
        %v2529 = vpop.permute.xlu0 %2528
        %2530 = vrot.lane.b32.xlu0 %v1741, 120
        %v2531 = vpop.permute.xlu0 %2530
        %2532 = vrot.lane.b32.xlu0 %v1742, 120
        %v2533 = vpop.permute.xlu0 %2532
        %2534 = vrot.lane.b32.xlu0 %v1743, 120
        %v2535 = vpop.permute.xlu0 %2534
        %2536 = vrot.lane.b32.xlu0 %v1744, 120
        %v2537 = vpop.permute.xlu0 %2536
        %2538 = vrot.lane.b32.xlu0 %v1745, 120
        %v2539 = vpop.permute.xlu0 %2538
        %2540 = vrot.lane.b32.xlu0 %v1746, 120
        %v2541 = vpop.permute.xlu0 %2540
        %2542 = vrot.lane.b32.xlu0 %v1747, 120
        %v2543 = vpop.permute.xlu0 %2542
        %2544 = vrot.lane.b32.xlu0 %v1748, 120
        %v2545 = vpop.permute.xlu0 %2544
        %2546 = vrot.lane.b32.xlu0 %v1749, 120
        %v2547 = vpop.permute.xlu0 %2546
        %2548 = vrot.lane.b32.xlu0 %v1750, 120
        %v2549 = vpop.permute.xlu0 %2548
        %2550 = vrot.lane.b32.xlu0 %v1751, 120
        %v2551 = vpop.permute.xlu0 %2550
        %2552 = vrot.lane.b32.xlu0 %v1752, 120
        %v2553 = vpop.permute.xlu0 %2552
        %2554 = vrot.lane.b32.xlu0 %v1753, 120
        %v2555 = vpop.permute.xlu0 %2554
        %2556 = vrot.lane.b32.xlu0 %v1754, 120
        %v2557 = vpop.permute.xlu0 %2556
        %2558 = vrot.lane.b32.xlu0 %v1755, 120
        %v2559 = vpop.permute.xlu0 %2558
        %2560 = vrot.lane.b32.xlu0 %v1756, 120
        %v2561 = vpop.permute.xlu0 %2560
        %2562 = vrot.lane.b32.xlu0 %v1757, 120
        %v2563 = vpop.permute.xlu0 %2562
        %2564 = vrot.lane.b32.xlu0 %v1758, 120
        %v2565 = vpop.permute.xlu0 %2564
        %2566 = vrot.lane.b32.xlu0 %v1759, 120
        %v2567 = vpop.permute.xlu0 %2566
        %2568 = vrot.lane.b32.xlu0 %v1760, 120
        %v2569 = vpop.permute.xlu0 %2568
        %2570 = vrot.lane.b32.xlu0 %v1761, 120
        %v2571 = vpop.permute.xlu0 %2570
        %2572 = vrot.lane.b32.xlu0 %v1762, 120
        %v2573 = vpop.permute.xlu0 %2572
        %2574 = vrot.lane.b32.xlu0 %v1763, 120
        %v2575 = vpop.permute.xlu0 %2574
        %2576 = vrot.lane.b32.xlu0 %v1764, 120
        %v2577 = vpop.permute.xlu0 %2576
        %2578 = vrot.lane.b32.xlu0 %v1765, 120
        %v2579 = vpop.permute.xlu0 %2578
        %2580 = vrot.lane.b32.xlu0 %v1766, 120
        %v2581 = vpop.permute.xlu0 %2580
        %2582 = vrot.lane.b32.xlu0 %v1767, 120
        %v2583 = vpop.permute.xlu0 %2582
        %2584 = vrot.lane.b32.xlu0 %v1768, 120
        %v2585 = vpop.permute.xlu0 %2584
        %2586 = vrot.lane.b32.xlu0 %v1769, 120
        %v2587 = vpop.permute.xlu0 %2586
        %2588 = vrot.lane.b32.xlu0 %v1770, 120
        %v2589 = vpop.permute.xlu0 %2588
        %2590 = vrot.lane.b32.xlu0 %v1771, 120
        %v2591 = vpop.permute.xlu0 %2590
        %2592 = vrot.lane.b32.xlu0 %v1772, 120
        %v2593 = vpop.permute.xlu0 %2592
        %2594 = vrot.lane.b32.xlu0 %v1773, 120
        %v2595 = vpop.permute.xlu0 %2594
        %2596 = vrot.lane.b32.xlu0 %v1774, 120
        %v2597 = vpop.permute.xlu0 %2596
        %2598 = vrot.lane.b32.xlu0 %v1775, 120
        %v2599 = vpop.permute.xlu0 %2598
        %2600 = vrot.lane.b32.xlu0 %v1776, 120
        %v2601 = vpop.permute.xlu0 %2600
        %2602 = vrot.lane.b32.xlu0 %v1777, 120
        %v2603 = vpop.permute.xlu0 %2602
        %2604 = vrot.lane.b32.xlu0 %v1778, 120
        %v2605 = vpop.permute.xlu0 %2604
        %2606 = vrot.lane.b32.xlu0 %v1779, 120
        %v2607 = vpop.permute.xlu0 %2606
        %2608 = vrot.lane.b32.xlu0 %v1780, 120
        %v2609 = vpop.permute.xlu0 %2608
        %2610 = vrot.lane.b32.xlu0 %v1781, 120
        %v2611 = vpop.permute.xlu0 %2610
        %2612 = vrot.lane.b32.xlu0 %v1782, 120
        %v2613 = vpop.permute.xlu0 %2612
        %2614 = vrot.lane.b32.xlu0 %v1783, 120
        %v2615 = vpop.permute.xlu0 %2614
        %2616 = vrot.lane.b32.xlu0 %v1784, 120
        %v2617 = vpop.permute.xlu0 %2616
        %2618 = vrot.lane.b32.xlu0 %v1785, 120
        %v2619 = vpop.permute.xlu0 %2618
        %2620 = vrot.lane.b32.xlu0 %v1786, 120
        %v2621 = vpop.permute.xlu0 %2620
        %2622 = vrot.lane.b32.xlu0 %v1787, 120
        %v2623 = vpop.permute.xlu0 %2622
        %2624 = vrot.lane.b32.xlu0 %v1788, 120
        %v2625 = vpop.permute.xlu0 %2624
        %2626 = vrot.lane.b32.xlu0 %v1789, 120
        %v2627 = vpop.permute.xlu0 %2626
        %2628 = vrot.lane.b32.xlu0 %v1790, 120
        %v2629 = vpop.permute.xlu0 %2628
        %2630 = vrot.lane.b32.xlu0 %v1791, 120
        %v2631 = vpop.permute.xlu0 %2630
        %2632 = vrot.lane.b32.xlu0 %v1792, 120
        %v2633 = vpop.permute.xlu0 %2632
        %2634 = vrot.lane.b32.xlu0 %v1793, 120
        %v2635 = vpop.permute.xlu0 %2634
        %2636 = vrot.lane.b32.xlu0 %v1794, 120
        %v2637 = vpop.permute.xlu0 %2636
        %2638 = vrot.lane.b32.xlu0 %v1795, 120
        %v2639 = vpop.permute.xlu0 %2638
        %2640 = vrot.lane.b32.xlu0 %v1796, 120
        %v2641 = vpop.permute.xlu0 %2640
        %2642 = vrot.lane.b32.xlu0 %v1797, 120
        %v2643 = vpop.permute.xlu0 %2642
        %2644 = vrot.lane.b32.xlu0 %v1798, 120
        %v2645 = vpop.permute.xlu0 %2644
        %2646 = vrot.lane.b32.xlu0 %v1799, 120
        %v2647 = vpop.permute.xlu0 %2646
        %2648 = vrot.lane.b32.xlu0 %v1800, 120
        %v2649 = vpop.permute.xlu0 %2648
        %2650 = vrot.lane.b32.xlu0 %v1801, 120
        %v2651 = vpop.permute.xlu0 %2650
        %2652 = vrot.lane.b32.xlu0 %v1802, 120
        %v2653 = vpop.permute.xlu0 %2652
        %v2718 = vsel %vm1803, %v2527, 0.0
        %2719 = vadd.xlane.f32.xlu0 %v2718
        %v2720 = vpop.xlane.xlu0 %2719
        %v2721 = vsel %vm1803, %v2529, 0.0
        %2722 = vadd.xlane.f32.xlu0 %v2721
        %v2723 = vpop.xlane.xlu0 %2722
        %v2724 = vsel %vm1803, %v2531, 0.0
        %2725 = vadd.xlane.f32.xlu0 %v2724
        %v2726 = vpop.xlane.xlu0 %2725
        %v2727 = vsel %vm1803, %v2533, 0.0
        %2728 = vadd.xlane.f32.xlu0 %v2727
        %v2729 = vpop.xlane.xlu0 %2728
        %v2730 = vsel %vm1803, %v2535, 0.0
        %2731 = vadd.xlane.f32.xlu0 %v2730
        %v2732 = vpop.xlane.xlu0 %2731
        %v2733 = vsel %vm1803, %v2537, 0.0
        %2734 = vadd.xlane.f32.xlu0 %v2733
        %v2735 = vpop.xlane.xlu0 %2734
        %v2736 = vsel %vm1803, %v2539, 0.0
        %2737 = vadd.xlane.f32.xlu0 %v2736
        %v2738 = vpop.xlane.xlu0 %2737
        %v2739 = vsel %vm1803, %v2541, 0.0
        %2740 = vadd.xlane.f32.xlu0 %v2739
        %v2741 = vpop.xlane.xlu0 %2740
        %v2742 = vsel %vm1803, %v2543, 0.0
        %2743 = vadd.xlane.f32.xlu0 %v2742
        %v2744 = vpop.xlane.xlu0 %2743
        %v2745 = vsel %vm1803, %v2545, 0.0
        %2746 = vadd.xlane.f32.xlu0 %v2745
        %v2747 = vpop.xlane.xlu0 %2746
        %v2748 = vsel %vm1803, %v2547, 0.0
        %2749 = vadd.xlane.f32.xlu0 %v2748
        %v2750 = vpop.xlane.xlu0 %2749
        %v2751 = vsel %vm1803, %v2549, 0.0
        %2752 = vadd.xlane.f32.xlu0 %v2751
        %v2753 = vpop.xlane.xlu0 %2752
        %v2754 = vsel %vm1803, %v2551, 0.0
        %2755 = vadd.xlane.f32.xlu0 %v2754
        %v2756 = vpop.xlane.xlu0 %2755
        %v2757 = vsel %vm1803, %v2553, 0.0
        %2758 = vadd.xlane.f32.xlu0 %v2757
        %v2759 = vpop.xlane.xlu0 %2758
        %v2760 = vsel %vm1803, %v2555, 0.0
        %2761 = vadd.xlane.f32.xlu0 %v2760
        %v2762 = vpop.xlane.xlu0 %2761
        %v2763 = vsel %vm1803, %v2557, 0.0
        %2764 = vadd.xlane.f32.xlu0 %v2763
        %v2765 = vpop.xlane.xlu0 %2764
        %v2766 = vsel %vm1803, %v2559, 0.0
        %2767 = vadd.xlane.f32.xlu0 %v2766
        %v2768 = vpop.xlane.xlu0 %2767
        %v2769 = vsel %vm1803, %v2561, 0.0
        %2770 = vadd.xlane.f32.xlu0 %v2769
        %v2771 = vpop.xlane.xlu0 %2770
        %v2772 = vsel %vm1803, %v2563, 0.0
        %2773 = vadd.xlane.f32.xlu0 %v2772
        %v2774 = vpop.xlane.xlu0 %2773
        %v2775 = vsel %vm1803, %v2565, 0.0
        %2776 = vadd.xlane.f32.xlu0 %v2775
        %v2777 = vpop.xlane.xlu0 %2776
        %v2778 = vsel %vm1803, %v2567, 0.0
        %2779 = vadd.xlane.f32.xlu0 %v2778
        %v2780 = vpop.xlane.xlu0 %2779
        %v2781 = vsel %vm1803, %v2569, 0.0
        %2782 = vadd.xlane.f32.xlu0 %v2781
        %v2783 = vpop.xlane.xlu0 %2782
        %v2784 = vsel %vm1803, %v2571, 0.0
        %2785 = vadd.xlane.f32.xlu0 %v2784
        %v2786 = vpop.xlane.xlu0 %2785
        %v2787 = vsel %vm1803, %v2573, 0.0
        %2788 = vadd.xlane.f32.xlu0 %v2787
        %v2789 = vpop.xlane.xlu0 %2788
        %v2790 = vsel %vm1803, %v2575, 0.0
        %2791 = vadd.xlane.f32.xlu0 %v2790
        %v2792 = vpop.xlane.xlu0 %2791
        %v2793 = vsel %vm1803, %v2577, 0.0
        %2794 = vadd.xlane.f32.xlu0 %v2793
        %v2795 = vpop.xlane.xlu0 %2794
        %v2796 = vsel %vm1803, %v2579, 0.0
        %2797 = vadd.xlane.f32.xlu0 %v2796
        %v2798 = vpop.xlane.xlu0 %2797
        %v2799 = vsel %vm1803, %v2581, 0.0
        %2800 = vadd.xlane.f32.xlu0 %v2799
        %v2801 = vpop.xlane.xlu0 %2800
        %v2802 = vsel %vm1803, %v2583, 0.0
        %2803 = vadd.xlane.f32.xlu0 %v2802
        %v2804 = vpop.xlane.xlu0 %2803
        %v2805 = vsel %vm1803, %v2585, 0.0
        %2806 = vadd.xlane.f32.xlu0 %v2805
        %v2807 = vpop.xlane.xlu0 %2806
        %v2808 = vsel %vm1803, %v2587, 0.0
        %2809 = vadd.xlane.f32.xlu0 %v2808
        %v2810 = vpop.xlane.xlu0 %2809
        %v2811 = vsel %vm1803, %v2589, 0.0
        %2812 = vadd.xlane.f32.xlu0 %v2811
        %v2813 = vpop.xlane.xlu0 %2812
        %v2814 = vsel %vm1803, %v2591, 0.0
        %2815 = vadd.xlane.f32.xlu0 %v2814
        %v2816 = vpop.xlane.xlu0 %2815
        %v2817 = vsel %vm1803, %v2593, 0.0
        %2818 = vadd.xlane.f32.xlu0 %v2817
        %v2819 = vpop.xlane.xlu0 %2818
        %v2820 = vsel %vm1803, %v2595, 0.0
        %2821 = vadd.xlane.f32.xlu0 %v2820
        %v2822 = vpop.xlane.xlu0 %2821
        %v2823 = vsel %vm1803, %v2597, 0.0
        %2824 = vadd.xlane.f32.xlu0 %v2823
        %v2825 = vpop.xlane.xlu0 %2824
        %v2826 = vsel %vm1803, %v2599, 0.0
        %2827 = vadd.xlane.f32.xlu0 %v2826
        %v2828 = vpop.xlane.xlu0 %2827
        %v2829 = vsel %vm1803, %v2601, 0.0
        %2830 = vadd.xlane.f32.xlu0 %v2829
        %v2831 = vpop.xlane.xlu0 %2830
        %v2832 = vsel %vm1803, %v2603, 0.0
        %2833 = vadd.xlane.f32.xlu0 %v2832
        %v2834 = vpop.xlane.xlu0 %2833
        %v2835 = vsel %vm1803, %v2605, 0.0
        %2836 = vadd.xlane.f32.xlu0 %v2835
        %v2837 = vpop.xlane.xlu0 %2836
        %v2838 = vsel %vm1803, %v2607, 0.0
        %2839 = vadd.xlane.f32.xlu0 %v2838
        %v2840 = vpop.xlane.xlu0 %2839
        %v2841 = vsel %vm1803, %v2609, 0.0
        %2842 = vadd.xlane.f32.xlu0 %v2841
        %v2843 = vpop.xlane.xlu0 %2842
        %v2844 = vsel %vm1803, %v2611, 0.0
        %2845 = vadd.xlane.f32.xlu0 %v2844
        %v2846 = vpop.xlane.xlu0 %2845
        %v2847 = vsel %vm1803, %v2613, 0.0
        %2848 = vadd.xlane.f32.xlu0 %v2847
        %v2849 = vpop.xlane.xlu0 %2848
        %v2850 = vsel %vm1803, %v2615, 0.0
        %2851 = vadd.xlane.f32.xlu0 %v2850
        %v2852 = vpop.xlane.xlu0 %2851
        %v2853 = vsel %vm1803, %v2617, 0.0
        %2854 = vadd.xlane.f32.xlu0 %v2853
        %v2855 = vpop.xlane.xlu0 %2854
        %v2856 = vsel %vm1803, %v2619, 0.0
        %2857 = vadd.xlane.f32.xlu0 %v2856
        %v2858 = vpop.xlane.xlu0 %2857
        %v2859 = vsel %vm1803, %v2621, 0.0
        %2860 = vadd.xlane.f32.xlu0 %v2859
        %v2861 = vpop.xlane.xlu0 %2860
        %v2862 = vsel %vm1803, %v2623, 0.0
        %2863 = vadd.xlane.f32.xlu0 %v2862
        %v2864 = vpop.xlane.xlu0 %2863
        %v2865 = vsel %vm1803, %v2625, 0.0
        %2866 = vadd.xlane.f32.xlu0 %v2865
        %v2867 = vpop.xlane.xlu0 %2866
        %v2868 = vsel %vm1803, %v2627, 0.0
        %2869 = vadd.xlane.f32.xlu0 %v2868
        %v2870 = vpop.xlane.xlu0 %2869
        %v2871 = vsel %vm1803, %v2629, 0.0
        %2872 = vadd.xlane.f32.xlu0 %v2871
        %v2873 = vpop.xlane.xlu0 %2872
        %v2874 = vsel %vm1803, %v2631, 0.0
        %2875 = vadd.xlane.f32.xlu0 %v2874
        %v2876 = vpop.xlane.xlu0 %2875
        %v2877 = vsel %vm1803, %v2633, 0.0
        %2878 = vadd.xlane.f32.xlu0 %v2877
        %v2879 = vpop.xlane.xlu0 %2878
        %v2880 = vsel %vm1803, %v2635, 0.0
        %2881 = vadd.xlane.f32.xlu0 %v2880
        %v2882 = vpop.xlane.xlu0 %2881
        %v2883 = vsel %vm1803, %v2637, 0.0
        %2884 = vadd.xlane.f32.xlu0 %v2883
        %v2885 = vpop.xlane.xlu0 %2884
        %v2886 = vsel %vm1803, %v2639, 0.0
        %2887 = vadd.xlane.f32.xlu0 %v2886
        %v2888 = vpop.xlane.xlu0 %2887
        %v2889 = vsel %vm1803, %v2641, 0.0
        %2890 = vadd.xlane.f32.xlu0 %v2889
        %v2891 = vpop.xlane.xlu0 %2890
        %v2892 = vsel %vm1803, %v2643, 0.0
        %2893 = vadd.xlane.f32.xlu0 %v2892
        %v2894 = vpop.xlane.xlu0 %2893
        %v2895 = vsel %vm1803, %v2645, 0.0
        %2896 = vadd.xlane.f32.xlu0 %v2895
        %v2897 = vpop.xlane.xlu0 %2896
        %v2898 = vsel %vm1803, %v2647, 0.0
        %2899 = vadd.xlane.f32.xlu0 %v2898
        %v2900 = vpop.xlane.xlu0 %2899
        %v2901 = vsel %vm1803, %v2649, 0.0
        %2902 = vadd.xlane.f32.xlu0 %v2901
        %v2903 = vpop.xlane.xlu0 %2902
        %v2904 = vsel %vm1803, %v2651, 0.0
        %2905 = vadd.xlane.f32.xlu0 %v2904
        %v2906 = vpop.xlane.xlu0 %2905
        %v2907 = vsel %vm1803, %v2653, 0.0
        %2908 = vadd.xlane.f32.xlu0 %v2907
        %v2909 = vpop.xlane.xlu0 %2908
        %2910 = vrot.lane.b32.xlu0 %v957, 120
        %v2911 = vpop.permute.xlu0 %2910
        %2912 = vrot.lane.b32.xlu0 %v958, 120
        %v2913 = vpop.permute.xlu0 %2912
        %2915 = vrot.lane.b32.xlu0 %v963, 120
        %v2916 = vpop.permute.xlu0 %2915
        %v2981 = vlaneseq
        %v2982 = vshrl.u32 %v2981, 7
        %v2983 = vsub.s32 %v2061, %v2982
        %v2984 = vrot.slane %v2720, %v2983
        %v2985 = vlaneseq
        %v2986 = vshrl.u32 %v2985, 7
        %v2987 = vsub.s32 %v2066, %v2986
        %v2988 = vrot.slane %v2723, %v2987
        %v2989 = vsel %vm2071, %v2988, %v2984
        %v2990 = vlaneseq
        %v2991 = vshrl.u32 %v2990, 7
        %v2992 = vsub.s32 %v2061, %v2991
        %v2993 = vrot.slane %v2726, %v2992
        %v2994 = vlaneseq
        %v2995 = vshrl.u32 %v2994, 7
        %v2996 = vsub.s32 %v2066, %v2995
        %v2997 = vrot.slane %v2729, %v2996
        %v2998 = vsel %vm2071, %v2997, %v2993
        %v2999 = vlaneseq
        %v3000 = vshrl.u32 %v2999, 7
        %v3001 = vsub.s32 %v2061, %v3000
        %v3002 = vrot.slane %v2732, %v3001
        %v3003 = vlaneseq
        %v3004 = vshrl.u32 %v3003, 7
        %v3005 = vsub.s32 %v2066, %v3004
        %v3006 = vrot.slane %v2735, %v3005
        %v3007 = vsel %vm2071, %v3006, %v3002
        %v3008 = vlaneseq
        %v3009 = vshrl.u32 %v3008, 7
        %v3010 = vsub.s32 %v2061, %v3009
        %v3011 = vrot.slane %v2738, %v3010
        %v3012 = vlaneseq
        %v3013 = vshrl.u32 %v3012, 7
        %v3014 = vsub.s32 %v2066, %v3013
        %v3015 = vrot.slane %v2741, %v3014
        %v3016 = vsel %vm2071, %v3015, %v3011
        %v3017 = vlaneseq
        %v3018 = vshrl.u32 %v3017, 7
        %v3019 = vsub.s32 %v2061, %v3018
        %v3020 = vrot.slane %v2744, %v3019
        %v3021 = vlaneseq
        %v3022 = vshrl.u32 %v3021, 7
        %v3023 = vsub.s32 %v2066, %v3022
        %v3024 = vrot.slane %v2747, %v3023
        %v3025 = vsel %vm2071, %v3024, %v3020
        %v3026 = vlaneseq
        %v3027 = vshrl.u32 %v3026, 7
        %v3028 = vsub.s32 %v2061, %v3027
        %v3029 = vrot.slane %v2750, %v3028
        %v3030 = vlaneseq
        %v3031 = vshrl.u32 %v3030, 7
        %v3032 = vsub.s32 %v2066, %v3031
        %v3033 = vrot.slane %v2753, %v3032
        %v3034 = vsel %vm2071, %v3033, %v3029
        %v3035 = vlaneseq
        %v3036 = vshrl.u32 %v3035, 7
        %v3037 = vsub.s32 %v2061, %v3036
        %v3038 = vrot.slane %v2756, %v3037
        %v3039 = vlaneseq
        %v3040 = vshrl.u32 %v3039, 7
        %v3041 = vsub.s32 %v2066, %v3040
        %v3042 = vrot.slane %v2759, %v3041
        %v3043 = vsel %vm2071, %v3042, %v3038
        %v3044 = vlaneseq
        %v3045 = vshrl.u32 %v3044, 7
        %v3046 = vsub.s32 %v2061, %v3045
        %v3047 = vrot.slane %v2762, %v3046
        %v3048 = vlaneseq
        %v3049 = vshrl.u32 %v3048, 7
        %v3050 = vsub.s32 %v2066, %v3049
        %v3051 = vrot.slane %v2765, %v3050
        %v3052 = vsel %vm2071, %v3051, %v3047
        %v3053 = vlaneseq
        %v3054 = vshrl.u32 %v3053, 7
        %v3055 = vsub.s32 %v2061, %v3054
        %v3056 = vrot.slane %v2768, %v3055
        %v3057 = vlaneseq
        %v3058 = vshrl.u32 %v3057, 7
        %v3059 = vsub.s32 %v2066, %v3058
        %v3060 = vrot.slane %v2771, %v3059
        %v3061 = vsel %vm2071, %v3060, %v3056
        %v3062 = vlaneseq
        %v3063 = vshrl.u32 %v3062, 7
        %v3064 = vsub.s32 %v2061, %v3063
        %v3065 = vrot.slane %v2774, %v3064
        %v3066 = vlaneseq
        %v3067 = vshrl.u32 %v3066, 7
        %v3068 = vsub.s32 %v2066, %v3067
        %v3069 = vrot.slane %v2777, %v3068
        %v3070 = vsel %vm2071, %v3069, %v3065
        %v3071 = vlaneseq
        %v3072 = vshrl.u32 %v3071, 7
        %v3073 = vsub.s32 %v2061, %v3072
        %v3074 = vrot.slane %v2780, %v3073
        %v3075 = vlaneseq
        %v3076 = vshrl.u32 %v3075, 7
        %v3077 = vsub.s32 %v2066, %v3076
        %v3078 = vrot.slane %v2783, %v3077
        %v3079 = vsel %vm2071, %v3078, %v3074
        %v3080 = vlaneseq
        %v3081 = vshrl.u32 %v3080, 7
        %v3082 = vsub.s32 %v2061, %v3081
        %v3083 = vrot.slane %v2786, %v3082
        %v3084 = vlaneseq
        %v3085 = vshrl.u32 %v3084, 7
        %v3086 = vsub.s32 %v2066, %v3085
        %v3087 = vrot.slane %v2789, %v3086
        %v3088 = vsel %vm2071, %v3087, %v3083
        %v3089 = vlaneseq
        %v3090 = vshrl.u32 %v3089, 7
        %v3091 = vsub.s32 %v2061, %v3090
        %v3092 = vrot.slane %v2792, %v3091
        %v3093 = vlaneseq
        %v3094 = vshrl.u32 %v3093, 7
        %v3095 = vsub.s32 %v2066, %v3094
        %v3096 = vrot.slane %v2795, %v3095
        %v3097 = vsel %vm2071, %v3096, %v3092
        %v3098 = vlaneseq
        %v3099 = vshrl.u32 %v3098, 7
        %v3100 = vsub.s32 %v2061, %v3099
        %v3101 = vrot.slane %v2798, %v3100
        %v3102 = vlaneseq
        %v3103 = vshrl.u32 %v3102, 7
        %v3104 = vsub.s32 %v2066, %v3103
        %v3105 = vrot.slane %v2801, %v3104
        %v3106 = vsel %vm2071, %v3105, %v3101
        %v3107 = vlaneseq
        %v3108 = vshrl.u32 %v3107, 7
        %v3109 = vsub.s32 %v2061, %v3108
        %v3110 = vrot.slane %v2804, %v3109
        %v3111 = vlaneseq
        %v3112 = vshrl.u32 %v3111, 7
        %v3113 = vsub.s32 %v2066, %v3112
        %v3114 = vrot.slane %v2807, %v3113
        %v3115 = vsel %vm2071, %v3114, %v3110
        %v3116 = vlaneseq
        %v3117 = vshrl.u32 %v3116, 7
        %v3118 = vsub.s32 %v2061, %v3117
        %v3119 = vrot.slane %v2810, %v3118
        %v3120 = vlaneseq
        %v3121 = vshrl.u32 %v3120, 7
        %v3122 = vsub.s32 %v2066, %v3121
        %v3123 = vrot.slane %v2813, %v3122
        %v3124 = vsel %vm2071, %v3123, %v3119
        %v3125 = vlaneseq
        %v3126 = vshrl.u32 %v3125, 7
        %v3127 = vsub.s32 %v2061, %v3126
        %v3128 = vrot.slane %v2816, %v3127
        %v3129 = vlaneseq
        %v3130 = vshrl.u32 %v3129, 7
        %v3131 = vsub.s32 %v2066, %v3130
        %v3132 = vrot.slane %v2819, %v3131
        %v3133 = vsel %vm2071, %v3132, %v3128
        %v3134 = vlaneseq
        %v3135 = vshrl.u32 %v3134, 7
        %v3136 = vsub.s32 %v2061, %v3135
        %v3137 = vrot.slane %v2822, %v3136
        %v3138 = vlaneseq
        %v3139 = vshrl.u32 %v3138, 7
        %v3140 = vsub.s32 %v2066, %v3139
        %v3141 = vrot.slane %v2825, %v3140
        %v3142 = vsel %vm2071, %v3141, %v3137
        %v3143 = vlaneseq
        %v3144 = vshrl.u32 %v3143, 7
        %v3145 = vsub.s32 %v2061, %v3144
        %v3146 = vrot.slane %v2828, %v3145
        %v3147 = vlaneseq
        %v3148 = vshrl.u32 %v3147, 7
        %v3149 = vsub.s32 %v2066, %v3148
        %v3150 = vrot.slane %v2831, %v3149
        %v3151 = vsel %vm2071, %v3150, %v3146
        %v3152 = vlaneseq
        %v3153 = vshrl.u32 %v3152, 7
        %v3154 = vsub.s32 %v2061, %v3153
        %v3155 = vrot.slane %v2834, %v3154
        %v3156 = vlaneseq
        %v3157 = vshrl.u32 %v3156, 7
        %v3158 = vsub.s32 %v2066, %v3157
        %v3159 = vrot.slane %v2837, %v3158
        %v3160 = vsel %vm2071, %v3159, %v3155
        %v3161 = vlaneseq
        %v3162 = vshrl.u32 %v3161, 7
        %v3163 = vsub.s32 %v2061, %v3162
        %v3164 = vrot.slane %v2840, %v3163
        %v3165 = vlaneseq
        %v3166 = vshrl.u32 %v3165, 7
        %v3167 = vsub.s32 %v2066, %v3166
        %v3168 = vrot.slane %v2843, %v3167
        %v3169 = vsel %vm2071, %v3168, %v3164
        %v3170 = vlaneseq
        %v3171 = vshrl.u32 %v3170, 7
        %v3172 = vsub.s32 %v2061, %v3171
        %v3173 = vrot.slane %v2846, %v3172
        %v3174 = vlaneseq
        %v3175 = vshrl.u32 %v3174, 7
        %v3176 = vsub.s32 %v2066, %v3175
        %v3177 = vrot.slane %v2849, %v3176
        %v3178 = vsel %vm2071, %v3177, %v3173
        %v3179 = vlaneseq
        %v3180 = vshrl.u32 %v3179, 7
        %v3181 = vsub.s32 %v2061, %v3180
        %v3182 = vrot.slane %v2852, %v3181
        %v3183 = vlaneseq
        %v3184 = vshrl.u32 %v3183, 7
        %v3185 = vsub.s32 %v2066, %v3184
        %v3186 = vrot.slane %v2855, %v3185
        %v3187 = vsel %vm2071, %v3186, %v3182
        %v3188 = vlaneseq
        %v3189 = vshrl.u32 %v3188, 7
        %v3190 = vsub.s32 %v2061, %v3189
        %v3191 = vrot.slane %v2858, %v3190
        %v3192 = vlaneseq
        %v3193 = vshrl.u32 %v3192, 7
        %v3194 = vsub.s32 %v2066, %v3193
        %v3195 = vrot.slane %v2861, %v3194
        %v3196 = vsel %vm2071, %v3195, %v3191
        %v3197 = vlaneseq
        %v3198 = vshrl.u32 %v3197, 7
        %v3199 = vsub.s32 %v2061, %v3198
        %v3200 = vrot.slane %v2864, %v3199
        %v3201 = vlaneseq
        %v3202 = vshrl.u32 %v3201, 7
        %v3203 = vsub.s32 %v2066, %v3202
        %v3204 = vrot.slane %v2867, %v3203
        %v3205 = vsel %vm2071, %v3204, %v3200
        %v3206 = vlaneseq
        %v3207 = vshrl.u32 %v3206, 7
        %v3208 = vsub.s32 %v2061, %v3207
        %v3209 = vrot.slane %v2870, %v3208
        %v3210 = vlaneseq
        %v3211 = vshrl.u32 %v3210, 7
        %v3212 = vsub.s32 %v2066, %v3211
        %v3213 = vrot.slane %v2873, %v3212
        %v3214 = vsel %vm2071, %v3213, %v3209
        %v3215 = vlaneseq
        %v3216 = vshrl.u32 %v3215, 7
        %v3217 = vsub.s32 %v2061, %v3216
        %v3218 = vrot.slane %v2876, %v3217
        %v3219 = vlaneseq
        %v3220 = vshrl.u32 %v3219, 7
        %v3221 = vsub.s32 %v2066, %v3220
        %v3222 = vrot.slane %v2879, %v3221
        %v3223 = vsel %vm2071, %v3222, %v3218
        %v3224 = vlaneseq
        %v3225 = vshrl.u32 %v3224, 7
        %v3226 = vsub.s32 %v2061, %v3225
        %v3227 = vrot.slane %v2882, %v3226
        %v3228 = vlaneseq
        %v3229 = vshrl.u32 %v3228, 7
        %v3230 = vsub.s32 %v2066, %v3229
        %v3231 = vrot.slane %v2885, %v3230
        %v3232 = vsel %vm2071, %v3231, %v3227
        %v3233 = vlaneseq
        %v3234 = vshrl.u32 %v3233, 7
        %v3235 = vsub.s32 %v2061, %v3234
        %v3236 = vrot.slane %v2888, %v3235
        %v3237 = vlaneseq
        %v3238 = vshrl.u32 %v3237, 7
        %v3239 = vsub.s32 %v2066, %v3238
        %v3240 = vrot.slane %v2891, %v3239
        %v3241 = vsel %vm2071, %v3240, %v3236
        %v3242 = vlaneseq
        %v3243 = vshrl.u32 %v3242, 7
        %v3244 = vsub.s32 %v2061, %v3243
        %v3245 = vrot.slane %v2894, %v3244
        %v3246 = vlaneseq
        %v3247 = vshrl.u32 %v3246, 7
        %v3248 = vsub.s32 %v2066, %v3247
        %v3249 = vrot.slane %v2897, %v3248
        %v3250 = vsel %vm2071, %v3249, %v3245
        %v3251 = vlaneseq
        %v3252 = vshrl.u32 %v3251, 7
        %v3253 = vsub.s32 %v2061, %v3252
        %v3254 = vrot.slane %v2900, %v3253
        %v3255 = vlaneseq
        %v3256 = vshrl.u32 %v3255, 7
        %v3257 = vsub.s32 %v2066, %v3256
        %v3258 = vrot.slane %v2903, %v3257
        %v3259 = vsel %vm2071, %v3258, %v3254
        %v3260 = vlaneseq
        %v3261 = vshrl.u32 %v3260, 7
        %v3262 = vsub.s32 %v2061, %v3261
        %v3263 = vrot.slane %v2906, %v3262
        %v3264 = vlaneseq
        %v3265 = vshrl.u32 %v3264, 7
        %v3266 = vsub.s32 %v2066, %v3265
        %v3267 = vrot.slane %v2909, %v3266
        %v3268 = vsel %vm2071, %v3267, %v3263
        %v3269 = vsel %vm2352, %v2998, %v2989
        %v3270 = vsel %vm2354, %v3007, %v3269
        %v3271 = vsel %vm2356, %v3016, %v3270
        %v3272 = vsel %vm2358, %v3025, %v3271
        %v3273 = vsel %vm2360, %v3034, %v3272
        %v3274 = vsel %vm2362, %v3043, %v3273
        %v3275 = vsel %vm2364, %v3052, %v3274
        %v3276 = vsel %vm2352, %v3070, %v3061
        %v3277 = vsel %vm2354, %v3079, %v3276
        %v3278 = vsel %vm2356, %v3088, %v3277
        %v3279 = vsel %vm2358, %v3097, %v3278
        %v3280 = vsel %vm2360, %v3106, %v3279
        %v3281 = vsel %vm2362, %v3115, %v3280
        %v3282 = vsel %vm2364, %v3124, %v3281
        %v3283 = vsel %vm2352, %v3142, %v3133
        %v3284 = vsel %vm2354, %v3151, %v3283
        %v3285 = vsel %vm2356, %v3160, %v3284
        %v3286 = vsel %vm2358, %v3169, %v3285
        %v3287 = vsel %vm2360, %v3178, %v3286
        %v3288 = vsel %vm2362, %v3187, %v3287
        %v3289 = vsel %vm2364, %v3196, %v3288
        %v3290 = vsel %vm2352, %v3214, %v3205
        %v3291 = vsel %vm2354, %v3223, %v3290
        %v3292 = vsel %vm2356, %v3232, %v3291
        %v3293 = vsel %vm2358, %v3241, %v3292
        %v3294 = vsel %vm2360, %v3250, %v3293
        %v3295 = vsel %vm2362, %v3259, %v3294
        %v3296 = vsel %vm2364, %v3268, %v3295
        %v3302 = vsel %vm1803, %v2911, 0
        %v3305 = vsel %vm1803, %v2913, 0
        %v3308 = vsel %vm1803, %v2916, 0
        %3310 = vmatprep.subr.bf16.mxu0 0
        %3311 = vmatpush1.bf16.xpose.msra.mxu0 %v3308
        %3312 = vmatprep.subr.bf16.mxu0 0
        %3313 = vmatpush1.bf16.xpose.msra.mxu0 0
        %3314 = vmatprep.subr.bf16.mxu0 0
        %3315 = vmatpush1.bf16.xpose.msra.mxu0 0
        %3316 = vmatprep.subr.bf16.mxu0 0
        %3317 = vmatpush1.bf16.xpose.msra.mxu0 0
        %3318 = vmatprep.subr.bf16.mxu0 0
        %3319 = vmatpush1.bf16.xpose.msra.mxu0 0
        %3320 = vmatprep.subr.bf16.mxu0 0
        %3321 = vmatpush1.bf16.xpose.msra.mxu0 0
        %3322 = vmatprep.subr.bf16.mxu0 0
        %3323 = vmatpush1.bf16.xpose.msra.mxu0 0
        %3324 = vmatprep.subr.bf16.mxu0 0
        %3325 = vmatpush1.bf16.xpose.msra.mxu0 0
        %3326 = vmatprep.subr.bf16.mxu0 0
        %3327 = vmatpush1.bf16.xpose.msra.mxu0 0
        %3328 = vmatprep.subr.bf16.mxu0 0
        %3329 = vmatpush1.bf16.xpose.msra.mxu0 0
        %3330 = vmatprep.subr.bf16.mxu0 0
        %3331 = vmatpush1.bf16.xpose.msra.mxu0 0
        %3332 = vmatprep.subr.bf16.mxu0 0
        %3333 = vmatpush1.bf16.xpose.msra.mxu0 0
        %3334 = vmatprep.subr.bf16.mxu0 0
        %3335 = vmatpush1.bf16.xpose.msra.mxu0 0
        %3336 = vmatprep.subr.bf16.mxu0 0
        %3337 = vmatpush1.bf16.xpose.msra.mxu0 0
        %3338 = vmatprep.subr.bf16.mxu0 0
        %3339 = vmatpush1.bf16.xpose.msra.mxu0 0
        %3340 = vmatprep.subr.bf16.mxu0 0
        %3341 = vmatpush1.bf16.xpose.msra.mxu0 0
        %3342 = vmatprep.mubr.bf16.mxu0 0
        %3343 = vmatmul.mubr.bf16.gmra.mrb[0].mxu0 %v3302
        %v3344 = vpop.f32.mrb[0].mxu0
        %v3345 = vadd.f32 %v3275, %v3344
        %v3346 = vpop.f32.mrb[0].mxu0
        %v3347 = vpop.f32.mrb[0].mxu0
        %v3348 = vadd.f32 %v3282, %v3347
        %v3349 = vpop.f32.mrb[0].mxu0
        %3350 = vmatprep.mubr.bf16.mxu0 0
        %3351 = vmatmul.mubr.bf16.gmra.mrb[0].mxu0 %v3305
        %v3352 = vpop.f32.mrb[0].mxu0
        %v3353 = vadd.f32 %v3289, %v3352
        %v3354 = vpop.f32.mrb[0].mxu0
        %v3355 = vpop.f32.mrb[0].mxu0
        %v3356 = vadd.f32 %v3296, %v3355
        %v3357 = vpop.f32.mrb[0].mxu0
        %3358 = vdwg.mxu0
        %v3359 = vsel %vm2449, %v3345, -inf
        %3360 = vmax.xlane.f32.xlu0 %v3359
        %v3361 = vpop.xlane.xlu0 %3360
        %v3362 = vsel %vm2449, %v3348, -inf
        %3363 = vmax.xlane.f32.xlu0 %v3362
        %v3364 = vpop.xlane.xlu0 %3363
        %v3365 = vsel %vm2449, %v3353, -inf
        %3366 = vmax.xlane.f32.xlu0 %v3365
        %v3367 = vpop.xlane.xlu0 %3366
        %v3368 = vsel %vm2449, %v3356, -inf
        %3369 = vmax.xlane.f32.xlu0 %v3368
        %v3370 = vpop.xlane.xlu0 %3369
        %3371 = vrot.lane.b32.xlu0 %v1739, 112
        %v3372 = vpop.permute.xlu0 %3371
        %3373 = vrot.lane.b32.xlu0 %v1740, 112
        %v3374 = vpop.permute.xlu0 %3373
        %3375 = vrot.lane.b32.xlu0 %v1741, 112
        %v3376 = vpop.permute.xlu0 %3375
        %3377 = vrot.lane.b32.xlu0 %v1742, 112
        %v3378 = vpop.permute.xlu0 %3377
        %3379 = vrot.lane.b32.xlu0 %v1743, 112
        %v3380 = vpop.permute.xlu0 %3379
        %3381 = vrot.lane.b32.xlu0 %v1744, 112
        %v3382 = vpop.permute.xlu0 %3381
        %3383 = vrot.lane.b32.xlu0 %v1745, 112
        %v3384 = vpop.permute.xlu0 %3383
        %3385 = vrot.lane.b32.xlu0 %v1746, 112
        %v3386 = vpop.permute.xlu0 %3385
        %3387 = vrot.lane.b32.xlu0 %v1747, 112
        %v3388 = vpop.permute.xlu0 %3387
        %3389 = vrot.lane.b32.xlu0 %v1748, 112
        %v3390 = vpop.permute.xlu0 %3389
        %3391 = vrot.lane.b32.xlu0 %v1749, 112
        %v3392 = vpop.permute.xlu0 %3391
        %3393 = vrot.lane.b32.xlu0 %v1750, 112
        %v3394 = vpop.permute.xlu0 %3393
        %3395 = vrot.lane.b32.xlu0 %v1751, 112
        %v3396 = vpop.permute.xlu0 %3395
        %3397 = vrot.lane.b32.xlu0 %v1752, 112
        %v3398 = vpop.permute.xlu0 %3397
        %3399 = vrot.lane.b32.xlu0 %v1753, 112
        %v3400 = vpop.permute.xlu0 %3399
        %3401 = vrot.lane.b32.xlu0 %v1754, 112
        %v3402 = vpop.permute.xlu0 %3401
        %3403 = vrot.lane.b32.xlu0 %v1755, 112
        %v3404 = vpop.permute.xlu0 %3403
        %3405 = vrot.lane.b32.xlu0 %v1756, 112
        %v3406 = vpop.permute.xlu0 %3405
        %3407 = vrot.lane.b32.xlu0 %v1757, 112
        %v3408 = vpop.permute.xlu0 %3407
        %3409 = vrot.lane.b32.xlu0 %v1758, 112
        %v3410 = vpop.permute.xlu0 %3409
        %3411 = vrot.lane.b32.xlu0 %v1759, 112
        %v3412 = vpop.permute.xlu0 %3411
        %3413 = vrot.lane.b32.xlu0 %v1760, 112
        %v3414 = vpop.permute.xlu0 %3413
        %3415 = vrot.lane.b32.xlu0 %v1761, 112
        %v3416 = vpop.permute.xlu0 %3415
        %3417 = vrot.lane.b32.xlu0 %v1762, 112
        %v3418 = vpop.permute.xlu0 %3417
        %3419 = vrot.lane.b32.xlu0 %v1763, 112
        %v3420 = vpop.permute.xlu0 %3419
        %3421 = vrot.lane.b32.xlu0 %v1764, 112
        %v3422 = vpop.permute.xlu0 %3421
        %3423 = vrot.lane.b32.xlu0 %v1765, 112
        %v3424 = vpop.permute.xlu0 %3423
        %3425 = vrot.lane.b32.xlu0 %v1766, 112
        %v3426 = vpop.permute.xlu0 %3425
        %3427 = vrot.lane.b32.xlu0 %v1767, 112
        %v3428 = vpop.permute.xlu0 %3427
        %3429 = vrot.lane.b32.xlu0 %v1768, 112
        %v3430 = vpop.permute.xlu0 %3429
        %3431 = vrot.lane.b32.xlu0 %v1769, 112
        %v3432 = vpop.permute.xlu0 %3431
        %3433 = vrot.lane.b32.xlu0 %v1770, 112
        %v3434 = vpop.permute.xlu0 %3433
        %3435 = vrot.lane.b32.xlu0 %v1771, 112
        %v3436 = vpop.permute.xlu0 %3435
        %3437 = vrot.lane.b32.xlu0 %v1772, 112
        %v3438 = vpop.permute.xlu0 %3437
        %3439 = vrot.lane.b32.xlu0 %v1773, 112
        %v3440 = vpop.permute.xlu0 %3439
        %3441 = vrot.lane.b32.xlu0 %v1774, 112
        %v3442 = vpop.permute.xlu0 %3441
        %3443 = vrot.lane.b32.xlu0 %v1775, 112
        %v3444 = vpop.permute.xlu0 %3443
        %3445 = vrot.lane.b32.xlu0 %v1776, 112
        %v3446 = vpop.permute.xlu0 %3445
        %3447 = vrot.lane.b32.xlu0 %v1777, 112
        %v3448 = vpop.permute.xlu0 %3447
        %3449 = vrot.lane.b32.xlu0 %v1778, 112
        %v3450 = vpop.permute.xlu0 %3449
        %3451 = vrot.lane.b32.xlu0 %v1779, 112
        %v3452 = vpop.permute.xlu0 %3451
        %3453 = vrot.lane.b32.xlu0 %v1780, 112
        %v3454 = vpop.permute.xlu0 %3453
        %3455 = vrot.lane.b32.xlu0 %v1781, 112
        %v3456 = vpop.permute.xlu0 %3455
        %3457 = vrot.lane.b32.xlu0 %v1782, 112
        %v3458 = vpop.permute.xlu0 %3457
        %3459 = vrot.lane.b32.xlu0 %v1783, 112
        %v3460 = vpop.permute.xlu0 %3459
        %3461 = vrot.lane.b32.xlu0 %v1784, 112
        %v3462 = vpop.permute.xlu0 %3461
        %3463 = vrot.lane.b32.xlu0 %v1785, 112
        %v3464 = vpop.permute.xlu0 %3463
        %3465 = vrot.lane.b32.xlu0 %v1786, 112
        %v3466 = vpop.permute.xlu0 %3465
        %3467 = vrot.lane.b32.xlu0 %v1787, 112
        %v3468 = vpop.permute.xlu0 %3467
        %3469 = vrot.lane.b32.xlu0 %v1788, 112
        %v3470 = vpop.permute.xlu0 %3469
        %3471 = vrot.lane.b32.xlu0 %v1789, 112
        %v3472 = vpop.permute.xlu0 %3471
        %3473 = vrot.lane.b32.xlu0 %v1790, 112
        %v3474 = vpop.permute.xlu0 %3473
        %3475 = vrot.lane.b32.xlu0 %v1791, 112
        %v3476 = vpop.permute.xlu0 %3475
        %3477 = vrot.lane.b32.xlu0 %v1792, 112
        %v3478 = vpop.permute.xlu0 %3477
        %3479 = vrot.lane.b32.xlu0 %v1793, 112
        %v3480 = vpop.permute.xlu0 %3479
        %3481 = vrot.lane.b32.xlu0 %v1794, 112
        %v3482 = vpop.permute.xlu0 %3481
        %3483 = vrot.lane.b32.xlu0 %v1795, 112
        %v3484 = vpop.permute.xlu0 %3483
        %3485 = vrot.lane.b32.xlu0 %v1796, 112
        %v3486 = vpop.permute.xlu0 %3485
        %3487 = vrot.lane.b32.xlu0 %v1797, 112
        %v3488 = vpop.permute.xlu0 %3487
        %3489 = vrot.lane.b32.xlu0 %v1798, 112
        %v3490 = vpop.permute.xlu0 %3489
        %3491 = vrot.lane.b32.xlu0 %v1799, 112
        %v3492 = vpop.permute.xlu0 %3491
        %3493 = vrot.lane.b32.xlu0 %v1800, 112
        %v3494 = vpop.permute.xlu0 %3493
        %3495 = vrot.lane.b32.xlu0 %v1801, 112
        %v3496 = vpop.permute.xlu0 %3495
        %3497 = vrot.lane.b32.xlu0 %v1802, 112
        %v3498 = vpop.permute.xlu0 %3497
        %v3563 = vsel %vm1803, %v3372, 0.0
        %3564 = vadd.xlane.f32.xlu0 %v3563
        %v3565 = vpop.xlane.xlu0 %3564
        %v3566 = vsel %vm1803, %v3374, 0.0
        %3567 = vadd.xlane.f32.xlu0 %v3566
        %v3568 = vpop.xlane.xlu0 %3567
        %v3569 = vsel %vm1803, %v3376, 0.0
        %3570 = vadd.xlane.f32.xlu0 %v3569
        %v3571 = vpop.xlane.xlu0 %3570
        %v3572 = vsel %vm1803, %v3378, 0.0
        %3573 = vadd.xlane.f32.xlu0 %v3572
        %v3574 = vpop.xlane.xlu0 %3573
        %v3575 = vsel %vm1803, %v3380, 0.0
        %3576 = vadd.xlane.f32.xlu0 %v3575
        %v3577 = vpop.xlane.xlu0 %3576
        %v3578 = vsel %vm1803, %v3382, 0.0
        %3579 = vadd.xlane.f32.xlu0 %v3578
        %v3580 = vpop.xlane.xlu0 %3579
        %v3581 = vsel %vm1803, %v3384, 0.0
        %3582 = vadd.xlane.f32.xlu0 %v3581
        %v3583 = vpop.xlane.xlu0 %3582
        %v3584 = vsel %vm1803, %v3386, 0.0
        %3585 = vadd.xlane.f32.xlu0 %v3584
        %v3586 = vpop.xlane.xlu0 %3585
        %v3587 = vsel %vm1803, %v3388, 0.0
        %3588 = vadd.xlane.f32.xlu0 %v3587
        %v3589 = vpop.xlane.xlu0 %3588
        %v3590 = vsel %vm1803, %v3390, 0.0
        %3591 = vadd.xlane.f32.xlu0 %v3590
        %v3592 = vpop.xlane.xlu0 %3591
        %v3593 = vsel %vm1803, %v3392, 0.0
        %3594 = vadd.xlane.f32.xlu0 %v3593
        %v3595 = vpop.xlane.xlu0 %3594
        %v3596 = vsel %vm1803, %v3394, 0.0
        %3597 = vadd.xlane.f32.xlu0 %v3596
        %v3598 = vpop.xlane.xlu0 %3597
        %v3599 = vsel %vm1803, %v3396, 0.0
        %3600 = vadd.xlane.f32.xlu0 %v3599
        %v3601 = vpop.xlane.xlu0 %3600
        %v3602 = vsel %vm1803, %v3398, 0.0
        %3603 = vadd.xlane.f32.xlu0 %v3602
        %v3604 = vpop.xlane.xlu0 %3603
        %v3605 = vsel %vm1803, %v3400, 0.0
        %3606 = vadd.xlane.f32.xlu0 %v3605
        %v3607 = vpop.xlane.xlu0 %3606
        %v3608 = vsel %vm1803, %v3402, 0.0
        %3609 = vadd.xlane.f32.xlu0 %v3608
        %v3610 = vpop.xlane.xlu0 %3609
        %v3611 = vsel %vm1803, %v3404, 0.0
        %3612 = vadd.xlane.f32.xlu0 %v3611
        %v3613 = vpop.xlane.xlu0 %3612
        %v3614 = vsel %vm1803, %v3406, 0.0
        %3615 = vadd.xlane.f32.xlu0 %v3614
        %v3616 = vpop.xlane.xlu0 %3615
        %v3617 = vsel %vm1803, %v3408, 0.0
        %3618 = vadd.xlane.f32.xlu0 %v3617
        %v3619 = vpop.xlane.xlu0 %3618
        %v3620 = vsel %vm1803, %v3410, 0.0
        %3621 = vadd.xlane.f32.xlu0 %v3620
        %v3622 = vpop.xlane.xlu0 %3621
        %v3623 = vsel %vm1803, %v3412, 0.0
        %3624 = vadd.xlane.f32.xlu0 %v3623
        %v3625 = vpop.xlane.xlu0 %3624
        %v3626 = vsel %vm1803, %v3414, 0.0
        %3627 = vadd.xlane.f32.xlu0 %v3626
        %v3628 = vpop.xlane.xlu0 %3627
        %v3629 = vsel %vm1803, %v3416, 0.0
        %3630 = vadd.xlane.f32.xlu0 %v3629
        %v3631 = vpop.xlane.xlu0 %3630
        %v3632 = vsel %vm1803, %v3418, 0.0
        %3633 = vadd.xlane.f32.xlu0 %v3632
        %v3634 = vpop.xlane.xlu0 %3633
        %v3635 = vsel %vm1803, %v3420, 0.0
        %3636 = vadd.xlane.f32.xlu0 %v3635
        %v3637 = vpop.xlane.xlu0 %3636
        %v3638 = vsel %vm1803, %v3422, 0.0
        %3639 = vadd.xlane.f32.xlu0 %v3638
        %v3640 = vpop.xlane.xlu0 %3639
        %v3641 = vsel %vm1803, %v3424, 0.0
        %3642 = vadd.xlane.f32.xlu0 %v3641
        %v3643 = vpop.xlane.xlu0 %3642
        %v3644 = vsel %vm1803, %v3426, 0.0
        %3645 = vadd.xlane.f32.xlu0 %v3644
        %v3646 = vpop.xlane.xlu0 %3645
        %v3647 = vsel %vm1803, %v3428, 0.0
        %3648 = vadd.xlane.f32.xlu0 %v3647
        %v3649 = vpop.xlane.xlu0 %3648
        %v3650 = vsel %vm1803, %v3430, 0.0
        %3651 = vadd.xlane.f32.xlu0 %v3650
        %v3652 = vpop.xlane.xlu0 %3651
        %v3653 = vsel %vm1803, %v3432, 0.0
        %3654 = vadd.xlane.f32.xlu0 %v3653
        %v3655 = vpop.xlane.xlu0 %3654
        %v3656 = vsel %vm1803, %v3434, 0.0
        %3657 = vadd.xlane.f32.xlu0 %v3656
        %v3658 = vpop.xlane.xlu0 %3657
        %v3659 = vsel %vm1803, %v3436, 0.0
        %3660 = vadd.xlane.f32.xlu0 %v3659
        %v3661 = vpop.xlane.xlu0 %3660
        %v3662 = vsel %vm1803, %v3438, 0.0
        %3663 = vadd.xlane.f32.xlu0 %v3662
        %v3664 = vpop.xlane.xlu0 %3663
        %v3665 = vsel %vm1803, %v3440, 0.0
        %3666 = vadd.xlane.f32.xlu0 %v3665
        %v3667 = vpop.xlane.xlu0 %3666
        %v3668 = vsel %vm1803, %v3442, 0.0
        %3669 = vadd.xlane.f32.xlu0 %v3668
        %v3670 = vpop.xlane.xlu0 %3669
        %v3671 = vsel %vm1803, %v3444, 0.0
        %3672 = vadd.xlane.f32.xlu0 %v3671
        %v3673 = vpop.xlane.xlu0 %3672
        %v3674 = vsel %vm1803, %v3446, 0.0
        %3675 = vadd.xlane.f32.xlu0 %v3674
        %v3676 = vpop.xlane.xlu0 %3675
        %v3677 = vsel %vm1803, %v3448, 0.0
        %3678 = vadd.xlane.f32.xlu0 %v3677
        %v3679 = vpop.xlane.xlu0 %3678
        %v3680 = vsel %vm1803, %v3450, 0.0
        %3681 = vadd.xlane.f32.xlu0 %v3680
        %v3682 = vpop.xlane.xlu0 %3681
        %v3683 = vsel %vm1803, %v3452, 0.0
        %3684 = vadd.xlane.f32.xlu0 %v3683
        %v3685 = vpop.xlane.xlu0 %3684
        %v3686 = vsel %vm1803, %v3454, 0.0
        %3687 = vadd.xlane.f32.xlu0 %v3686
        %v3688 = vpop.xlane.xlu0 %3687
        %v3689 = vsel %vm1803, %v3456, 0.0
        %3690 = vadd.xlane.f32.xlu0 %v3689
        %v3691 = vpop.xlane.xlu0 %3690
        %v3692 = vsel %vm1803, %v3458, 0.0
        %3693 = vadd.xlane.f32.xlu0 %v3692
        %v3694 = vpop.xlane.xlu0 %3693
        %v3695 = vsel %vm1803, %v3460, 0.0
        %3696 = vadd.xlane.f32.xlu0 %v3695
        %v3697 = vpop.xlane.xlu0 %3696
        %v3698 = vsel %vm1803, %v3462, 0.0
        %3699 = vadd.xlane.f32.xlu0 %v3698
        %v3700 = vpop.xlane.xlu0 %3699
        %v3701 = vsel %vm1803, %v3464, 0.0
        %3702 = vadd.xlane.f32.xlu0 %v3701
        %v3703 = vpop.xlane.xlu0 %3702
        %v3704 = vsel %vm1803, %v3466, 0.0
        %3705 = vadd.xlane.f32.xlu0 %v3704
        %v3706 = vpop.xlane.xlu0 %3705
        %v3707 = vsel %vm1803, %v3468, 0.0
        %3708 = vadd.xlane.f32.xlu0 %v3707
        %v3709 = vpop.xlane.xlu0 %3708
        %v3710 = vsel %vm1803, %v3470, 0.0
        %3711 = vadd.xlane.f32.xlu0 %v3710
        %v3712 = vpop.xlane.xlu0 %3711
        %v3713 = vsel %vm1803, %v3472, 0.0
        %3714 = vadd.xlane.f32.xlu0 %v3713
        %v3715 = vpop.xlane.xlu0 %3714
        %v3716 = vsel %vm1803, %v3474, 0.0
        %3717 = vadd.xlane.f32.xlu0 %v3716
        %v3718 = vpop.xlane.xlu0 %3717
        %v3719 = vsel %vm1803, %v3476, 0.0
        %3720 = vadd.xlane.f32.xlu0 %v3719
        %v3721 = vpop.xlane.xlu0 %3720
        %v3722 = vsel %vm1803, %v3478, 0.0
        %3723 = vadd.xlane.f32.xlu0 %v3722
        %v3724 = vpop.xlane.xlu0 %3723
        %v3725 = vsel %vm1803, %v3480, 0.0
        %3726 = vadd.xlane.f32.xlu0 %v3725
        %v3727 = vpop.xlane.xlu0 %3726
        %v3728 = vsel %vm1803, %v3482, 0.0
        %3729 = vadd.xlane.f32.xlu0 %v3728
        %v3730 = vpop.xlane.xlu0 %3729
        %v3731 = vsel %vm1803, %v3484, 0.0
        %3732 = vadd.xlane.f32.xlu0 %v3731
        %v3733 = vpop.xlane.xlu0 %3732
        %v3734 = vsel %vm1803, %v3486, 0.0
        %3735 = vadd.xlane.f32.xlu0 %v3734
        %v3736 = vpop.xlane.xlu0 %3735
        %v3737 = vsel %vm1803, %v3488, 0.0
        %3738 = vadd.xlane.f32.xlu0 %v3737
        %v3739 = vpop.xlane.xlu0 %3738
        %v3740 = vsel %vm1803, %v3490, 0.0
        %3741 = vadd.xlane.f32.xlu0 %v3740
        %v3742 = vpop.xlane.xlu0 %3741
        %v3743 = vsel %vm1803, %v3492, 0.0
        %3744 = vadd.xlane.f32.xlu0 %v3743
        %v3745 = vpop.xlane.xlu0 %3744
        %v3746 = vsel %vm1803, %v3494, 0.0
        %3747 = vadd.xlane.f32.xlu0 %v3746
        %v3748 = vpop.xlane.xlu0 %3747
        %v3749 = vsel %vm1803, %v3496, 0.0
        %3750 = vadd.xlane.f32.xlu0 %v3749
        %v3751 = vpop.xlane.xlu0 %3750
        %v3752 = vsel %vm1803, %v3498, 0.0
        %3753 = vadd.xlane.f32.xlu0 %v3752
        %v3754 = vpop.xlane.xlu0 %3753
        %3755 = vrot.lane.b32.xlu0 %v957, 112
        %v3756 = vpop.permute.xlu0 %3755
        %3757 = vrot.lane.b32.xlu0 %v958, 112
        %v3758 = vpop.permute.xlu0 %3757
        %3759 = vrot.lane.b32.xlu0 %v963, 112
        %v3760 = vpop.permute.xlu0 %3759
        %v3825 = vlaneseq
        %v3826 = vshrl.u32 %v3825, 7
        %v3827 = vsub.s32 %v2061, %v3826
        %v3828 = vrot.slane %v3565, %v3827
        %v3829 = vlaneseq
        %v3830 = vshrl.u32 %v3829, 7
        %v3831 = vsub.s32 %v2066, %v3830
        %v3832 = vrot.slane %v3568, %v3831
        %v3833 = vsel %vm2071, %v3832, %v3828
        %v3834 = vlaneseq
        %v3835 = vshrl.u32 %v3834, 7
        %v3836 = vsub.s32 %v2061, %v3835
        %v3837 = vrot.slane %v3571, %v3836
        %v3838 = vlaneseq
        %v3839 = vshrl.u32 %v3838, 7
        %v3840 = vsub.s32 %v2066, %v3839
        %v3841 = vrot.slane %v3574, %v3840
        %v3842 = vsel %vm2071, %v3841, %v3837
        %v3843 = vlaneseq
        %v3844 = vshrl.u32 %v3843, 7
        %v3845 = vsub.s32 %v2061, %v3844
        %v3846 = vrot.slane %v3577, %v3845
        %v3847 = vlaneseq
        %v3848 = vshrl.u32 %v3847, 7
        %v3849 = vsub.s32 %v2066, %v3848
        %v3850 = vrot.slane %v3580, %v3849
        %v3851 = vsel %vm2071, %v3850, %v3846
        %v3852 = vlaneseq
        %v3853 = vshrl.u32 %v3852, 7
        %v3854 = vsub.s32 %v2061, %v3853
        %v3855 = vrot.slane %v3583, %v3854
        %v3856 = vlaneseq
        %v3857 = vshrl.u32 %v3856, 7
        %v3858 = vsub.s32 %v2066, %v3857
        %v3859 = vrot.slane %v3586, %v3858
        %v3860 = vsel %vm2071, %v3859, %v3855
        %v3861 = vlaneseq
        %v3862 = vshrl.u32 %v3861, 7
        %v3863 = vsub.s32 %v2061, %v3862
        %v3864 = vrot.slane %v3589, %v3863
        %v3865 = vlaneseq
        %v3866 = vshrl.u32 %v3865, 7
        %v3867 = vsub.s32 %v2066, %v3866
        %v3868 = vrot.slane %v3592, %v3867
        %v3869 = vsel %vm2071, %v3868, %v3864
        %v3870 = vlaneseq
        %v3871 = vshrl.u32 %v3870, 7
        %v3872 = vsub.s32 %v2061, %v3871
        %v3873 = vrot.slane %v3595, %v3872
        %v3874 = vlaneseq
        %v3875 = vshrl.u32 %v3874, 7
        %v3876 = vsub.s32 %v2066, %v3875
        %v3877 = vrot.slane %v3598, %v3876
        %v3878 = vsel %vm2071, %v3877, %v3873
        %v3879 = vlaneseq
        %v3880 = vshrl.u32 %v3879, 7
        %v3881 = vsub.s32 %v2061, %v3880
        %v3882 = vrot.slane %v3601, %v3881
        %v3883 = vlaneseq
        %v3884 = vshrl.u32 %v3883, 7
        %v3885 = vsub.s32 %v2066, %v3884
        %v3886 = vrot.slane %v3604, %v3885
        %v3887 = vsel %vm2071, %v3886, %v3882
        %v3888 = vlaneseq
        %v3889 = vshrl.u32 %v3888, 7
        %v3890 = vsub.s32 %v2061, %v3889
        %v3891 = vrot.slane %v3607, %v3890
        %v3892 = vlaneseq
        %v3893 = vshrl.u32 %v3892, 7
        %v3894 = vsub.s32 %v2066, %v3893
        %v3895 = vrot.slane %v3610, %v3894
        %v3896 = vsel %vm2071, %v3895, %v3891
        %v3897 = vlaneseq
        %v3898 = vshrl.u32 %v3897, 7
        %v3899 = vsub.s32 %v2061, %v3898
        %v3900 = vrot.slane %v3613, %v3899
        %v3901 = vlaneseq
        %v3902 = vshrl.u32 %v3901, 7
        %v3903 = vsub.s32 %v2066, %v3902
        %v3904 = vrot.slane %v3616, %v3903
        %v3905 = vsel %vm2071, %v3904, %v3900
        %v3906 = vlaneseq
        %v3907 = vshrl.u32 %v3906, 7
        %v3908 = vsub.s32 %v2061, %v3907
        %v3909 = vrot.slane %v3619, %v3908
        %v3910 = vlaneseq
        %v3911 = vshrl.u32 %v3910, 7
        %v3912 = vsub.s32 %v2066, %v3911
        %v3913 = vrot.slane %v3622, %v3912
        %v3914 = vsel %vm2071, %v3913, %v3909
        %v3915 = vlaneseq
        %v3916 = vshrl.u32 %v3915, 7
        %v3917 = vsub.s32 %v2061, %v3916
        %v3918 = vrot.slane %v3625, %v3917
        %v3919 = vlaneseq
        %v3920 = vshrl.u32 %v3919, 7
        %v3921 = vsub.s32 %v2066, %v3920
        %v3922 = vrot.slane %v3628, %v3921
        %v3923 = vsel %vm2071, %v3922, %v3918
        %v3924 = vlaneseq
        %v3925 = vshrl.u32 %v3924, 7
        %v3926 = vsub.s32 %v2061, %v3925
        %v3927 = vrot.slane %v3631, %v3926
        %v3928 = vlaneseq
        %v3929 = vshrl.u32 %v3928, 7
        %v3930 = vsub.s32 %v2066, %v3929
        %v3931 = vrot.slane %v3634, %v3930
        %v3932 = vsel %vm2071, %v3931, %v3927
        %v3933 = vlaneseq
        %v3934 = vshrl.u32 %v3933, 7
        %v3935 = vsub.s32 %v2061, %v3934
        %v3936 = vrot.slane %v3637, %v3935
        %v3937 = vlaneseq
        %v3938 = vshrl.u32 %v3937, 7
        %v3939 = vsub.s32 %v2066, %v3938
        %v3940 = vrot.slane %v3640, %v3939
        %v3941 = vsel %vm2071, %v3940, %v3936
        %v3942 = vlaneseq
        %v3943 = vshrl.u32 %v3942, 7
        %v3944 = vsub.s32 %v2061, %v3943
        %v3945 = vrot.slane %v3643, %v3944
        %v3946 = vlaneseq
        %v3947 = vshrl.u32 %v3946, 7
        %v3948 = vsub.s32 %v2066, %v3947
        %v3949 = vrot.slane %v3646, %v3948
        %v3950 = vsel %vm2071, %v3949, %v3945
        %v3951 = vlaneseq
        %v3952 = vshrl.u32 %v3951, 7
        %v3953 = vsub.s32 %v2061, %v3952
        %v3954 = vrot.slane %v3649, %v3953
        %v3955 = vlaneseq
        %v3956 = vshrl.u32 %v3955, 7
        %v3957 = vsub.s32 %v2066, %v3956
        %v3958 = vrot.slane %v3652, %v3957
        %v3959 = vsel %vm2071, %v3958, %v3954
        %v3960 = vlaneseq
        %v3961 = vshrl.u32 %v3960, 7
        %v3962 = vsub.s32 %v2061, %v3961
        %v3963 = vrot.slane %v3655, %v3962
        %v3964 = vlaneseq
        %v3965 = vshrl.u32 %v3964, 7
        %v3966 = vsub.s32 %v2066, %v3965
        %v3967 = vrot.slane %v3658, %v3966
        %v3968 = vsel %vm2071, %v3967, %v3963
        %v3969 = vlaneseq
        %v3970 = vshrl.u32 %v3969, 7
        %v3971 = vsub.s32 %v2061, %v3970
        %v3972 = vrot.slane %v3661, %v3971
        %v3973 = vlaneseq
        %v3974 = vshrl.u32 %v3973, 7
        %v3975 = vsub.s32 %v2066, %v3974
        %v3976 = vrot.slane %v3664, %v3975
        %v3977 = vsel %vm2071, %v3976, %v3972
        %v3978 = vlaneseq
        %v3979 = vshrl.u32 %v3978, 7
        %v3980 = vsub.s32 %v2061, %v3979
        %v3981 = vrot.slane %v3667, %v3980
        %v3982 = vlaneseq
        %v3983 = vshrl.u32 %v3982, 7
        %v3984 = vsub.s32 %v2066, %v3983
        %v3985 = vrot.slane %v3670, %v3984
        %v3986 = vsel %vm2071, %v3985, %v3981
        %v3987 = vlaneseq
        %v3988 = vshrl.u32 %v3987, 7
        %v3989 = vsub.s32 %v2061, %v3988
        %v3990 = vrot.slane %v3673, %v3989
        %v3991 = vlaneseq
        %v3992 = vshrl.u32 %v3991, 7
        %v3993 = vsub.s32 %v2066, %v3992
        %v3994 = vrot.slane %v3676, %v3993
        %v3995 = vsel %vm2071, %v3994, %v3990
        %v3996 = vlaneseq
        %v3997 = vshrl.u32 %v3996, 7
        %v3998 = vsub.s32 %v2061, %v3997
        %v3999 = vrot.slane %v3679, %v3998
        %v4000 = vlaneseq
        %v4001 = vshrl.u32 %v4000, 7
        %v4002 = vsub.s32 %v2066, %v4001
        %v4003 = vrot.slane %v3682, %v4002
        %v4004 = vsel %vm2071, %v4003, %v3999
        %v4005 = vlaneseq
        %v4006 = vshrl.u32 %v4005, 7
        %v4007 = vsub.s32 %v2061, %v4006
        %v4008 = vrot.slane %v3685, %v4007
        %v4009 = vlaneseq
        %v4010 = vshrl.u32 %v4009, 7
        %v4011 = vsub.s32 %v2066, %v4010
        %v4012 = vrot.slane %v3688, %v4011
        %v4013 = vsel %vm2071, %v4012, %v4008
        %v4014 = vlaneseq
        %v4015 = vshrl.u32 %v4014, 7
        %v4016 = vsub.s32 %v2061, %v4015
        %v4017 = vrot.slane %v3691, %v4016
        %v4018 = vlaneseq
        %v4019 = vshrl.u32 %v4018, 7
        %v4020 = vsub.s32 %v2066, %v4019
        %v4021 = vrot.slane %v3694, %v4020
        %v4022 = vsel %vm2071, %v4021, %v4017
        %v4023 = vlaneseq
        %v4024 = vshrl.u32 %v4023, 7
        %v4025 = vsub.s32 %v2061, %v4024
        %v4026 = vrot.slane %v3697, %v4025
        %v4027 = vlaneseq
        %v4028 = vshrl.u32 %v4027, 7
        %v4029 = vsub.s32 %v2066, %v4028
        %v4030 = vrot.slane %v3700, %v4029
        %v4031 = vsel %vm2071, %v4030, %v4026
        %v4032 = vlaneseq
        %v4033 = vshrl.u32 %v4032, 7
        %v4034 = vsub.s32 %v2061, %v4033
        %v4035 = vrot.slane %v3703, %v4034
        %v4036 = vlaneseq
        %v4037 = vshrl.u32 %v4036, 7
        %v4038 = vsub.s32 %v2066, %v4037
        %v4039 = vrot.slane %v3706, %v4038
        %v4040 = vsel %vm2071, %v4039, %v4035
        %v4041 = vlaneseq
        %v4042 = vshrl.u32 %v4041, 7
        %v4043 = vsub.s32 %v2061, %v4042
        %v4044 = vrot.slane %v3709, %v4043
        %v4045 = vlaneseq
        %v4046 = vshrl.u32 %v4045, 7
        %v4047 = vsub.s32 %v2066, %v4046
        %v4048 = vrot.slane %v3712, %v4047
        %v4049 = vsel %vm2071, %v4048, %v4044
        %v4050 = vlaneseq
        %v4051 = vshrl.u32 %v4050, 7
        %v4052 = vsub.s32 %v2061, %v4051
        %v4053 = vrot.slane %v3715, %v4052
        %v4054 = vlaneseq
        %v4055 = vshrl.u32 %v4054, 7
        %v4056 = vsub.s32 %v2066, %v4055
        %v4057 = vrot.slane %v3718, %v4056
        %v4058 = vsel %vm2071, %v4057, %v4053
        %v4059 = vlaneseq
        %v4060 = vshrl.u32 %v4059, 7
        %v4061 = vsub.s32 %v2061, %v4060
        %v4062 = vrot.slane %v3721, %v4061
        %v4063 = vlaneseq
        %v4064 = vshrl.u32 %v4063, 7
        %v4065 = vsub.s32 %v2066, %v4064
        %v4066 = vrot.slane %v3724, %v4065
        %v4067 = vsel %vm2071, %v4066, %v4062
        %v4068 = vlaneseq
        %v4069 = vshrl.u32 %v4068, 7
        %v4070 = vsub.s32 %v2061, %v4069
        %v4071 = vrot.slane %v3727, %v4070
        %v4072 = vlaneseq
        %v4073 = vshrl.u32 %v4072, 7
        %v4074 = vsub.s32 %v2066, %v4073
        %v4075 = vrot.slane %v3730, %v4074
        %v4076 = vsel %vm2071, %v4075, %v4071
        %v4077 = vlaneseq
        %v4078 = vshrl.u32 %v4077, 7
        %v4079 = vsub.s32 %v2061, %v4078
        %v4080 = vrot.slane %v3733, %v4079
        %v4081 = vlaneseq
        %v4082 = vshrl.u32 %v4081, 7
        %v4083 = vsub.s32 %v2066, %v4082
        %v4084 = vrot.slane %v3736, %v4083
        %v4085 = vsel %vm2071, %v4084, %v4080
        %v4086 = vlaneseq
        %v4087 = vshrl.u32 %v4086, 7
        %v4088 = vsub.s32 %v2061, %v4087
        %v4089 = vrot.slane %v3739, %v4088
        %v4090 = vlaneseq
        %v4091 = vshrl.u32 %v4090, 7
        %v4092 = vsub.s32 %v2066, %v4091
        %v4093 = vrot.slane %v3742, %v4092
        %v4094 = vsel %vm2071, %v4093, %v4089
        %v4095 = vlaneseq
        %v4096 = vshrl.u32 %v4095, 7
        %v4097 = vsub.s32 %v2061, %v4096
        %v4098 = vrot.slane %v3745, %v4097
        %v4099 = vlaneseq
        %v4100 = vshrl.u32 %v4099, 7
        %v4101 = vsub.s32 %v2066, %v4100
        %v4102 = vrot.slane %v3748, %v4101
        %v4103 = vsel %vm2071, %v4102, %v4098
        %v4104 = vlaneseq
        %v4105 = vshrl.u32 %v4104, 7
        %v4106 = vsub.s32 %v2061, %v4105
        %v4107 = vrot.slane %v3751, %v4106
        %v4108 = vlaneseq
        %v4109 = vshrl.u32 %v4108, 7
        %v4110 = vsub.s32 %v2066, %v4109
        %v4111 = vrot.slane %v3754, %v4110
        %v4112 = vsel %vm2071, %v4111, %v4107
        %v4113 = vsel %vm2352, %v3842, %v3833
        %v4114 = vsel %vm2354, %v3851, %v4113
        %v4115 = vsel %vm2356, %v3860, %v4114
        %v4116 = vsel %vm2358, %v3869, %v4115
        %v4117 = vsel %vm2360, %v3878, %v4116
        %v4118 = vsel %vm2362, %v3887, %v4117
        %v4119 = vsel %vm2364, %v3896, %v4118
        %v4120 = vsel %vm2352, %v3914, %v3905
        %v4121 = vsel %vm2354, %v3923, %v4120
        %v4122 = vsel %vm2356, %v3932, %v4121
        %v4123 = vsel %vm2358, %v3941, %v4122
        %v4124 = vsel %vm2360, %v3950, %v4123
        %v4125 = vsel %vm2362, %v3959, %v4124
        %v4126 = vsel %vm2364, %v3968, %v4125
        %v4127 = vsel %vm2352, %v3986, %v3977
        %v4128 = vsel %vm2354, %v3995, %v4127
        %v4129 = vsel %vm2356, %v4004, %v4128
        %v4130 = vsel %vm2358, %v4013, %v4129
        %v4131 = vsel %vm2360, %v4022, %v4130
        %v4132 = vsel %vm2362, %v4031, %v4131
        %v4133 = vsel %vm2364, %v4040, %v4132
        %v4134 = vsel %vm2352, %v4058, %v4049
        %v4135 = vsel %vm2354, %v4067, %v4134
        %v4136 = vsel %vm2356, %v4076, %v4135
        %v4137 = vsel %vm2358, %v4085, %v4136
        %v4138 = vsel %vm2360, %v4094, %v4137
        %v4139 = vsel %vm2362, %v4103, %v4138
        %v4140 = vsel %vm2364, %v4112, %v4139
        %v4146 = vsel %vm1803, %v3756, 0
        %v4149 = vsel %vm1803, %v3758, 0
        %v4152 = vsel %vm1803, %v3760, 0
        %4154 = vmatprep.subr.bf16.mxu0 0
        %4155 = vmatpush1.bf16.xpose.msra.mxu0 %v4152
        %4156 = vmatprep.subr.bf16.mxu0 0
        %4157 = vmatpush1.bf16.xpose.msra.mxu0 0
        %4158 = vmatprep.subr.bf16.mxu0 0
        %4159 = vmatpush1.bf16.xpose.msra.mxu0 0
        %4160 = vmatprep.subr.bf16.mxu0 0
        %4161 = vmatpush1.bf16.xpose.msra.mxu0 0
        %4162 = vmatprep.subr.bf16.mxu0 0
        %4163 = vmatpush1.bf16.xpose.msra.mxu0 0
        %4164 = vmatprep.subr.bf16.mxu0 0
        %4165 = vmatpush1.bf16.xpose.msra.mxu0 0
        %4166 = vmatprep.subr.bf16.mxu0 0
        %4167 = vmatpush1.bf16.xpose.msra.mxu0 0
        %4168 = vmatprep.subr.bf16.mxu0 0
        %4169 = vmatpush1.bf16.xpose.msra.mxu0 0
        %4170 = vmatprep.subr.bf16.mxu0 0
        %4171 = vmatpush1.bf16.xpose.msra.mxu0 0
        %4172 = vmatprep.subr.bf16.mxu0 0
        %4173 = vmatpush1.bf16.xpose.msra.mxu0 0
        %4174 = vmatprep.subr.bf16.mxu0 0
        %4175 = vmatpush1.bf16.xpose.msra.mxu0 0
        %4176 = vmatprep.subr.bf16.mxu0 0
        %4177 = vmatpush1.bf16.xpose.msra.mxu0 0
        %4178 = vmatprep.subr.bf16.mxu0 0
        %4179 = vmatpush1.bf16.xpose.msra.mxu0 0
        %4180 = vmatprep.subr.bf16.mxu0 0
        %4181 = vmatpush1.bf16.xpose.msra.mxu0 0
        %4182 = vmatprep.subr.bf16.mxu0 0
        %4183 = vmatpush1.bf16.xpose.msra.mxu0 0
        %4184 = vmatprep.subr.bf16.mxu0 0
        %4185 = vmatpush1.bf16.xpose.msra.mxu0 0
        %4186 = vmatprep.mubr.bf16.mxu0 0
        %4187 = vmatmul.mubr.bf16.gmra.mrb[0].mxu0 %v4146
        %v4188 = vpop.f32.mrb[0].mxu0
        %v4189 = vadd.f32 %v4119, %v4188
        %v4190 = vpop.f32.mrb[0].mxu0
        %v4191 = vpop.f32.mrb[0].mxu0
        %v4192 = vadd.f32 %v4126, %v4191
        %v4193 = vpop.f32.mrb[0].mxu0
        %4194 = vmatprep.mubr.bf16.mxu0 0
        %4195 = vmatmul.mubr.bf16.gmra.mrb[0].mxu0 %v4149
        %v4196 = vpop.f32.mrb[0].mxu0
        %v4197 = vadd.f32 %v4133, %v4196
        %v4198 = vpop.f32.mrb[0].mxu0
        %v4199 = vpop.f32.mrb[0].mxu0
        %v4200 = vadd.f32 %v4140, %v4199
        %v4201 = vpop.f32.mrb[0].mxu0
        %4202 = vdwg.mxu0
        %v4203 = vsel %vm2449, %v4189, -inf
        %4204 = vmax.xlane.f32.xlu0 %v4203
        %v4205 = vpop.xlane.xlu0 %4204
        %v4206 = vsel %vm2449, %v4192, -inf
        %4207 = vmax.xlane.f32.xlu0 %v4206
        %v4208 = vpop.xlane.xlu0 %4207
        %v4209 = vsel %vm2449, %v4197, -inf
        %4210 = vmax.xlane.f32.xlu0 %v4209
        %v4211 = vpop.xlane.xlu0 %4210
        %v4212 = vsel %vm2449, %v4200, -inf
        %4213 = vmax.xlane.f32.xlu0 %v4212
        %v4214 = vpop.xlane.xlu0 %4213
        %4215 = vrot.lane.b32.xlu0 %v1739, 104
        %v4216 = vpop.permute.xlu0 %4215
        %4217 = vrot.lane.b32.xlu0 %v1740, 104
        %v4218 = vpop.permute.xlu0 %4217
        %4219 = vrot.lane.b32.xlu0 %v1741, 104
        %v4220 = vpop.permute.xlu0 %4219
        %4221 = vrot.lane.b32.xlu0 %v1742, 104
        %v4222 = vpop.permute.xlu0 %4221
        %4223 = vrot.lane.b32.xlu0 %v1743, 104
        %v4224 = vpop.permute.xlu0 %4223
        %4225 = vrot.lane.b32.xlu0 %v1744, 104
        %v4226 = vpop.permute.xlu0 %4225
        %4227 = vrot.lane.b32.xlu0 %v1745, 104
        %v4228 = vpop.permute.xlu0 %4227
        %4229 = vrot.lane.b32.xlu0 %v1746, 104
        %v4230 = vpop.permute.xlu0 %4229
        %4231 = vrot.lane.b32.xlu0 %v1747, 104
        %v4232 = vpop.permute.xlu0 %4231
        %4233 = vrot.lane.b32.xlu0 %v1748, 104
        %v4234 = vpop.permute.xlu0 %4233
        %4235 = vrot.lane.b32.xlu0 %v1749, 104
        %v4236 = vpop.permute.xlu0 %4235
        %4237 = vrot.lane.b32.xlu0 %v1750, 104
        %v4238 = vpop.permute.xlu0 %4237
        %4239 = vrot.lane.b32.xlu0 %v1751, 104
        %v4240 = vpop.permute.xlu0 %4239
        %4241 = vrot.lane.b32.xlu0 %v1752, 104
        %v4242 = vpop.permute.xlu0 %4241
        %4243 = vrot.lane.b32.xlu0 %v1753, 104
        %v4244 = vpop.permute.xlu0 %4243
        %4245 = vrot.lane.b32.xlu0 %v1754, 104
        %v4246 = vpop.permute.xlu0 %4245
        %4247 = vrot.lane.b32.xlu0 %v1755, 104
        %v4248 = vpop.permute.xlu0 %4247
        %4249 = vrot.lane.b32.xlu0 %v1756, 104
        %v4250 = vpop.permute.xlu0 %4249
        %4251 = vrot.lane.b32.xlu0 %v1757, 104
        %v4252 = vpop.permute.xlu0 %4251
        %4253 = vrot.lane.b32.xlu0 %v1758, 104
        %v4254 = vpop.permute.xlu0 %4253
        %4255 = vrot.lane.b32.xlu0 %v1759, 104
        %v4256 = vpop.permute.xlu0 %4255
        %4257 = vrot.lane.b32.xlu0 %v1760, 104
        %v4258 = vpop.permute.xlu0 %4257
        %4259 = vrot.lane.b32.xlu0 %v1761, 104
        %v4260 = vpop.permute.xlu0 %4259
        %4261 = vrot.lane.b32.xlu0 %v1762, 104
        %v4262 = vpop.permute.xlu0 %4261
        %4263 = vrot.lane.b32.xlu0 %v1763, 104
        %v4264 = vpop.permute.xlu0 %4263
        %4265 = vrot.lane.b32.xlu0 %v1764, 104
        %v4266 = vpop.permute.xlu0 %4265
        %4267 = vrot.lane.b32.xlu0 %v1765, 104
        %v4268 = vpop.permute.xlu0 %4267
        %4269 = vrot.lane.b32.xlu0 %v1766, 104
        %v4270 = vpop.permute.xlu0 %4269
        %4271 = vrot.lane.b32.xlu0 %v1767, 104
        %v4272 = vpop.permute.xlu0 %4271
        %4273 = vrot.lane.b32.xlu0 %v1768, 104
        %v4274 = vpop.permute.xlu0 %4273
        %4275 = vrot.lane.b32.xlu0 %v1769, 104
        %v4276 = vpop.permute.xlu0 %4275
        %4277 = vrot.lane.b32.xlu0 %v1770, 104
        %v4278 = vpop.permute.xlu0 %4277
        %4279 = vrot.lane.b32.xlu0 %v1771, 104
        %v4280 = vpop.permute.xlu0 %4279
        %4281 = vrot.lane.b32.xlu0 %v1772, 104
        %v4282 = vpop.permute.xlu0 %4281
        %4283 = vrot.lane.b32.xlu0 %v1773, 104
        %v4284 = vpop.permute.xlu0 %4283
        %4285 = vrot.lane.b32.xlu0 %v1774, 104
        %v4286 = vpop.permute.xlu0 %4285
        %4287 = vrot.lane.b32.xlu0 %v1775, 104
        %v4288 = vpop.permute.xlu0 %4287
        %4289 = vrot.lane.b32.xlu0 %v1776, 104
        %v4290 = vpop.permute.xlu0 %4289
        %4291 = vrot.lane.b32.xlu0 %v1777, 104
        %v4292 = vpop.permute.xlu0 %4291
        %4293 = vrot.lane.b32.xlu0 %v1778, 104
        %v4294 = vpop.permute.xlu0 %4293
        %4295 = vrot.lane.b32.xlu0 %v1779, 104
        %v4296 = vpop.permute.xlu0 %4295
        %4297 = vrot.lane.b32.xlu0 %v1780, 104
        %v4298 = vpop.permute.xlu0 %4297
        %4299 = vrot.lane.b32.xlu0 %v1781, 104
        %v4300 = vpop.permute.xlu0 %4299
        %4301 = vrot.lane.b32.xlu0 %v1782, 104
        %v4302 = vpop.permute.xlu0 %4301
        %4303 = vrot.lane.b32.xlu0 %v1783, 104
        %v4304 = vpop.permute.xlu0 %4303
        %4305 = vrot.lane.b32.xlu0 %v1784, 104
        %v4306 = vpop.permute.xlu0 %4305
        %4307 = vrot.lane.b32.xlu0 %v1785, 104
        %v4308 = vpop.permute.xlu0 %4307
        %4309 = vrot.lane.b32.xlu0 %v1786, 104
        %v4310 = vpop.permute.xlu0 %4309
        %4311 = vrot.lane.b32.xlu0 %v1787, 104
        %v4312 = vpop.permute.xlu0 %4311
        %4313 = vrot.lane.b32.xlu0 %v1788, 104
        %v4314 = vpop.permute.xlu0 %4313
        %4315 = vrot.lane.b32.xlu0 %v1789, 104
        %v4316 = vpop.permute.xlu0 %4315
        %4317 = vrot.lane.b32.xlu0 %v1790, 104
        %v4318 = vpop.permute.xlu0 %4317
        %4319 = vrot.lane.b32.xlu0 %v1791, 104
        %v4320 = vpop.permute.xlu0 %4319
        %4321 = vrot.lane.b32.xlu0 %v1792, 104
        %v4322 = vpop.permute.xlu0 %4321
        %4323 = vrot.lane.b32.xlu0 %v1793, 104
        %v4324 = vpop.permute.xlu0 %4323
        %4325 = vrot.lane.b32.xlu0 %v1794, 104
        %v4326 = vpop.permute.xlu0 %4325
        %4327 = vrot.lane.b32.xlu0 %v1795, 104
        %v4328 = vpop.permute.xlu0 %4327
        %4329 = vrot.lane.b32.xlu0 %v1796, 104
        %v4330 = vpop.permute.xlu0 %4329
        %4331 = vrot.lane.b32.xlu0 %v1797, 104
        %v4332 = vpop.permute.xlu0 %4331
        %4333 = vrot.lane.b32.xlu0 %v1798, 104
        %v4334 = vpop.permute.xlu0 %4333
        %4335 = vrot.lane.b32.xlu0 %v1799, 104
        %v4336 = vpop.permute.xlu0 %4335
        %4337 = vrot.lane.b32.xlu0 %v1800, 104
        %v4338 = vpop.permute.xlu0 %4337
        %4339 = vrot.lane.b32.xlu0 %v1801, 104
        %v4340 = vpop.permute.xlu0 %4339
        %4341 = vrot.lane.b32.xlu0 %v1802, 104
        %v4342 = vpop.permute.xlu0 %4341
        %v4407 = vsel %vm1803, %v4216, 0.0
        %4408 = vadd.xlane.f32.xlu0 %v4407
        %v4409 = vpop.xlane.xlu0 %4408
        %v4410 = vsel %vm1803, %v4218, 0.0
        %4411 = vadd.xlane.f32.xlu0 %v4410
        %v4412 = vpop.xlane.xlu0 %4411
        %v4413 = vsel %vm1803, %v4220, 0.0
        %4414 = vadd.xlane.f32.xlu0 %v4413
        %v4415 = vpop.xlane.xlu0 %4414
        %v4416 = vsel %vm1803, %v4222, 0.0
        %4417 = vadd.xlane.f32.xlu0 %v4416
        %v4418 = vpop.xlane.xlu0 %4417
        %v4419 = vsel %vm1803, %v4224, 0.0
        %4420 = vadd.xlane.f32.xlu0 %v4419
        %v4421 = vpop.xlane.xlu0 %4420
        %v4422 = vsel %vm1803, %v4226, 0.0
        %4423 = vadd.xlane.f32.xlu0 %v4422
        %v4424 = vpop.xlane.xlu0 %4423
        %v4425 = vsel %vm1803, %v4228, 0.0
        %4426 = vadd.xlane.f32.xlu0 %v4425
        %v4427 = vpop.xlane.xlu0 %4426
        %v4428 = vsel %vm1803, %v4230, 0.0
        %4429 = vadd.xlane.f32.xlu0 %v4428
        %v4430 = vpop.xlane.xlu0 %4429
        %v4431 = vsel %vm1803, %v4232, 0.0
        %4432 = vadd.xlane.f32.xlu0 %v4431
        %v4433 = vpop.xlane.xlu0 %4432
        %v4434 = vsel %vm1803, %v4234, 0.0
        %4435 = vadd.xlane.f32.xlu0 %v4434
        %v4436 = vpop.xlane.xlu0 %4435
        %v4437 = vsel %vm1803, %v4236, 0.0
        %4438 = vadd.xlane.f32.xlu0 %v4437
        %v4439 = vpop.xlane.xlu0 %4438
        %v4440 = vsel %vm1803, %v4238, 0.0
        %4441 = vadd.xlane.f32.xlu0 %v4440
        %v4442 = vpop.xlane.xlu0 %4441
        %v4443 = vsel %vm1803, %v4240, 0.0
        %4444 = vadd.xlane.f32.xlu0 %v4443
        %v4445 = vpop.xlane.xlu0 %4444
        %v4446 = vsel %vm1803, %v4242, 0.0
        %4447 = vadd.xlane.f32.xlu0 %v4446
        %v4448 = vpop.xlane.xlu0 %4447
        %v4449 = vsel %vm1803, %v4244, 0.0
        %4450 = vadd.xlane.f32.xlu0 %v4449
        %v4451 = vpop.xlane.xlu0 %4450
        %v4452 = vsel %vm1803, %v4246, 0.0
        %4453 = vadd.xlane.f32.xlu0 %v4452
        %v4454 = vpop.xlane.xlu0 %4453
        %v4455 = vsel %vm1803, %v4248, 0.0
        %4456 = vadd.xlane.f32.xlu0 %v4455
        %v4457 = vpop.xlane.xlu0 %4456
        %v4458 = vsel %vm1803, %v4250, 0.0
        %4459 = vadd.xlane.f32.xlu0 %v4458
        %v4460 = vpop.xlane.xlu0 %4459
        %v4461 = vsel %vm1803, %v4252, 0.0
        %4462 = vadd.xlane.f32.xlu0 %v4461
        %v4463 = vpop.xlane.xlu0 %4462
        %v4464 = vsel %vm1803, %v4254, 0.0
        %4465 = vadd.xlane.f32.xlu0 %v4464
        %v4466 = vpop.xlane.xlu0 %4465
        %v4467 = vsel %vm1803, %v4256, 0.0
        %4468 = vadd.xlane.f32.xlu0 %v4467
        %v4469 = vpop.xlane.xlu0 %4468
        %v4470 = vsel %vm1803, %v4258, 0.0
        %4471 = vadd.xlane.f32.xlu0 %v4470
        %v4472 = vpop.xlane.xlu0 %4471
        %v4473 = vsel %vm1803, %v4260, 0.0
        %4474 = vadd.xlane.f32.xlu0 %v4473
        %v4475 = vpop.xlane.xlu0 %4474
        %v4476 = vsel %vm1803, %v4262, 0.0
        %4477 = vadd.xlane.f32.xlu0 %v4476
        %v4478 = vpop.xlane.xlu0 %4477
        %v4479 = vsel %vm1803, %v4264, 0.0
        %4480 = vadd.xlane.f32.xlu0 %v4479
        %v4481 = vpop.xlane.xlu0 %4480
        %v4482 = vsel %vm1803, %v4266, 0.0
        %4483 = vadd.xlane.f32.xlu0 %v4482
        %v4484 = vpop.xlane.xlu0 %4483
        %v4485 = vsel %vm1803, %v4268, 0.0
        %4486 = vadd.xlane.f32.xlu0 %v4485
        %v4487 = vpop.xlane.xlu0 %4486
        %v4488 = vsel %vm1803, %v4270, 0.0
        %4489 = vadd.xlane.f32.xlu0 %v4488
        %v4490 = vpop.xlane.xlu0 %4489
        %v4491 = vsel %vm1803, %v4272, 0.0
        %4492 = vadd.xlane.f32.xlu0 %v4491
        %v4493 = vpop.xlane.xlu0 %4492
        %v4494 = vsel %vm1803, %v4274, 0.0
        %4495 = vadd.xlane.f32.xlu0 %v4494
        %v4496 = vpop.xlane.xlu0 %4495
        %v4497 = vsel %vm1803, %v4276, 0.0
        %4498 = vadd.xlane.f32.xlu0 %v4497
        %v4499 = vpop.xlane.xlu0 %4498
        %v4500 = vsel %vm1803, %v4278, 0.0
        %4501 = vadd.xlane.f32.xlu0 %v4500
        %v4502 = vpop.xlane.xlu0 %4501
        %v4503 = vsel %vm1803, %v4280, 0.0
        %4504 = vadd.xlane.f32.xlu0 %v4503
        %v4505 = vpop.xlane.xlu0 %4504
        %v4506 = vsel %vm1803, %v4282, 0.0
        %4507 = vadd.xlane.f32.xlu0 %v4506
        %v4508 = vpop.xlane.xlu0 %4507
        %v4509 = vsel %vm1803, %v4284, 0.0
        %4510 = vadd.xlane.f32.xlu0 %v4509
        %v4511 = vpop.xlane.xlu0 %4510
        %v4512 = vsel %vm1803, %v4286, 0.0
        %4513 = vadd.xlane.f32.xlu0 %v4512
        %v4514 = vpop.xlane.xlu0 %4513
        %v4515 = vsel %vm1803, %v4288, 0.0
        %4516 = vadd.xlane.f32.xlu0 %v4515
        %v4517 = vpop.xlane.xlu0 %4516
        %v4518 = vsel %vm1803, %v4290, 0.0
        %4519 = vadd.xlane.f32.xlu0 %v4518
        %v4520 = vpop.xlane.xlu0 %4519
        %v4521 = vsel %vm1803, %v4292, 0.0
        %4522 = vadd.xlane.f32.xlu0 %v4521
        %v4523 = vpop.xlane.xlu0 %4522
        %v4524 = vsel %vm1803, %v4294, 0.0
        %4525 = vadd.xlane.f32.xlu0 %v4524
        %v4526 = vpop.xlane.xlu0 %4525
        %v4527 = vsel %vm1803, %v4296, 0.0
        %4528 = vadd.xlane.f32.xlu0 %v4527
        %v4529 = vpop.xlane.xlu0 %4528
        %v4530 = vsel %vm1803, %v4298, 0.0
        %4531 = vadd.xlane.f32.xlu0 %v4530
        %v4532 = vpop.xlane.xlu0 %4531
        %v4533 = vsel %vm1803, %v4300, 0.0
        %4534 = vadd.xlane.f32.xlu0 %v4533
        %v4535 = vpop.xlane.xlu0 %4534
        %v4536 = vsel %vm1803, %v4302, 0.0
        %4537 = vadd.xlane.f32.xlu0 %v4536
        %v4538 = vpop.xlane.xlu0 %4537
        %v4539 = vsel %vm1803, %v4304, 0.0
        %4540 = vadd.xlane.f32.xlu0 %v4539
        %v4541 = vpop.xlane.xlu0 %4540
        %v4542 = vsel %vm1803, %v4306, 0.0
        %4543 = vadd.xlane.f32.xlu0 %v4542
        %v4544 = vpop.xlane.xlu0 %4543
        %v4545 = vsel %vm1803, %v4308, 0.0
        %4546 = vadd.xlane.f32.xlu0 %v4545
        %v4547 = vpop.xlane.xlu0 %4546
        %v4548 = vsel %vm1803, %v4310, 0.0
        %4549 = vadd.xlane.f32.xlu0 %v4548
        %v4550 = vpop.xlane.xlu0 %4549
        %v4551 = vsel %vm1803, %v4312, 0.0
        %4552 = vadd.xlane.f32.xlu0 %v4551
        %v4553 = vpop.xlane.xlu0 %4552
        %v4554 = vsel %vm1803, %v4314, 0.0
        %4555 = vadd.xlane.f32.xlu0 %v4554
        %v4556 = vpop.xlane.xlu0 %4555
        %v4557 = vsel %vm1803, %v4316, 0.0
        %4558 = vadd.xlane.f32.xlu0 %v4557
        %v4559 = vpop.xlane.xlu0 %4558
        %v4560 = vsel %vm1803, %v4318, 0.0
        %4561 = vadd.xlane.f32.xlu0 %v4560
        %v4562 = vpop.xlane.xlu0 %4561
        %v4563 = vsel %vm1803, %v4320, 0.0
        %4564 = vadd.xlane.f32.xlu0 %v4563
        %v4565 = vpop.xlane.xlu0 %4564
        %v4566 = vsel %vm1803, %v4322, 0.0
        %4567 = vadd.xlane.f32.xlu0 %v4566
        %v4568 = vpop.xlane.xlu0 %4567
        %v4569 = vsel %vm1803, %v4324, 0.0
        %4570 = vadd.xlane.f32.xlu0 %v4569
        %v4571 = vpop.xlane.xlu0 %4570
        %v4572 = vsel %vm1803, %v4326, 0.0
        %4573 = vadd.xlane.f32.xlu0 %v4572
        %v4574 = vpop.xlane.xlu0 %4573
        %v4575 = vsel %vm1803, %v4328, 0.0
        %4576 = vadd.xlane.f32.xlu0 %v4575
        %v4577 = vpop.xlane.xlu0 %4576
        %v4578 = vsel %vm1803, %v4330, 0.0
        %4579 = vadd.xlane.f32.xlu0 %v4578
        %v4580 = vpop.xlane.xlu0 %4579
        %v4581 = vsel %vm1803, %v4332, 0.0
        %4582 = vadd.xlane.f32.xlu0 %v4581
        %v4583 = vpop.xlane.xlu0 %4582
        %v4584 = vsel %vm1803, %v4334, 0.0
        %4585 = vadd.xlane.f32.xlu0 %v4584
        %v4586 = vpop.xlane.xlu0 %4585
        %v4587 = vsel %vm1803, %v4336, 0.0
        %4588 = vadd.xlane.f32.xlu0 %v4587
        %v4589 = vpop.xlane.xlu0 %4588
        %v4590 = vsel %vm1803, %v4338, 0.0
        %4591 = vadd.xlane.f32.xlu0 %v4590
        %v4592 = vpop.xlane.xlu0 %4591
        %v4593 = vsel %vm1803, %v4340, 0.0
        %4594 = vadd.xlane.f32.xlu0 %v4593
        %v4595 = vpop.xlane.xlu0 %4594
        %v4596 = vsel %vm1803, %v4342, 0.0
        %4597 = vadd.xlane.f32.xlu0 %v4596
        %v4598 = vpop.xlane.xlu0 %4597
        %4599 = vrot.lane.b32.xlu0 %v957, 104
        %v4600 = vpop.permute.xlu0 %4599
        %4601 = vrot.lane.b32.xlu0 %v958, 104
        %v4602 = vpop.permute.xlu0 %4601
        %4603 = vrot.lane.b32.xlu0 %v963, 104
        %v4604 = vpop.permute.xlu0 %4603
        %v4669 = vlaneseq
        %v4670 = vshrl.u32 %v4669, 7
        %v4671 = vsub.s32 %v2061, %v4670
        %v4672 = vrot.slane %v4409, %v4671
        %v4673 = vlaneseq
        %v4674 = vshrl.u32 %v4673, 7
        %v4675 = vsub.s32 %v2066, %v4674
        %v4676 = vrot.slane %v4412, %v4675
        %v4677 = vsel %vm2071, %v4676, %v4672
        %v4678 = vlaneseq
        %v4679 = vshrl.u32 %v4678, 7
        %v4680 = vsub.s32 %v2061, %v4679
        %v4681 = vrot.slane %v4415, %v4680
        %v4682 = vlaneseq
        %v4683 = vshrl.u32 %v4682, 7
        %v4684 = vsub.s32 %v2066, %v4683
        %v4685 = vrot.slane %v4418, %v4684
        %v4686 = vsel %vm2071, %v4685, %v4681
        %v4687 = vlaneseq
        %v4688 = vshrl.u32 %v4687, 7
        %v4689 = vsub.s32 %v2061, %v4688
        %v4690 = vrot.slane %v4421, %v4689
        %v4691 = vlaneseq
        %v4692 = vshrl.u32 %v4691, 7
        %v4693 = vsub.s32 %v2066, %v4692
        %v4694 = vrot.slane %v4424, %v4693
        %v4695 = vsel %vm2071, %v4694, %v4690
        %v4696 = vlaneseq
        %v4697 = vshrl.u32 %v4696, 7
        %v4698 = vsub.s32 %v2061, %v4697
        %v4699 = vrot.slane %v4427, %v4698
        %v4700 = vlaneseq
        %v4701 = vshrl.u32 %v4700, 7
        %v4702 = vsub.s32 %v2066, %v4701
        %v4703 = vrot.slane %v4430, %v4702
        %v4704 = vsel %vm2071, %v4703, %v4699
        %v4705 = vlaneseq
        %v4706 = vshrl.u32 %v4705, 7
        %v4707 = vsub.s32 %v2061, %v4706
        %v4708 = vrot.slane %v4433, %v4707
        %v4709 = vlaneseq
        %v4710 = vshrl.u32 %v4709, 7
        %v4711 = vsub.s32 %v2066, %v4710
        %v4712 = vrot.slane %v4436, %v4711
        %v4713 = vsel %vm2071, %v4712, %v4708
        %v4714 = vlaneseq
        %v4715 = vshrl.u32 %v4714, 7
        %v4716 = vsub.s32 %v2061, %v4715
        %v4717 = vrot.slane %v4439, %v4716
        %v4718 = vlaneseq
        %v4719 = vshrl.u32 %v4718, 7
        %v4720 = vsub.s32 %v2066, %v4719
        %v4721 = vrot.slane %v4442, %v4720
        %v4722 = vsel %vm2071, %v4721, %v4717
        %v4723 = vlaneseq
        %v4724 = vshrl.u32 %v4723, 7
        %v4725 = vsub.s32 %v2061, %v4724
        %v4726 = vrot.slane %v4445, %v4725
        %v4727 = vlaneseq
        %v4728 = vshrl.u32 %v4727, 7
        %v4729 = vsub.s32 %v2066, %v4728
        %v4730 = vrot.slane %v4448, %v4729
        %v4731 = vsel %vm2071, %v4730, %v4726
        %v4732 = vlaneseq
        %v4733 = vshrl.u32 %v4732, 7
        %v4734 = vsub.s32 %v2061, %v4733
        %v4735 = vrot.slane %v4451, %v4734
        %v4736 = vlaneseq
        %v4737 = vshrl.u32 %v4736, 7
        %v4738 = vsub.s32 %v2066, %v4737
        %v4739 = vrot.slane %v4454, %v4738
        %v4740 = vsel %vm2071, %v4739, %v4735
        %v4741 = vlaneseq
        %v4742 = vshrl.u32 %v4741, 7
        %v4743 = vsub.s32 %v2061, %v4742
        %v4744 = vrot.slane %v4457, %v4743
        %v4745 = vlaneseq
        %v4746 = vshrl.u32 %v4745, 7
        %v4747 = vsub.s32 %v2066, %v4746
        %v4748 = vrot.slane %v4460, %v4747
        %v4749 = vsel %vm2071, %v4748, %v4744
        %v4750 = vlaneseq
        %v4751 = vshrl.u32 %v4750, 7
        %v4752 = vsub.s32 %v2061, %v4751
        %v4753 = vrot.slane %v4463, %v4752
        %v4754 = vlaneseq
        %v4755 = vshrl.u32 %v4754, 7
        %v4756 = vsub.s32 %v2066, %v4755
        %v4757 = vrot.slane %v4466, %v4756
        %v4758 = vsel %vm2071, %v4757, %v4753
        %v4759 = vlaneseq
        %v4760 = vshrl.u32 %v4759, 7
        %v4761 = vsub.s32 %v2061, %v4760
        %v4762 = vrot.slane %v4469, %v4761
        %v4763 = vlaneseq
        %v4764 = vshrl.u32 %v4763, 7
        %v4765 = vsub.s32 %v2066, %v4764
        %v4766 = vrot.slane %v4472, %v4765
        %v4767 = vsel %vm2071, %v4766, %v4762
        %v4768 = vlaneseq
        %v4769 = vshrl.u32 %v4768, 7
        %v4770 = vsub.s32 %v2061, %v4769
        %v4771 = vrot.slane %v4475, %v4770
        %v4772 = vlaneseq
        %v4773 = vshrl.u32 %v4772, 7
        %v4774 = vsub.s32 %v2066, %v4773
        %v4775 = vrot.slane %v4478, %v4774
        %v4776 = vsel %vm2071, %v4775, %v4771
        %v4777 = vlaneseq
        %v4778 = vshrl.u32 %v4777, 7
        %v4779 = vsub.s32 %v2061, %v4778
        %v4780 = vrot.slane %v4481, %v4779
        %v4781 = vlaneseq
        %v4782 = vshrl.u32 %v4781, 7
        %v4783 = vsub.s32 %v2066, %v4782
        %v4784 = vrot.slane %v4484, %v4783
        %v4785 = vsel %vm2071, %v4784, %v4780
        %v4786 = vlaneseq
        %v4787 = vshrl.u32 %v4786, 7
        %v4788 = vsub.s32 %v2061, %v4787
        %v4789 = vrot.slane %v4487, %v4788
        %v4790 = vlaneseq
        %v4791 = vshrl.u32 %v4790, 7
        %v4792 = vsub.s32 %v2066, %v4791
        %v4793 = vrot.slane %v4490, %v4792
        %v4794 = vsel %vm2071, %v4793, %v4789
        %v4795 = vlaneseq
        %v4796 = vshrl.u32 %v4795, 7
        %v4797 = vsub.s32 %v2061, %v4796
        %v4798 = vrot.slane %v4493, %v4797
        %v4799 = vlaneseq
        %v4800 = vshrl.u32 %v4799, 7
        %v4801 = vsub.s32 %v2066, %v4800
        %v4802 = vrot.slane %v4496, %v4801
        %v4803 = vsel %vm2071, %v4802, %v4798
        %v4804 = vlaneseq
        %v4805 = vshrl.u32 %v4804, 7
        %v4806 = vsub.s32 %v2061, %v4805
        %v4807 = vrot.slane %v4499, %v4806
        %v4808 = vlaneseq
        %v4809 = vshrl.u32 %v4808, 7
        %v4810 = vsub.s32 %v2066, %v4809
        %v4811 = vrot.slane %v4502, %v4810
        %v4812 = vsel %vm2071, %v4811, %v4807
        %v4813 = vlaneseq
        %v4814 = vshrl.u32 %v4813, 7
        %v4815 = vsub.s32 %v2061, %v4814
        %v4816 = vrot.slane %v4505, %v4815
        %v4817 = vlaneseq
        %v4818 = vshrl.u32 %v4817, 7
        %v4819 = vsub.s32 %v2066, %v4818
        %v4820 = vrot.slane %v4508, %v4819
        %v4821 = vsel %vm2071, %v4820, %v4816
        %v4822 = vlaneseq
        %v4823 = vshrl.u32 %v4822, 7
        %v4824 = vsub.s32 %v2061, %v4823
        %v4825 = vrot.slane %v4511, %v4824
        %v4826 = vlaneseq
        %v4827 = vshrl.u32 %v4826, 7
        %v4828 = vsub.s32 %v2066, %v4827
        %v4829 = vrot.slane %v4514, %v4828
        %v4830 = vsel %vm2071, %v4829, %v4825
        %v4831 = vlaneseq
        %v4832 = vshrl.u32 %v4831, 7
        %v4833 = vsub.s32 %v2061, %v4832
        %v4834 = vrot.slane %v4517, %v4833
        %v4835 = vlaneseq
        %v4836 = vshrl.u32 %v4835, 7
        %v4837 = vsub.s32 %v2066, %v4836
        %v4838 = vrot.slane %v4520, %v4837
        %v4839 = vsel %vm2071, %v4838, %v4834
        %v4840 = vlaneseq
        %v4841 = vshrl.u32 %v4840, 7
        %v4842 = vsub.s32 %v2061, %v4841
        %v4843 = vrot.slane %v4523, %v4842
        %v4844 = vlaneseq
        %v4845 = vshrl.u32 %v4844, 7
        %v4846 = vsub.s32 %v2066, %v4845
        %v4847 = vrot.slane %v4526, %v4846
        %v4848 = vsel %vm2071, %v4847, %v4843
        %v4849 = vlaneseq
        %v4850 = vshrl.u32 %v4849, 7
        %v4851 = vsub.s32 %v2061, %v4850
        %v4852 = vrot.slane %v4529, %v4851
        %v4853 = vlaneseq
        %v4854 = vshrl.u32 %v4853, 7
        %v4855 = vsub.s32 %v2066, %v4854
        %v4856 = vrot.slane %v4532, %v4855
        %v4857 = vsel %vm2071, %v4856, %v4852
        %v4858 = vlaneseq
        %v4859 = vshrl.u32 %v4858, 7
        %v4860 = vsub.s32 %v2061, %v4859
        %v4861 = vrot.slane %v4535, %v4860
        %v4862 = vlaneseq
        %v4863 = vshrl.u32 %v4862, 7
        %v4864 = vsub.s32 %v2066, %v4863
        %v4865 = vrot.slane %v4538, %v4864
        %v4866 = vsel %vm2071, %v4865, %v4861
        %v4867 = vlaneseq
        %v4868 = vshrl.u32 %v4867, 7
        %v4869 = vsub.s32 %v2061, %v4868
        %v4870 = vrot.slane %v4541, %v4869
        %v4871 = vlaneseq
        %v4872 = vshrl.u32 %v4871, 7
        %v4873 = vsub.s32 %v2066, %v4872
        %v4874 = vrot.slane %v4544, %v4873
        %v4875 = vsel %vm2071, %v4874, %v4870
        %v4876 = vlaneseq
        %v4877 = vshrl.u32 %v4876, 7
        %v4878 = vsub.s32 %v2061, %v4877
        %v4879 = vrot.slane %v4547, %v4878
        %v4880 = vlaneseq
        %v4881 = vshrl.u32 %v4880, 7
        %v4882 = vsub.s32 %v2066, %v4881
        %v4883 = vrot.slane %v4550, %v4882
        %v4884 = vsel %vm2071, %v4883, %v4879
        %v4885 = vlaneseq
        %v4886 = vshrl.u32 %v4885, 7
        %v4887 = vsub.s32 %v2061, %v4886
        %v4888 = vrot.slane %v4553, %v4887
        %v4889 = vlaneseq
        %v4890 = vshrl.u32 %v4889, 7
        %v4891 = vsub.s32 %v2066, %v4890
        %v4892 = vrot.slane %v4556, %v4891
        %v4893 = vsel %vm2071, %v4892, %v4888
        %v4894 = vlaneseq
        %v4895 = vshrl.u32 %v4894, 7
        %v4896 = vsub.s32 %v2061, %v4895
        %v4897 = vrot.slane %v4559, %v4896
        %v4898 = vlaneseq
        %v4899 = vshrl.u32 %v4898, 7
        %v4900 = vsub.s32 %v2066, %v4899
        %v4901 = vrot.slane %v4562, %v4900
        %v4902 = vsel %vm2071, %v4901, %v4897
        %v4903 = vlaneseq
        %v4904 = vshrl.u32 %v4903, 7
        %v4905 = vsub.s32 %v2061, %v4904
        %v4906 = vrot.slane %v4565, %v4905
        %v4907 = vlaneseq
        %v4908 = vshrl.u32 %v4907, 7
        %v4909 = vsub.s32 %v2066, %v4908
        %v4910 = vrot.slane %v4568, %v4909
        %v4911 = vsel %vm2071, %v4910, %v4906
        %v4912 = vlaneseq
        %v4913 = vshrl.u32 %v4912, 7
        %v4914 = vsub.s32 %v2061, %v4913
        %v4915 = vrot.slane %v4571, %v4914
        %v4916 = vlaneseq
        %v4917 = vshrl.u32 %v4916, 7
        %v4918 = vsub.s32 %v2066, %v4917
        %v4919 = vrot.slane %v4574, %v4918
        %v4920 = vsel %vm2071, %v4919, %v4915
        %v4921 = vlaneseq
        %v4922 = vshrl.u32 %v4921, 7
        %v4923 = vsub.s32 %v2061, %v4922
        %v4924 = vrot.slane %v4577, %v4923
        %v4925 = vlaneseq
        %v4926 = vshrl.u32 %v4925, 7
        %v4927 = vsub.s32 %v2066, %v4926
        %v4928 = vrot.slane %v4580, %v4927
        %v4929 = vsel %vm2071, %v4928, %v4924
        %v4930 = vlaneseq
        %v4931 = vshrl.u32 %v4930, 7
        %v4932 = vsub.s32 %v2061, %v4931
        %v4933 = vrot.slane %v4583, %v4932
        %v4934 = vlaneseq
        %v4935 = vshrl.u32 %v4934, 7
        %v4936 = vsub.s32 %v2066, %v4935
        %v4937 = vrot.slane %v4586, %v4936
        %v4938 = vsel %vm2071, %v4937, %v4933
        %v4939 = vlaneseq
        %v4940 = vshrl.u32 %v4939, 7
        %v4941 = vsub.s32 %v2061, %v4940
        %v4942 = vrot.slane %v4589, %v4941
        %v4943 = vlaneseq
        %v4944 = vshrl.u32 %v4943, 7
        %v4945 = vsub.s32 %v2066, %v4944
        %v4946 = vrot.slane %v4592, %v4945
        %v4947 = vsel %vm2071, %v4946, %v4942
        %v4948 = vlaneseq
        %v4949 = vshrl.u32 %v4948, 7
        %v4950 = vsub.s32 %v2061, %v4949
        %v4951 = vrot.slane %v4595, %v4950
        %v4952 = vlaneseq
        %v4953 = vshrl.u32 %v4952, 7
        %v4954 = vsub.s32 %v2066, %v4953
        %v4955 = vrot.slane %v4598, %v4954
        %v4956 = vsel %vm2071, %v4955, %v4951
        %v4957 = vsel %vm2352, %v4686, %v4677
        %v4958 = vsel %vm2354, %v4695, %v4957
        %v4959 = vsel %vm2356, %v4704, %v4958
        %v4960 = vsel %vm2358, %v4713, %v4959
        %v4961 = vsel %vm2360, %v4722, %v4960
        %v4962 = vsel %vm2362, %v4731, %v4961
        %v4963 = vsel %vm2364, %v4740, %v4962
        %v4964 = vsel %vm2352, %v4758, %v4749
        %v4965 = vsel %vm2354, %v4767, %v4964
        %v4966 = vsel %vm2356, %v4776, %v4965
        %v4967 = vsel %vm2358, %v4785, %v4966
        %v4968 = vsel %vm2360, %v4794, %v4967
        %v4969 = vsel %vm2362, %v4803, %v4968
        %v4970 = vsel %vm2364, %v4812, %v4969
        %v4971 = vsel %vm2352, %v4830, %v4821
        %v4972 = vsel %vm2354, %v4839, %v4971
        %v4973 = vsel %vm2356, %v4848, %v4972
        %v4974 = vsel %vm2358, %v4857, %v4973
        %v4975 = vsel %vm2360, %v4866, %v4974
        %v4976 = vsel %vm2362, %v4875, %v4975
        %v4977 = vsel %vm2364, %v4884, %v4976
        %v4978 = vsel %vm2352, %v4902, %v4893
        %v4979 = vsel %vm2354, %v4911, %v4978
        %v4980 = vsel %vm2356, %v4920, %v4979
        %v4981 = vsel %vm2358, %v4929, %v4980
        %v4982 = vsel %vm2360, %v4938, %v4981
        %v4983 = vsel %vm2362, %v4947, %v4982
        %v4984 = vsel %vm2364, %v4956, %v4983
        %v4990 = vsel %vm1803, %v4600, 0
        %v4993 = vsel %vm1803, %v4602, 0
        %v4996 = vsel %vm1803, %v4604, 0
        %4998 = vmatprep.subr.bf16.mxu0 0
        %4999 = vmatpush1.bf16.xpose.msra.mxu0 %v4996
        %5000 = vmatprep.subr.bf16.mxu0 0
        %5001 = vmatpush1.bf16.xpose.msra.mxu0 0
        %5002 = vmatprep.subr.bf16.mxu0 0
        %5003 = vmatpush1.bf16.xpose.msra.mxu0 0
        %5004 = vmatprep.subr.bf16.mxu0 0
        %5005 = vmatpush1.bf16.xpose.msra.mxu0 0
        %5006 = vmatprep.subr.bf16.mxu0 0
        %5007 = vmatpush1.bf16.xpose.msra.mxu0 0
        %5008 = vmatprep.subr.bf16.mxu0 0
        %5009 = vmatpush1.bf16.xpose.msra.mxu0 0
        %5010 = vmatprep.subr.bf16.mxu0 0
        %5011 = vmatpush1.bf16.xpose.msra.mxu0 0
        %5012 = vmatprep.subr.bf16.mxu0 0
        %5013 = vmatpush1.bf16.xpose.msra.mxu0 0
        %5014 = vmatprep.subr.bf16.mxu0 0
        %5015 = vmatpush1.bf16.xpose.msra.mxu0 0
        %5016 = vmatprep.subr.bf16.mxu0 0
        %5017 = vmatpush1.bf16.xpose.msra.mxu0 0
        %5018 = vmatprep.subr.bf16.mxu0 0
        %5019 = vmatpush1.bf16.xpose.msra.mxu0 0
        %5020 = vmatprep.subr.bf16.mxu0 0
        %5021 = vmatpush1.bf16.xpose.msra.mxu0 0
        %5022 = vmatprep.subr.bf16.mxu0 0
        %5023 = vmatpush1.bf16.xpose.msra.mxu0 0
        %5024 = vmatprep.subr.bf16.mxu0 0
        %5025 = vmatpush1.bf16.xpose.msra.mxu0 0
        %5026 = vmatprep.subr.bf16.mxu0 0
        %5027 = vmatpush1.bf16.xpose.msra.mxu0 0
        %5028 = vmatprep.subr.bf16.mxu0 0
        %5029 = vmatpush1.bf16.xpose.msra.mxu0 0
        %5030 = vmatprep.mubr.bf16.mxu0 0
        %5031 = vmatmul.mubr.bf16.gmra.mrb[0].mxu0 %v4990
        %v5032 = vpop.f32.mrb[0].mxu0
        %v5033 = vadd.f32 %v4963, %v5032
        %v5034 = vpop.f32.mrb[0].mxu0
        %v5035 = vpop.f32.mrb[0].mxu0
        %v5036 = vadd.f32 %v4970, %v5035
        %v5037 = vpop.f32.mrb[0].mxu0
        %5038 = vmatprep.mubr.bf16.mxu0 0
        %5039 = vmatmul.mubr.bf16.gmra.mrb[0].mxu0 %v4993
        %v5040 = vpop.f32.mrb[0].mxu0
        %v5041 = vadd.f32 %v4977, %v5040
        %v5042 = vpop.f32.mrb[0].mxu0
        %v5043 = vpop.f32.mrb[0].mxu0
        %v5044 = vadd.f32 %v4984, %v5043
        %v5045 = vpop.f32.mrb[0].mxu0
        %5046 = vdwg.mxu0
        %v5047 = vsel %vm2449, %v5033, -inf
        %5048 = vmax.xlane.f32.xlu0 %v5047
        %v5049 = vpop.xlane.xlu0 %5048
        %v5050 = vsel %vm2449, %v5036, -inf
        %5051 = vmax.xlane.f32.xlu0 %v5050
        %v5052 = vpop.xlane.xlu0 %5051
        %v5053 = vsel %vm2449, %v5041, -inf
        %5054 = vmax.xlane.f32.xlu0 %v5053
        %v5055 = vpop.xlane.xlu0 %5054
        %v5056 = vsel %vm2449, %v5044, -inf
        %5057 = vmax.xlane.f32.xlu0 %v5056
        %v5058 = vpop.xlane.xlu0 %5057
        %v5059 = vld [vmem:[#allocation6] sm:$0xff]
        %v5060 = vld [vmem:[#allocation6 + $0x8] sm:$0xff]
        %v5061 = vld [vmem:[#allocation6 + $0x10] sm:$0xff]
        %v5062 = vld [vmem:[#allocation6 + $0x18] sm:$0xff]
        %vm5063 = vcmask 7168
        %v5064 = vsel %vm5063, %v2452, %v3361
        %v5065 = vsel %vm5063, %v2455, %v3364
        %v5066 = vsel %vm5063, %v2458, %v3367
        %v5067 = vsel %vm5063, %v2461, %v3370
        %vm5068 = vcmask 15360
        %v5069 = vsel %vm5068, %v5064, %v4205
        %v5070 = vsel %vm5068, %v5065, %v4208
        %v5071 = vsel %vm5068, %v5066, %v4211
        %v5072 = vsel %vm5068, %v5067, %v4214
        %vm5073 = vcmask 23552
        %v5074 = vsel %vm5073, %v5069, %v5049
        %v5075 = vsel %vm5073, %v5070, %v5052
        %v5076 = vsel %vm5073, %v5071, %v5055
        %v5077 = vsel %vm5073, %v5072, %v5058
        %v5078 = vmax.f32 %v5059, %v5074
        %v5079 = vmax.f32 %v5060, %v5075
        %v5080 = vmax.f32 %v5061, %v5076
        %v5081 = vmax.f32 %v5062, %v5077
        %v5082 = vsub.f32 %v5059, %v5078
        %v5083 = vsub.f32 %v5060, %v5079
        %v5084 = vsub.f32 %v5061, %v5080
        %v5085 = vsub.f32 %v5062, %v5081
        %v5086 = vmul.f32 %v5082, 1.442695
        %v5087 = vpow.pop %v5086
        %v5088 = vmul.f32 %v5083, 1.442695
        %v5089 = vpow.pop %v5088
        %v5090 = vmul.f32 %v5084, 1.442695
        %v5091 = vpow.pop %v5090
        %v5092 = vmul.f32 %v5085, 1.442695
        %v5093 = vpow.pop %v5092
        %5095 = vset.pattern.permute.xlu0 0
        %5096 = vperm.xlu0 %5095, %v5078
        %v5097 = vpop.permute.xlu0 %5096
        %5100 = vset.pattern.permute.xlu0 0
        %5101 = vperm.xlu0 %5100, %v5079
        %v5102 = vpop.permute.xlu0 %5101
        %5105 = vset.pattern.permute.xlu0 0
        %5106 = vperm.xlu0 %5105, %v5080
        %v5107 = vpop.permute.xlu0 %5106
        %5110 = vset.pattern.permute.xlu0 0
        %5111 = vperm.xlu0 %5110, %v5081
        %v5112 = vpop.permute.xlu0 %5111
        %v5114 = vsub.f32 %v2435, %v5097
        %v5115 = vsub.f32 %v2438, %v5102
        %v5116 = vsub.f32 %v2443, %v5107
        %v5117 = vsub.f32 %v2446, %v5112
        %v5118 = vmul.f32 %v5114, 1.442695
        %v5119 = vpow.pop %v5118
        %v5120 = vmul.f32 %v5115, 1.442695
        %v5121 = vpow.pop %v5120
        %v5122 = vmul.f32 %v5116, 1.442695
        %v5123 = vpow.pop %v5122
        %v5124 = vmul.f32 %v5117, 1.442695
        %v5125 = vpow.pop %v5124
        %v5126 = vsel %vm2449, %v5119, 0.0
        %5127 = vadd.xlane.f32.xlu0 %v5126
        %v5128 = vpop.xlane.xlu0 %5127
        %v5129 = vsel %vm2449, %v5121, 0.0
        %5130 = vadd.xlane.f32.xlu0 %v5129
        %v5131 = vpop.xlane.xlu0 %5130
        %v5132 = vsel %vm2449, %v5123, 0.0
        %5133 = vadd.xlane.f32.xlu0 %v5132
        %v5134 = vpop.xlane.xlu0 %5133
        %v5135 = vsel %vm2449, %v5125, 0.0
        %5136 = vadd.xlane.f32.xlu0 %v5135
        %v5137 = vpop.xlane.xlu0 %5136
        %v5138 = vpack.c.bf16 %v5121, %v5119
        %v5139 = vpack.c.bf16 %v5125, %v5123
        %v5141 = vsel %vm2449, %v5138, 0
        %v5144 = vsel %vm2449, %v5139, 0
        %5146 = vmatprep.subr.bf16.mxu0 0
        %5147 = vmatpush1.bf16.msra.mxu0 %v966
        %5148 = vmatprep.subr.bf16.mxu0 0
        %5149 = vmatpush1.bf16.msra.mxu0 0
        %5150 = vmatprep.subr.bf16.mxu0 0
        %5151 = vmatpush1.bf16.msra.mxu0 0
        %5152 = vmatprep.subr.bf16.mxu0 0
        %5153 = vmatpush1.bf16.msra.mxu0 0
        %5154 = vmatprep.subr.bf16.mxu0 0
        %5155 = vmatpush1.bf16.msra.mxu0 0
        %5156 = vmatprep.subr.bf16.mxu0 0
        %5157 = vmatpush1.bf16.msra.mxu0 0
        %5158 = vmatprep.subr.bf16.mxu0 0
        %5159 = vmatpush1.bf16.msra.mxu0 0
        %5160 = vmatprep.subr.bf16.mxu0 0
        %5161 = vmatpush1.bf16.msra.mxu0 0
        %5162 = vmatprep.subr.bf16.mxu0 0
        %5163 = vmatpush1.bf16.msra.mxu0 0
        %5164 = vmatprep.subr.bf16.mxu0 0
        %5165 = vmatpush1.bf16.msra.mxu0 0
        %5166 = vmatprep.subr.bf16.mxu0 0
        %5167 = vmatpush1.bf16.msra.mxu0 0
        %5168 = vmatprep.subr.bf16.mxu0 0
        %5169 = vmatpush1.bf16.msra.mxu0 0
        %5170 = vmatprep.subr.bf16.mxu0 0
        %5171 = vmatpush1.bf16.msra.mxu0 0
        %5172 = vmatprep.subr.bf16.mxu0 0
        %5173 = vmatpush1.bf16.msra.mxu0 0
        %5174 = vmatprep.subr.bf16.mxu0 0
        %5175 = vmatpush1.bf16.msra.mxu0 0
        %5176 = vmatprep.subr.bf16.mxu0 0
        %5177 = vmatpush1.bf16.msra.mxu0 0
        %5178 = vmatprep.mubr.bf16.mxu0 0
        %5179 = vmatmul.mubr.bf16.gmra.mrb[0].mxu0 %v5141
        %v5180 = vpop.f32.mrb[0].mxu0
        %v5181 = vadd.f32 0.0, %v5180
        %v5182 = vpop.f32.mrb[0].mxu0
        %v5183 = vpop.f32.mrb[0].mxu0
        %v5184 = vadd.f32 0.0, %v5183
        %v5185 = vpop.f32.mrb[0].mxu0
        %5186 = vmatprep.mubr.bf16.mxu0 0
        %5187 = vmatmul.mubr.bf16.gmra.mrb[0].mxu0 %v5144
        %v5188 = vpop.f32.mrb[0].mxu0
        %v5189 = vadd.f32 0.0, %v5188
        %v5190 = vpop.f32.mrb[0].mxu0
        %v5191 = vpop.f32.mrb[0].mxu0
        %v5192 = vadd.f32 0.0, %v5191
        %v5193 = vpop.f32.mrb[0].mxu0
        %5194 = vdwg.mxu0
        %5195 = vset.pattern.permute.xlu0 1
        %5196 = vperm.xlu0 %5195, %v5078
        %v5197 = vpop.permute.xlu0 %5196
        %5199 = vset.pattern.permute.xlu0 1
        %5200 = vperm.xlu0 %5199, %v5079
        %v5201 = vpop.permute.xlu0 %5200
        %5203 = vset.pattern.permute.xlu0 1
        %5204 = vperm.xlu0 %5203, %v5080
        %v5205 = vpop.permute.xlu0 %5204
        %5207 = vset.pattern.permute.xlu0 1
        %5208 = vperm.xlu0 %5207, %v5081
        %v5209 = vpop.permute.xlu0 %5208
        %v5211 = vsub.f32 %v3345, %v5197
        %v5212 = vsub.f32 %v3348, %v5201
        %v5213 = vsub.f32 %v3353, %v5205
        %v5214 = vsub.f32 %v3356, %v5209
        %v5215 = vmul.f32 %v5211, 1.442695
        %v5216 = vpow.pop %v5215
        %v5217 = vmul.f32 %v5212, 1.442695
        %v5218 = vpow.pop %v5217
        %v5219 = vmul.f32 %v5213, 1.442695
        %v5220 = vpow.pop %v5219
        %v5221 = vmul.f32 %v5214, 1.442695
        %v5222 = vpow.pop %v5221
        %v5223 = vsel %vm2449, %v5216, 0.0
        %5224 = vadd.xlane.f32.xlu0 %v5223
        %v5225 = vpop.xlane.xlu0 %5224
        %v5226 = vsel %vm2449, %v5218, 0.0
        %5227 = vadd.xlane.f32.xlu0 %v5226
        %v5228 = vpop.xlane.xlu0 %5227
        %v5229 = vsel %vm2449, %v5220, 0.0
        %5230 = vadd.xlane.f32.xlu0 %v5229
        %v5231 = vpop.xlane.xlu0 %5230
        %v5232 = vsel %vm2449, %v5222, 0.0
        %5233 = vadd.xlane.f32.xlu0 %v5232
        %v5234 = vpop.xlane.xlu0 %5233
        %v5235 = vpack.c.bf16 %v5218, %v5216
        %v5236 = vpack.c.bf16 %v5222, %v5220
        %5238 = vrot.lane.b32.xlu0 %v966, 120
        %v5239 = vpop.permute.xlu0 %5238
        %v5242 = vsel %vm2449, %v5235, 0
        %v5245 = vsel %vm2449, %v5236, 0
        %5247 = vmatprep.subr.bf16.mxu0 0
        %5248 = vmatpush1.bf16.msra.mxu0 %v5239
        %5249 = vmatprep.subr.bf16.mxu0 0
        %5250 = vmatpush1.bf16.msra.mxu0 0
        %5251 = vmatprep.subr.bf16.mxu0 0
        %5252 = vmatpush1.bf16.msra.mxu0 0
        %5253 = vmatprep.subr.bf16.mxu0 0
        %5254 = vmatpush1.bf16.msra.mxu0 0
        %5255 = vmatprep.subr.bf16.mxu0 0
        %5256 = vmatpush1.bf16.msra.mxu0 0
        %5257 = vmatprep.subr.bf16.mxu0 0
        %5258 = vmatpush1.bf16.msra.mxu0 0
        %5259 = vmatprep.subr.bf16.mxu0 0
        %5260 = vmatpush1.bf16.msra.mxu0 0
        %5261 = vmatprep.subr.bf16.mxu0 0
        %5262 = vmatpush1.bf16.msra.mxu0 0
        %5263 = vmatprep.subr.bf16.mxu0 0
        %5264 = vmatpush1.bf16.msra.mxu0 0
        %5265 = vmatprep.subr.bf16.mxu0 0
        %5266 = vmatpush1.bf16.msra.mxu0 0
        %5267 = vmatprep.subr.bf16.mxu0 0
        %5268 = vmatpush1.bf16.msra.mxu0 0
        %5269 = vmatprep.subr.bf16.mxu0 0
        %5270 = vmatpush1.bf16.msra.mxu0 0
        %5271 = vmatprep.subr.bf16.mxu0 0
        %5272 = vmatpush1.bf16.msra.mxu0 0
        %5273 = vmatprep.subr.bf16.mxu0 0
        %5274 = vmatpush1.bf16.msra.mxu0 0
        %5275 = vmatprep.subr.bf16.mxu0 0
        %5276 = vmatpush1.bf16.msra.mxu0 0
        %5277 = vmatprep.subr.bf16.mxu0 0
        %5278 = vmatpush1.bf16.msra.mxu0 0
        %5279 = vmatprep.mubr.bf16.mxu0 0
        %5280 = vmatmul.mubr.bf16.gmra.mrb[0].mxu0 %v5242
        %v5281 = vpop.f32.mrb[0].mxu0
        %v5282 = vadd.f32 0.0, %v5281
        %v5283 = vpop.f32.mrb[0].mxu0
        %v5284 = vpop.f32.mrb[0].mxu0
        %v5285 = vadd.f32 0.0, %v5284
        %v5286 = vpop.f32.mrb[0].mxu0
        %5287 = vmatprep.mubr.bf16.mxu0 0
        %5288 = vmatmul.mubr.bf16.gmra.mrb[0].mxu0 %v5245
        %v5289 = vpop.f32.mrb[0].mxu0
        %v5290 = vadd.f32 0.0, %v5289
        %v5291 = vpop.f32.mrb[0].mxu0
        %v5292 = vpop.f32.mrb[0].mxu0
        %v5293 = vadd.f32 0.0, %v5292
        %v5294 = vpop.f32.mrb[0].mxu0
        %5295 = vdwg.mxu0
        %5296 = vset.pattern.permute.xlu0 2
        %5297 = vperm.xlu0 %5296, %v5078
        %v5298 = vpop.permute.xlu0 %5297
        %5300 = vset.pattern.permute.xlu0 2
        %5301 = vperm.xlu0 %5300, %v5079
        %v5302 = vpop.permute.xlu0 %5301
        %5304 = vset.pattern.permute.xlu0 2
        %5305 = vperm.xlu0 %5304, %v5080
        %v5306 = vpop.permute.xlu0 %5305
        %5308 = vset.pattern.permute.xlu0 2
        %5309 = vperm.xlu0 %5308, %v5081
        %v5310 = vpop.permute.xlu0 %5309
        %v5312 = vsub.f32 %v4189, %v5298
        %v5313 = vsub.f32 %v4192, %v5302
        %v5314 = vsub.f32 %v4197, %v5306
        %v5315 = vsub.f32 %v4200, %v5310
        %v5316 = vmul.f32 %v5312, 1.442695
        %v5317 = vpow.pop %v5316
        %v5318 = vmul.f32 %v5313, 1.442695
        %v5319 = vpow.pop %v5318
        %v5320 = vmul.f32 %v5314, 1.442695
        %v5321 = vpow.pop %v5320
        %v5322 = vmul.f32 %v5315, 1.442695
        %v5323 = vpow.pop %v5322
        %v5324 = vsel %vm2449, %v5317, 0.0
        %5325 = vadd.xlane.f32.xlu0 %v5324
        %v5326 = vpop.xlane.xlu0 %5325
        %v5327 = vsel %vm2449, %v5319, 0.0
        %5328 = vadd.xlane.f32.xlu0 %v5327
        %v5329 = vpop.xlane.xlu0 %5328
        %v5330 = vsel %vm2449, %v5321, 0.0
        %5331 = vadd.xlane.f32.xlu0 %v5330
        %v5332 = vpop.xlane.xlu0 %5331
        %v5333 = vsel %vm2449, %v5323, 0.0
        %5334 = vadd.xlane.f32.xlu0 %v5333
        %v5335 = vpop.xlane.xlu0 %5334
        %v5336 = vpack.c.bf16 %v5319, %v5317
        %v5337 = vpack.c.bf16 %v5323, %v5321
        %5338 = vrot.lane.b32.xlu0 %v966, 112
        %v5339 = vpop.permute.xlu0 %5338
        %v5342 = vsel %vm2449, %v5336, 0
        %v5345 = vsel %vm2449, %v5337, 0
        %5347 = vmatprep.subr.bf16.mxu0 0
        %5348 = vmatpush1.bf16.msra.mxu0 %v5339
        %5349 = vmatprep.subr.bf16.mxu0 0
        %5350 = vmatpush1.bf16.msra.mxu0 0
        %5351 = vmatprep.subr.bf16.mxu0 0
        %5352 = vmatpush1.bf16.msra.mxu0 0
        %5353 = vmatprep.subr.bf16.mxu0 0
        %5354 = vmatpush1.bf16.msra.mxu0 0
        %5355 = vmatprep.subr.bf16.mxu0 0
        %5356 = vmatpush1.bf16.msra.mxu0 0
        %5357 = vmatprep.subr.bf16.mxu0 0
        %5358 = vmatpush1.bf16.msra.mxu0 0
        %5359 = vmatprep.subr.bf16.mxu0 0
        %5360 = vmatpush1.bf16.msra.mxu0 0
        %5361 = vmatprep.subr.bf16.mxu0 0
        %5362 = vmatpush1.bf16.msra.mxu0 0
        %5363 = vmatprep.subr.bf16.mxu0 0
        %5364 = vmatpush1.bf16.msra.mxu0 0
        %5365 = vmatprep.subr.bf16.mxu0 0
        %5366 = vmatpush1.bf16.msra.mxu0 0
        %5367 = vmatprep.subr.bf16.mxu0 0
        %5368 = vmatpush1.bf16.msra.mxu0 0
        %5369 = vmatprep.subr.bf16.mxu0 0
        %5370 = vmatpush1.bf16.msra.mxu0 0
        %5371 = vmatprep.subr.bf16.mxu0 0
        %5372 = vmatpush1.bf16.msra.mxu0 0
        %5373 = vmatprep.subr.bf16.mxu0 0
        %5374 = vmatpush1.bf16.msra.mxu0 0
        %5375 = vmatprep.subr.bf16.mxu0 0
        %5376 = vmatpush1.bf16.msra.mxu0 0
        %5377 = vmatprep.subr.bf16.mxu0 0
        %5378 = vmatpush1.bf16.msra.mxu0 0
        %5379 = vmatprep.mubr.bf16.mxu0 0
        %5380 = vmatmul.mubr.bf16.gmra.mrb[0].mxu0 %v5342
        %v5381 = vpop.f32.mrb[0].mxu0
        %v5382 = vadd.f32 0.0, %v5381
        %v5383 = vpop.f32.mrb[0].mxu0
        %v5384 = vpop.f32.mrb[0].mxu0
        %v5385 = vadd.f32 0.0, %v5384
        %v5386 = vpop.f32.mrb[0].mxu0
        %5387 = vmatprep.mubr.bf16.mxu0 0
        %5388 = vmatmul.mubr.bf16.gmra.mrb[0].mxu0 %v5345
        %v5389 = vpop.f32.mrb[0].mxu0
        %v5390 = vadd.f32 0.0, %v5389
        %v5391 = vpop.f32.mrb[0].mxu0
        %v5392 = vpop.f32.mrb[0].mxu0
        %v5393 = vadd.f32 0.0, %v5392
        %v5394 = vpop.f32.mrb[0].mxu0
        %5395 = vdwg.mxu0
        %5396 = vset.pattern.permute.xlu0 3
        %5397 = vperm.xlu0 %5396, %v5078
        %v5398 = vpop.permute.xlu0 %5397
        %5400 = vset.pattern.permute.xlu0 3
        %5401 = vperm.xlu0 %5400, %v5079
        %v5402 = vpop.permute.xlu0 %5401
        %5404 = vset.pattern.permute.xlu0 3
        %5405 = vperm.xlu0 %5404, %v5080
        %v5406 = vpop.permute.xlu0 %5405
        %5408 = vset.pattern.permute.xlu0 3
        %5409 = vperm.xlu0 %5408, %v5081
        %v5410 = vpop.permute.xlu0 %5409
        %v5412 = vsub.f32 %v5033, %v5398
        %v5413 = vsub.f32 %v5036, %v5402
        %v5414 = vsub.f32 %v5041, %v5406
        %v5415 = vsub.f32 %v5044, %v5410
        %v5416 = vmul.f32 %v5412, 1.442695
        %v5417 = vpow.pop %v5416
        %v5418 = vmul.f32 %v5413, 1.442695
        %v5419 = vpow.pop %v5418
        %v5420 = vmul.f32 %v5414, 1.442695
        %v5421 = vpow.pop %v5420
        %v5422 = vmul.f32 %v5415, 1.442695
        %v5423 = vpow.pop %v5422
        %v5424 = vsel %vm2449, %v5417, 0.0
        %5425 = vadd.xlane.f32.xlu0 %v5424
        %v5426 = vpop.xlane.xlu0 %5425
        %v5427 = vsel %vm2449, %v5419, 0.0
        %5428 = vadd.xlane.f32.xlu0 %v5427
        %v5429 = vpop.xlane.xlu0 %5428
        %v5430 = vsel %vm2449, %v5421, 0.0
        %5431 = vadd.xlane.f32.xlu0 %v5430
        %v5432 = vpop.xlane.xlu0 %5431
        %v5433 = vsel %vm2449, %v5423, 0.0
        %5434 = vadd.xlane.f32.xlu0 %v5433
        %v5435 = vpop.xlane.xlu0 %5434
        %v5436 = vpack.c.bf16 %v5419, %v5417
        %v5437 = vpack.c.bf16 %v5423, %v5421
        %5438 = vrot.lane.b32.xlu0 %v966, 104
        %v5439 = vpop.permute.xlu0 %5438
        %v5442 = vsel %vm2449, %v5436, 0
        %v5445 = vsel %vm2449, %v5437, 0
        %5447 = vmatprep.subr.bf16.mxu0 0
        %5448 = vmatpush1.bf16.msra.mxu0 %v5439
        %5449 = vmatprep.subr.bf16.mxu0 0
        %5450 = vmatpush1.bf16.msra.mxu0 0
        %5451 = vmatprep.subr.bf16.mxu0 0
        %5452 = vmatpush1.bf16.msra.mxu0 0
        %5453 = vmatprep.subr.bf16.mxu0 0
        %5454 = vmatpush1.bf16.msra.mxu0 0
        %5455 = vmatprep.subr.bf16.mxu0 0
        %5456 = vmatpush1.bf16.msra.mxu0 0
        %5457 = vmatprep.subr.bf16.mxu0 0
        %5458 = vmatpush1.bf16.msra.mxu0 0
        %5459 = vmatprep.subr.bf16.mxu0 0
        %5460 = vmatpush1.bf16.msra.mxu0 0
        %5461 = vmatprep.subr.bf16.mxu0 0
        %5462 = vmatpush1.bf16.msra.mxu0 0
        %5463 = vmatprep.subr.bf16.mxu0 0
        %5464 = vmatpush1.bf16.msra.mxu0 0
        %5465 = vmatprep.subr.bf16.mxu0 0
        %5466 = vmatpush1.bf16.msra.mxu0 0
        %5467 = vmatprep.subr.bf16.mxu0 0
        %5468 = vmatpush1.bf16.msra.mxu0 0
        %5469 = vmatprep.subr.bf16.mxu0 0
        %5470 = vmatpush1.bf16.msra.mxu0 0
        %5471 = vmatprep.subr.bf16.mxu0 0
        %5472 = vmatpush1.bf16.msra.mxu0 0
        %5473 = vmatprep.subr.bf16.mxu0 0
        %5474 = vmatpush1.bf16.msra.mxu0 0
        %5475 = vmatprep.subr.bf16.mxu0 0
        %5476 = vmatpush1.bf16.msra.mxu0 0
        %5477 = vmatprep.subr.bf16.mxu0 0
        %5478 = vmatpush1.bf16.msra.mxu0 0
        %5479 = vmatprep.mubr.bf16.mxu0 0
        %5480 = vmatmul.mubr.bf16.gmra.mrb[0].mxu0 %v5442
        %v5481 = vpop.f32.mrb[0].mxu0
        %v5482 = vadd.f32 0.0, %v5481
        %v5483 = vpop.f32.mrb[0].mxu0
        %v5484 = vpop.f32.mrb[0].mxu0
        %v5485 = vadd.f32 0.0, %v5484
        %v5486 = vpop.f32.mrb[0].mxu0
        %5487 = vmatprep.mubr.bf16.mxu0 0
        %5488 = vmatmul.mubr.bf16.gmra.mrb[0].mxu0 %v5445
        %v5489 = vpop.f32.mrb[0].mxu0
        %v5490 = vadd.f32 0.0, %v5489
        %v5491 = vpop.f32.mrb[0].mxu0
        %v5492 = vpop.f32.mrb[0].mxu0
        %v5493 = vadd.f32 0.0, %v5492
        %v5494 = vpop.f32.mrb[0].mxu0
        %5495 = vdwg.mxu0
        %vm5496 = vcmask 31744
        %5497 = vst.msk [vmem:[#allocation6] sm:$0xff] %vm5496, %v5078
        %5498 = vst.msk [vmem:[#allocation6 + $0x8] sm:$0xff] %vm5496, %v5079
        %5499 = vst.msk [vmem:[#allocation6 + $0x10] sm:$0xff] %vm5496, %v5080
        %5500 = vst.msk [vmem:[#allocation6 + $0x18] sm:$0xff] %vm5496, %v5081
        %v5501 = vld [vmem:[#allocation7] sm:$0xff]
        %v5502 = vld [vmem:[#allocation7 + $0x8] sm:$0xff]
        %v5503 = vld [vmem:[#allocation7 + $0x10] sm:$0xff]
        %v5504 = vld [vmem:[#allocation7 + $0x18] sm:$0xff]
        %v5505 = vmul.f32 %v5087, %v5501
        %v5506 = vmul.f32 %v5089, %v5502
        %v5507 = vmul.f32 %v5091, %v5503
        %v5508 = vmul.f32 %v5093, %v5504
        %v5509 = vsel %vm5063, %v5128, %v5225
        %v5510 = vsel %vm5063, %v5131, %v5228
        %v5511 = vsel %vm5063, %v5134, %v5231
        %v5512 = vsel %vm5063, %v5137, %v5234
        %v5513 = vsel %vm5068, %v5509, %v5326
        %v5514 = vsel %vm5068, %v5510, %v5329
        %v5515 = vsel %vm5068, %v5511, %v5332
        %v5516 = vsel %vm5068, %v5512, %v5335
        %v5517 = vsel %vm5073, %v5513, %v5426
        %v5518 = vsel %vm5073, %v5514, %v5429
        %v5519 = vsel %vm5073, %v5515, %v5432
        %v5520 = vsel %vm5073, %v5516, %v5435
        %v5521 = vadd.f32 %v5505, %v5517
        %v5522 = vadd.f32 %v5506, %v5518
        %v5523 = vadd.f32 %v5507, %v5519
        %v5524 = vadd.f32 %v5508, %v5520
        %5525 = vst.msk [vmem:[#allocation7] sm:$0xff] %vm5496, %v5521
        %5526 = vst.msk [vmem:[#allocation7 + $0x8] sm:$0xff] %vm5496, %v5522
        %5527 = vst.msk [vmem:[#allocation7 + $0x10] sm:$0xff] %vm5496, %v5523
        %5528 = vst.msk [vmem:[#allocation7 + $0x18] sm:$0xff] %vm5496, %v5524
        %5530 = vset.pattern.permute.xlu0 0
        %5531 = vperm.xlu0 %5530, %v5087
        %v5532 = vpop.permute.xlu0 %5531
        %5535 = vset.pattern.permute.xlu0 0
        %5536 = vperm.xlu0 %5535, %v5089
        %v5537 = vpop.permute.xlu0 %5536
        %5540 = vset.pattern.permute.xlu0 0
        %5541 = vperm.xlu0 %5540, %v5091
        %v5542 = vpop.permute.xlu0 %5541
        %5545 = vset.pattern.permute.xlu0 0
        %5546 = vperm.xlu0 %5545, %v5093
        %v5547 = vpop.permute.xlu0 %5546
        %5549 = vset.pattern.permute.xlu0 1
        %5550 = vperm.xlu0 %5549, %v5087
        %v5551 = vpop.permute.xlu0 %5550
        %5553 = vset.pattern.permute.xlu0 1
        %5554 = vperm.xlu0 %5553, %v5089
        %v5555 = vpop.permute.xlu0 %5554
        %5557 = vset.pattern.permute.xlu0 1
        %5558 = vperm.xlu0 %5557, %v5091
        %v5559 = vpop.permute.xlu0 %5558
        %5561 = vset.pattern.permute.xlu0 1
        %5562 = vperm.xlu0 %5561, %v5093
        %v5563 = vpop.permute.xlu0 %5562
        %5565 = vset.pattern.permute.xlu0 2
        %5566 = vperm.xlu0 %5565, %v5087
        %v5567 = vpop.permute.xlu0 %5566
        %5569 = vset.pattern.permute.xlu0 2
        %5570 = vperm.xlu0 %5569, %v5089
        %v5571 = vpop.permute.xlu0 %5570
        %5573 = vset.pattern.permute.xlu0 2
        %5574 = vperm.xlu0 %5573, %v5091
        %v5575 = vpop.permute.xlu0 %5574
        %5577 = vset.pattern.permute.xlu0 2
        %5578 = vperm.xlu0 %5577, %v5093
        %v5579 = vpop.permute.xlu0 %5578
        %5581 = vset.pattern.permute.xlu0 3
        %5582 = vperm.xlu0 %5581, %v5087
        %v5583 = vpop.permute.xlu0 %5582
        %5585 = vset.pattern.permute.xlu0 3
        %5586 = vperm.xlu0 %5585, %v5089
        %v5587 = vpop.permute.xlu0 %5586
        %5589 = vset.pattern.permute.xlu0 3
        %5590 = vperm.xlu0 %5589, %v5091
        %v5591 = vpop.permute.xlu0 %5590
        %5593 = vset.pattern.permute.xlu0 3
        %5594 = vperm.xlu0 %5593, %v5093
        %v5595 = vpop.permute.xlu0 %5594
        %v5597 = vsel %vm1803, %v5532, %v5551
        %v5598 = vsel %vm1803, %v5537, %v5555
        %v5599 = vsel %vm1803, %v5542, %v5559
        %v5600 = vsel %vm1803, %v5547, %v5563
        %v5601 = vsel %vm2449, %v5597, %v5567
        %v5602 = vsel %vm2449, %v5598, %v5571
        %v5603 = vsel %vm2449, %v5599, %v5575
        %v5604 = vsel %vm2449, %v5600, %v5579
        %vm5605 = vcmask 195584
        %v5606 = vsel %vm5605, %v5601, %v5583
        %v5607 = vsel %vm5605, %v5602, %v5587
        %v5608 = vsel %vm5605, %v5603, %v5591
        %v5609 = vsel %vm5605, %v5604, %v5595
        %v5610 = vld [vmem:[#allocation8] sm:$0xff]
        %v5611 = vld [vmem:[#allocation8 + $0x8] sm:$0xff]
        %v5612 = vld [vmem:[#allocation8 + $0x10] sm:$0xff]
        %v5613 = vld [vmem:[#allocation8 + $0x18] sm:$0xff]
        %v5614 = vmul.f32 %v5606, %v5610
        %v5615 = vmul.f32 %v5607, %v5611
        %v5616 = vmul.f32 %v5608, %v5612
        %v5617 = vmul.f32 %v5609, %v5613
        %5622 = vrot.lane.b32.xlu0 %v5282, 8
        %v5623 = vpop.permute.xlu0 %5622
        %5624 = vrot.lane.b32.xlu0 %v5285, 8
        %v5625 = vpop.permute.xlu0 %5624
        %5626 = vrot.lane.b32.xlu0 %v5290, 8
        %v5627 = vpop.permute.xlu0 %5626
        %5628 = vrot.lane.b32.xlu0 %v5293, 8
        %v5629 = vpop.permute.xlu0 %5628
        %5638 = vrot.lane.b32.xlu0 %v5382, 16
        %v5639 = vpop.permute.xlu0 %5638
        %5640 = vrot.lane.b32.xlu0 %v5385, 16
        %v5641 = vpop.permute.xlu0 %5640
        %5642 = vrot.lane.b32.xlu0 %v5390, 16
        %v5643 = vpop.permute.xlu0 %5642
        %5644 = vrot.lane.b32.xlu0 %v5393, 16
        %v5645 = vpop.permute.xlu0 %5644
        %5654 = vrot.lane.b32.xlu0 %v5482, 24
        %v5655 = vpop.permute.xlu0 %5654
        %5656 = vrot.lane.b32.xlu0 %v5485, 24
        %v5657 = vpop.permute.xlu0 %5656
        %5658 = vrot.lane.b32.xlu0 %v5490, 24
        %v5659 = vpop.permute.xlu0 %5658
        %5660 = vrot.lane.b32.xlu0 %v5493, 24
        %v5661 = vpop.permute.xlu0 %5660
        %v5666 = vsel %vm1803, %v5181, %v5623
        %v5667 = vsel %vm1803, %v5184, %v5625
        %v5668 = vsel %vm1803, %v5189, %v5627
        %v5669 = vsel %vm1803, %v5192, %v5629
        %v5670 = vsel %vm2449, %v5666, %v5639
        %v5671 = vsel %vm2449, %v5667, %v5641
        %v5672 = vsel %vm2449, %v5668, %v5643
        %v5673 = vsel %vm2449, %v5669, %v5645
        %v5674 = vsel %vm5605, %v5670, %v5655
        %v5675 = vsel %vm5605, %v5671, %v5657
        %v5676 = vsel %vm5605, %v5672, %v5659
        %v5677 = vsel %vm5605, %v5673, %v5661
        %v5678 = vadd.f32 %v5614, %v5674
        %v5679 = vadd.f32 %v5615, %v5675
        %v5680 = vadd.f32 %v5616, %v5676
        %v5681 = vadd.f32 %v5617, %v5677
        %vm5682 = vcmask 261120
        %5683 = vst.msk [vmem:[#allocation8] sm:$0xff] %vm5682, %v5678
        %5684 = vst.msk [vmem:[#allocation8 + $0x8] sm:$0xff] %vm5682, %v5679
        %5685 = vst.msk [vmem:[#allocation8 + $0x10] sm:$0xff] %vm5682, %v5680
        %5686 = vst.msk [vmem:[#allocation8 + $0x18] sm:$0xff] %vm5682, %v5681
        %p5687 = scmp.eq.s32.totalorder %s40, 1
        // Predicated region
        $region93: #{tpu_custom_call.1} parent=71 // pred_check
          %p5688 = pneg %p5687
        $region94: #{tpu_custom_call.1} parent=71 // pred_check_branch
          %5690 = sbr.rel (%p5688) target = $region96
        $region95: #{tpu_custom_call.1} parent=71 // pred_region
          %v5691 = vld [vmem:[#allocation7] sm:$0xff]
          %v5692 = vld [vmem:[#allocation7 + $0x8] sm:$0xff]
          %v5693 = vld [vmem:[#allocation7 + $0x10] sm:$0xff]
          %v5694 = vld [vmem:[#allocation7 + $0x18] sm:$0xff]
          %v5695 = vrcp.pop %v5691
          %v5696 = vrcp.pop %v5692
          %v5697 = vrcp.pop %v5693
          %v5698 = vrcp.pop %v5694
          %5700 = vset.pattern.permute.xlu0 0
          %5701 = vperm.xlu0 %5700, %v5695
          %v5702 = vpop.permute.xlu0 %5701
          %5705 = vset.pattern.permute.xlu0 0
          %5706 = vperm.xlu0 %5705, %v5696
          %v5707 = vpop.permute.xlu0 %5706
          %5710 = vset.pattern.permute.xlu0 0
          %5711 = vperm.xlu0 %5710, %v5697
          %v5712 = vpop.permute.xlu0 %5711
          %5715 = vset.pattern.permute.xlu0 0
          %5716 = vperm.xlu0 %5715, %v5698
          %v5717 = vpop.permute.xlu0 %5716
          %5719 = vset.pattern.permute.xlu0 1
          %5720 = vperm.xlu0 %5719, %v5695
          %v5721 = vpop.permute.xlu0 %5720
          %5723 = vset.pattern.permute.xlu0 1
          %5724 = vperm.xlu0 %5723, %v5696
          %v5725 = vpop.permute.xlu0 %5724
          %5727 = vset.pattern.permute.xlu0 1
          %5728 = vperm.xlu0 %5727, %v5697
          %v5729 = vpop.permute.xlu0 %5728
          %5731 = vset.pattern.permute.xlu0 1
          %5732 = vperm.xlu0 %5731, %v5698
          %v5733 = vpop.permute.xlu0 %5732
          %5735 = vset.pattern.permute.xlu0 2
          %5736 = vperm.xlu0 %5735, %v5695
          %v5737 = vpop.permute.xlu0 %5736
          %5739 = vset.pattern.permute.xlu0 2
          %5740 = vperm.xlu0 %5739, %v5696
          %v5741 = vpop.permute.xlu0 %5740
          %5743 = vset.pattern.permute.xlu0 2
          %5744 = vperm.xlu0 %5743, %v5697
          %v5745 = vpop.permute.xlu0 %5744
          %5747 = vset.pattern.permute.xlu0 2
          %5748 = vperm.xlu0 %5747, %v5698
          %v5749 = vpop.permute.xlu0 %5748
          %5751 = vset.pattern.permute.xlu0 3
          %5752 = vperm.xlu0 %5751, %v5695
          %v5753 = vpop.permute.xlu0 %5752
          %5755 = vset.pattern.permute.xlu0 3
          %5756 = vperm.xlu0 %5755, %v5696
          %v5757 = vpop.permute.xlu0 %5756
          %5759 = vset.pattern.permute.xlu0 3
          %5760 = vperm.xlu0 %5759, %v5697
          %v5761 = vpop.permute.xlu0 %5760
          %5763 = vset.pattern.permute.xlu0 3
          %5764 = vperm.xlu0 %5763, %v5698
          %v5765 = vpop.permute.xlu0 %5764
          %v5767 = vsel %vm1803, %v5702, %v5721
          %v5768 = vsel %vm1803, %v5707, %v5725
          %v5769 = vsel %vm1803, %v5712, %v5729
          %v5770 = vsel %vm1803, %v5717, %v5733
          %v5771 = vsel %vm2449, %v5767, %v5737
          %v5772 = vsel %vm2449, %v5768, %v5741
          %v5773 = vsel %vm2449, %v5769, %v5745
          %v5774 = vsel %vm2449, %v5770, %v5749
          %v5775 = vsel %vm5605, %v5771, %v5753
          %v5776 = vsel %vm5605, %v5772, %v5757
          %v5777 = vsel %vm5605, %v5773, %v5761
          %v5778 = vsel %vm5605, %v5774, %v5765
          %v5779 = vld [vmem:[#allocation8] sm:$0xff]
          %v5780 = vld [vmem:[#allocation8 + $0x8] sm:$0xff]
          %v5781 = vld [vmem:[#allocation8 + $0x10] sm:$0xff]
          %v5782 = vld [vmem:[#allocation8 + $0x18] sm:$0xff]
          %v5783 = vmul.f32 %v5779, %v5775
          %v5784 = vmul.f32 %v5780, %v5776
          %v5785 = vmul.f32 %v5781, %v5777
          %v5786 = vmul.f32 %v5782, %v5778
          %v5787 = vpack.c.bf16 %v5784, %v5783
          %v5788 = vpack.c.bf16 %v5786, %v5785
          %v5789 = vld [vmem:[%s723] sm:$0xf]
          %v5790 = vld [vmem:[%s723 + $0x4] sm:$0xf]
          %v5791 = vld [vmem:[%s723 + $0x8] sm:$0xf]
          %v5792 = vld [vmem:[%s723 + $0xc] sm:$0xf]
          %v5793 = vld [vmem:[%s726] sm:$0x1]
          %v5795 = vlaneseq
          %v5796 = vshrl.u32 %v5795, 7
          %v5797 = vsub.s32 0, %v5796
          %v5798 = vrot.slane %v5793, %v5797
          %v5804 = vunpack.c.l.b16 %v5789
          %v5805 = vunpack.c.l.b16 %v5790
          %v5806 = vunpack.c.l.b16 %v5791
          %v5807 = vunpack.c.l.b16 %v5792
          %v5808 = vpack.c.b16 %v5805, %v5804
          %v5809 = vpack.c.b16 %v5807, %v5806
          %v5813 = vsel %vm5682, %v5787, 0
          %v5816 = vsel %vm5682, %v5788, 0
          %5818 = vmatprep.subr.bf16.mxu0 0
          %5819 = vmatpush1.bf16.msra.mxu0 %v5808
          %5820 = vmatprep.subr.bf16.mxu0 0
          %5821 = vmatpush1.bf16.msra.mxu0 %v5809
          %5822 = vmatprep.subr.bf16.mxu0 0
          %5823 = vmatpush1.bf16.msra.mxu0 0
          %5824 = vmatprep.subr.bf16.mxu0 0
          %5825 = vmatpush1.bf16.msra.mxu0 0
          %5826 = vmatprep.subr.bf16.mxu0 0
          %5827 = vmatpush1.bf16.msra.mxu0 0
          %5828 = vmatprep.subr.bf16.mxu0 0
          %5829 = vmatpush1.bf16.msra.mxu0 0
          %5830 = vmatprep.subr.bf16.mxu0 0
          %5831 = vmatpush1.bf16.msra.mxu0 0
          %5832 = vmatprep.subr.bf16.mxu0 0
          %5833 = vmatpush1.bf16.msra.mxu0 0
          %5834 = vmatprep.subr.bf16.mxu0 0
          %5835 = vmatpush1.bf16.msra.mxu0 0
          %5836 = vmatprep.subr.bf16.mxu0 0
          %5837 = vmatpush1.bf16.msra.mxu0 0
          %5838 = vmatprep.subr.bf16.mxu0 0
          %5839 = vmatpush1.bf16.msra.mxu0 0
          %5840 = vmatprep.subr.bf16.mxu0 0
          %5841 = vmatpush1.bf16.msra.mxu0 0
          %5842 = vmatprep.subr.bf16.mxu0 0
          %5843 = vmatpush1.bf16.msra.mxu0 0
          %5844 = vmatprep.subr.bf16.mxu0 0
          %5845 = vmatpush1.bf16.msra.mxu0 0
          %5846 = vmatprep.subr.bf16.mxu0 0
          %5847 = vmatpush1.bf16.msra.mxu0 0
          %5848 = vmatprep.subr.bf16.mxu0 0
          %5849 = vmatpush1.bf16.msra.mxu0 0
          %5850 = vmatprep.mubr.bf16.mxu0 0
          %5851 = vmatmul.mubr.bf16.gmra.mrb[0].mxu0 %v5813
          %v5852 = vpop.f32.mrb[0].mxu0
          %v5853 = vadd.f32 %v5798, %v5852
          %v5854 = vpop.f32.mrb[0].mxu0
          %v5855 = vpop.f32.mrb[0].mxu0
          %v5856 = vadd.f32 %v5798, %v5855
          %v5857 = vpop.f32.mrb[0].mxu0
          %5858 = vmatprep.mubr.bf16.mxu0 0
          %5859 = vmatmul.mubr.bf16.gmra.mrb[0].mxu0 %v5816
          %v5860 = vpop.f32.mrb[0].mxu0
          %v5861 = vadd.f32 %v5798, %v5860
          %v5862 = vpop.f32.mrb[0].mxu0
          %v5863 = vpop.f32.mrb[0].mxu0
          %v5864 = vadd.f32 %v5798, %v5863
          %v5865 = vpop.f32.mrb[0].mxu0
          %5866 = vdwg.mxu0
          %v5867 = vld [vmem:[#allocation2] sm:$0xff]
          %v5868 = vld [vmem:[#allocation2 + $0x8] sm:$0xff]
          %v5869 = vld [vmem:[#allocation2 + $0x10] sm:$0xff]
          %v5870 = vld [vmem:[#allocation2 + $0x18] sm:$0xff]
          %v5871 = vadd.f32 %v5867, %v5853
          %v5872 = vadd.f32 %v5868, %v5856
          %v5873 = vadd.f32 %v5869, %v5861
          %v5874 = vadd.f32 %v5870, %v5864
          %v5875 = vld [vmem:[%s729] sm:$0x1]
          %v5876 = vld [vmem:[%s603] sm:$0x1]
          %v5877 = vsel %vm5682, %v5871, 0.0
          %5878 = vadd.xlane.f32.xlu0 %v5877
          %v5879 = vpop.xlane.xlu0 %5878
          %v5880 = vsel %vm5682, %v5872, 0.0
          %5881 = vadd.xlane.f32.xlu0 %v5880
          %v5882 = vpop.xlane.xlu0 %5881
          %v5883 = vsel %vm5682, %v5873, 0.0
          %5884 = vadd.xlane.f32.xlu0 %v5883
          %v5885 = vpop.xlane.xlu0 %5884
          %v5886 = vsel %vm5682, %v5874, 0.0
          %5887 = vadd.xlane.f32.xlu0 %v5886
          %v5888 = vpop.xlane.xlu0 %5887
          %v5889 = vrcp.pop 32.0
          %v5890 = vmul.f32 %v5879, %v5889
          %v5891 = vmul.f32 %v5882, %v5889
          %v5892 = vmul.f32 %v5885, %v5889
          %v5893 = vmul.f32 %v5888, %v5889
          %v5894 = vsub.f32 %v5871, %v5890
          %v5895 = vsub.f32 %v5872, %v5891
          %v5896 = vsub.f32 %v5873, %v5892
          %v5897 = vsub.f32 %v5874, %v5893
          %v5898 = vmul.f32 %v5894, %v5894
          %v5899 = vmul.f32 %v5895, %v5895
          %v5900 = vmul.f32 %v5896, %v5896
          %v5901 = vmul.f32 %v5897, %v5897
          %v5902 = vsel %vm5682, %v5898, 0.0
          %5903 = vadd.xlane.f32.xlu0 %v5902
          %v5904 = vpop.xlane.xlu0 %5903
          %v5905 = vsel %vm5682, %v5899, 0.0
          %5906 = vadd.xlane.f32.xlu0 %v5905
          %v5907 = vpop.xlane.xlu0 %5906
          %v5908 = vsel %vm5682, %v5900, 0.0
          %5909 = vadd.xlane.f32.xlu0 %v5908
          %v5910 = vpop.xlane.xlu0 %5909
          %v5911 = vsel %vm5682, %v5901, 0.0
          %5912 = vadd.xlane.f32.xlu0 %v5911
          %v5913 = vpop.xlane.xlu0 %5912
          %v5914 = vmul.f32 %v5904, %v5889
          %v5915 = vmul.f32 %v5907, %v5889
          %v5916 = vmul.f32 %v5910, %v5889
          %v5917 = vmul.f32 %v5913, %v5889
          %v5918 = vadd.f32 %v5914, 1e-05
          %v5919 = vadd.f32 %v5915, 1e-05
          %v5920 = vadd.f32 %v5916, 1e-05
          %v5921 = vadd.f32 %v5917, 1e-05
          %v5922 = vrsqrt.pop %v5918
          %v5923 = vrsqrt.pop %v5919
          %v5924 = vrsqrt.pop %v5920
          %v5925 = vrsqrt.pop %v5921
          %v5926 = vmul.f32 %v5894, %v5922
          %v5927 = vmul.f32 %v5895, %v5923
          %v5928 = vmul.f32 %v5896, %v5924
          %v5929 = vmul.f32 %v5897, %v5925
          %v5931 = vlaneseq
          %v5932 = vshrl.u32 %v5931, 7
          %v5933 = vsub.s32 0, %v5932
          %v5934 = vrot.slane %v5875, %v5933
          %v5936 = vmul.f32 %v5926, %v5934
          %v5937 = vmul.f32 %v5927, %v5934
          %v5938 = vmul.f32 %v5928, %v5934
          %v5939 = vmul.f32 %v5929, %v5934
          %v5941 = vlaneseq
          %v5942 = vshrl.u32 %v5941, 7
          %v5943 = vsub.s32 0, %v5942
          %v5944 = vrot.slane %v5876, %v5943
          %v5946 = vadd.f32 %v5936, %v5944
          %v5947 = vadd.f32 %v5937, %v5944
          %v5948 = vadd.f32 %v5938, %v5944
          %v5949 = vadd.f32 %v5939, %v5944
          %v5950 = vpack.c.bf16 %v5947, %v5946
          %v5951 = vpack.c.bf16 %v5949, %v5948
          %v5952 = vld [vmem:[%s734] sm:$0xf]
          %v5953 = vld [vmem:[%s734 + $0x4] sm:$0xf]
          %v5954 = vld [vmem:[%s734 + $0x8] sm:$0xf]
          %v5955 = vld [vmem:[%s734 + $0xc] sm:$0xf]
          %v5956 = vld [vmem:[%s611] sm:$0x1]
          %v5958 = vlaneseq
          %v5959 = vshrl.u32 %v5958, 7
          %v5960 = vsub.s32 0, %v5959
          %v5961 = vrot.slane %v5956, %v5960
          %v5967 = vunpack.c.l.b16 %v5952
          %v5968 = vunpack.c.l.b16 %v5953
          %v5969 = vunpack.c.l.b16 %v5954
          %v5970 = vunpack.c.l.b16 %v5955
          %v5971 = vpack.c.b16 %v5968, %v5967
          %v5972 = vpack.c.b16 %v5970, %v5969
          %v5976 = vsel %vm5682, %v5950, 0
          %v5979 = vsel %vm5682, %v5951, 0
          %5981 = vmatprep.subr.bf16.mxu0 0
          %5982 = vmatpush1.bf16.msra.mxu0 %v5971
          %5983 = vmatprep.subr.bf16.mxu0 0
          %5984 = vmatpush1.bf16.msra.mxu0 %v5972
          %5985 = vmatprep.subr.bf16.mxu0 0
          %5986 = vmatpush1.bf16.msra.mxu0 0
          %5987 = vmatprep.subr.bf16.mxu0 0
          %5988 = vmatpush1.bf16.msra.mxu0 0
          %5989 = vmatprep.subr.bf16.mxu0 0
          %5990 = vmatpush1.bf16.msra.mxu0 0
          %5991 = vmatprep.subr.bf16.mxu0 0
          %5992 = vmatpush1.bf16.msra.mxu0 0
          %5993 = vmatprep.subr.bf16.mxu0 0
          %5994 = vmatpush1.bf16.msra.mxu0 0
          %5995 = vmatprep.subr.bf16.mxu0 0
          %5996 = vmatpush1.bf16.msra.mxu0 0
          %5997 = vmatprep.subr.bf16.mxu0 0
          %5998 = vmatpush1.bf16.msra.mxu0 0
          %5999 = vmatprep.subr.bf16.mxu0 0
          %6000 = vmatpush1.bf16.msra.mxu0 0
          %6001 = vmatprep.subr.bf16.mxu0 0
          %6002 = vmatpush1.bf16.msra.mxu0 0
          %6003 = vmatprep.subr.bf16.mxu0 0
          %6004 = vmatpush1.bf16.msra.mxu0 0
          %6005 = vmatprep.subr.bf16.mxu0 0
          %6006 = vmatpush1.bf16.msra.mxu0 0
          %6007 = vmatprep.subr.bf16.mxu0 0
          %6008 = vmatpush1.bf16.msra.mxu0 0
          %6009 = vmatprep.subr.bf16.mxu0 0
          %6010 = vmatpush1.bf16.msra.mxu0 0
          %6011 = vmatprep.subr.bf16.mxu0 0
          %6012 = vmatpush1.bf16.msra.mxu0 0
          %6013 = vmatprep.mubr.bf16.mxu0 0
          %6014 = vmatmul.mubr.bf16.gmra.mrb[0].mxu0 %v5976
          %v6015 = vpop.f32.mrb[0].mxu0
          %v6016 = vadd.f32 %v5961, %v6015
          %v6017 = vpop.f32.mrb[0].mxu0
          %v6018 = vpop.f32.mrb[0].mxu0
          %v6019 = vadd.f32 %v5961, %v6018
          %v6020 = vpop.f32.mrb[0].mxu0
          %6021 = vmatprep.mubr.bf16.mxu0 0
          %6022 = vmatmul.mubr.bf16.gmra.mrb[0].mxu0 %v5979
          %v6023 = vpop.f32.mrb[0].mxu0
          %v6024 = vadd.f32 %v5961, %v6023
          %v6025 = vpop.f32.mrb[0].mxu0
          %v6026 = vpop.f32.mrb[0].mxu0
          %v6027 = vadd.f32 %v5961, %v6026
          %v6028 = vpop.f32.mrb[0].mxu0
          %6029 = vdwg.mxu0
          %v6030 = vmul.f32 %v6016, 0.5
          %v6031 = vmul.f32 %v6019, 0.5
          %v6032 = vmul.f32 %v6024, 0.5
          %v6033 = vmul.f32 %v6027, 0.5
          %v6034 = vmul.f32 %v6016, 0.044715
          %v6035 = vmul.f32 %v6019, 0.044715
          %v6036 = vmul.f32 %v6024, 0.044715
          %v6037 = vmul.f32 %v6027, 0.044715
          %v6038 = vmul.f32 %v6034, %v6016
          %v6039 = vmul.f32 %v6035, %v6019
          %v6040 = vmul.f32 %v6036, %v6024
          %v6041 = vmul.f32 %v6037, %v6027
          %v6042 = vmul.f32 %v6038, %v6016
          %v6043 = vmul.f32 %v6039, %v6019
          %v6044 = vmul.f32 %v6040, %v6024
          %v6045 = vmul.f32 %v6041, %v6027
          %v6046 = vadd.f32 %v6016, %v6042
          %v6047 = vadd.f32 %v6019, %v6043
          %v6048 = vadd.f32 %v6024, %v6044
          %v6049 = vadd.f32 %v6027, %v6045
          %v6050 = vmul.f32 %v6046, 0.7978846
          %v6051 = vmul.f32 %v6047, 0.7978846
          %v6052 = vmul.f32 %v6048, 0.7978846
          %v6053 = vmul.f32 %v6049, 0.7978846
          %v6054 = vtanh.pop %v6050
          %v6055 = vtanh.pop %v6051
          %v6056 = vtanh.pop %v6052
          %v6057 = vtanh.pop %v6053
          %v6058 = vadd.f32 %v6054, 1.0
          %v6059 = vadd.f32 %v6055, 1.0
          %v6060 = vadd.f32 %v6056, 1.0
          %v6061 = vadd.f32 %v6057, 1.0
          %v6062 = vmul.f32 %v6030, %v6058
          %v6063 = vmul.f32 %v6031, %v6059
          %v6064 = vmul.f32 %v6032, %v6060
          %v6065 = vmul.f32 %v6033, %v6061
          %v6066 = vpack.c.bf16 %v6063, %v6062
          %v6067 = vpack.c.bf16 %v6065, %v6064
          %v6068 = vld [vmem:[%s739] sm:$0xf]
          %v6069 = vld [vmem:[%s739 + $0x4] sm:$0xf]
          %v6070 = vld [vmem:[%s739 + $0x8] sm:$0xf]
          %v6071 = vld [vmem:[%s739 + $0xc] sm:$0xf]
          %v6072 = vld [vmem:[%s739 + $0x10] sm:$0xf]
          %v6073 = vld [vmem:[%s739 + $0x14] sm:$0xf]
          %v6074 = vld [vmem:[%s739 + $0x18] sm:$0xf]
          %v6075 = vld [vmem:[%s739 + $0x1c] sm:$0xf]
          %v6076 = vld [vmem:[%s739 + $0x20] sm:$0xf]
          %v6077 = vld [vmem:[%s739 + $0x24] sm:$0xf]
          %v6078 = vld [vmem:[%s739 + $0x28] sm:$0xf]
          %v6079 = vld [vmem:[%s739 + $0x2c] sm:$0xf]
          %v6080 = vld [vmem:[%s739 + $0x30] sm:$0xf]
          %v6081 = vld [vmem:[%s739 + $0x34] sm:$0xf]
          %v6082 = vld [vmem:[%s739 + $0x38] sm:$0xf]
          %v6083 = vld [vmem:[%s739 + $0x3c] sm:$0xf]
          %v6084 = vld [vmem:[%s742] sm:$0x1]
          %v6086 = vlaneseq
          %v6087 = vshrl.u32 %v6086, 7
          %v6088 = vsub.s32 0, %v6087
          %v6089 = vrot.slane %v6084, %v6088
          %v6107 = vunpack.c.l.b16 %v6068
          %v6108 = vunpack.c.l.b16 %v6069
          %v6109 = vunpack.c.l.b16 %v6070
          %v6110 = vunpack.c.l.b16 %v6071
          %v6111 = vunpack.c.l.b16 %v6072
          %v6112 = vunpack.c.l.b16 %v6073
          %v6113 = vunpack.c.l.b16 %v6074
          %v6114 = vunpack.c.l.b16 %v6075
          %v6115 = vunpack.c.l.b16 %v6076
          %v6116 = vunpack.c.l.b16 %v6077
          %v6117 = vunpack.c.l.b16 %v6078
          %v6118 = vunpack.c.l.b16 %v6079
          %v6119 = vunpack.c.l.b16 %v6080
          %v6120 = vunpack.c.l.b16 %v6081
          %v6121 = vunpack.c.l.b16 %v6082
          %v6122 = vunpack.c.l.b16 %v6083
          %v6123 = vpack.c.b16 %v6108, %v6107
          %v6124 = vpack.c.b16 %v6110, %v6109
          %v6125 = vpack.c.b16 %v6112, %v6111
          %v6126 = vpack.c.b16 %v6114, %v6113
          %v6127 = vpack.c.b16 %v6116, %v6115
          %v6128 = vpack.c.b16 %v6118, %v6117
          %v6129 = vpack.c.b16 %v6120, %v6119
          %v6130 = vpack.c.b16 %v6122, %v6121
          %6139 = vmatprep.subr.bf16.mxu0 0
          %6140 = vmatpush1.bf16.msra.mxu0 %v6123
          %6141 = vmatprep.subr.bf16.mxu0 0
          %6142 = vmatpush1.bf16.msra.mxu0 %v6124
          %6143 = vmatprep.subr.bf16.mxu0 0
          %6144 = vmatpush1.bf16.msra.mxu0 %v6125
          %6145 = vmatprep.subr.bf16.mxu0 0
          %6146 = vmatpush1.bf16.msra.mxu0 %v6126
          %6147 = vmatprep.subr.bf16.mxu0 0
          %6148 = vmatpush1.bf16.msra.mxu0 %v6127
          %6149 = vmatprep.subr.bf16.mxu0 0
          %6150 = vmatpush1.bf16.msra.mxu0 %v6128
          %6151 = vmatprep.subr.bf16.mxu0 0
          %6152 = vmatpush1.bf16.msra.mxu0 %v6129
          %6153 = vmatprep.subr.bf16.mxu0 0
          %6154 = vmatpush1.bf16.msra.mxu0 %v6130
          %6155 = vmatprep.subr.bf16.mxu0 0
          %6156 = vmatpush1.bf16.msra.mxu0 0
          %6157 = vmatprep.subr.bf16.mxu0 0
          %6158 = vmatpush1.bf16.msra.mxu0 0
          %6159 = vmatprep.subr.bf16.mxu0 0
          %6160 = vmatpush1.bf16.msra.mxu0 0
          %6161 = vmatprep.subr.bf16.mxu0 0
          %6162 = vmatpush1.bf16.msra.mxu0 0
          %6163 = vmatprep.subr.bf16.mxu0 0
          %6164 = vmatpush1.bf16.msra.mxu0 0
          %6165 = vmatprep.subr.bf16.mxu0 0
          %6166 = vmatpush1.bf16.msra.mxu0 0
          %6167 = vmatprep.subr.bf16.mxu0 0
          %6168 = vmatpush1.bf16.msra.mxu0 0
          %6169 = vmatprep.subr.bf16.mxu0 0
          %6170 = vmatpush1.bf16.msra.mxu0 0
          %6171 = vmatprep.mubr.bf16.mxu0 0
          %6172 = vmatmul.mubr.bf16.gmra.mrb[0].mxu0 %v6066
          %v6173 = vpop.f32.mrb[0].mxu0
          %v6174 = vadd.f32 %v6089, %v6173
          %v6175 = vpop.f32.mrb[0].mxu0
          %v6176 = vpop.f32.mrb[0].mxu0
          %v6177 = vadd.f32 %v6089, %v6176
          %v6178 = vpop.f32.mrb[0].mxu0
          %6179 = vmatprep.mubr.bf16.mxu0 0
          %6180 = vmatmul.mubr.bf16.gmra.mrb[0].mxu0 %v6067
          %v6181 = vpop.f32.mrb[0].mxu0
          %v6182 = vadd.f32 %v6089, %v6181
          %v6183 = vpop.f32.mrb[0].mxu0
          %v6184 = vpop.f32.mrb[0].mxu0
          %v6185 = vadd.f32 %v6089, %v6184
          %v6186 = vpop.f32.mrb[0].mxu0
          %6187 = vdwg.mxu0
          %v6188 = vadd.f32 %v5871, %v6174
          %v6189 = vadd.f32 %v5872, %v6177
          %v6190 = vadd.f32 %v5873, %v6182
          %v6191 = vadd.f32 %v5874, %v6185
          %6192 = vst.msk [vmem:[#allocation2] sm:$0xff] %vm5682, %v6188
          %6193 = vst.msk [vmem:[#allocation2 + $0x8] sm:$0xff] %vm5682, %v6189
          %6194 = vst.msk [vmem:[#allocation2 + $0x10] sm:$0xff] %vm5682, %v6190
          %6195 = vst.msk [vmem:[#allocation2 + $0x18] sm:$0xff] %vm5682, %v6191
          %p6196 = scmp.eq.s32.totalorder %s39, 1
          // Predicated region
          $region97: #{tpu_custom_call.1} parent=95 // pred_check
            %p6197 = pneg %p6196
          $region98: #{tpu_custom_call.1} parent=95 // pred_check_branch
            %6199 = sbr.rel (%p6197) target = $region100
          $region99: #{tpu_custom_call.1} parent=95 // pred_region
            %6200 = vst.msk [vmem:[%s701] sm:$0xff] %vm5682, %v6188
            %6201 = vst.msk [vmem:[%s701 + $0x8] sm:$0xff] %vm5682, %v6189
            %6202 = vst.msk [vmem:[%s701 + $0x10] sm:$0xff] %vm5682, %v6190
            %6203 = vst.msk [vmem:[%s701 + $0x18] sm:$0xff] %vm5682, %v6191
          $region100: #{tpu_custom_call.1} parent=95 // pred_fallthru
            _
        $region96: #{tpu_custom_call.1} parent=71 // pred_fallthru
          _
        %s6204 = sand.u32 %s400, 1
        %s6205 = scalar_lea.sflag [#allocation11], %s6204
        %s6206 = sand.u32 %s400, 1
        %s6207 = smul.addr %s6206, 32
        %s6208 = scalar_lea.vmem [#allocation15], %s6207
        // Predicated region
        $region101: #{tpu_custom_call.1} parent=71 // pred_check
          %p6209 = pneg %p410
        $region102: #{tpu_custom_call.1} parent=71 // pred_check_branch
          %6211 = sbr.rel (%p6209) target = $region104
        $region103: #{tpu_custom_call.1} parent=71 // pred_region
          %s6213 = ssub.s32 512, 512
          %6214 = vsyncadd %s6205, %s6213
          %s6215 = smul.addr %s38, 4
          %s6216 = smul.addr %s6215, 128
          %s6217 = scalar_lea.hbm %s13, %s6216
          %s6218 = sshll.u32 %s6208, 4
          %s6219 = int_to_ptr.vmem [resolvable:$true] %s6218
          %6224 = dma.vmem_to_hbm [thread:$0]  %s6219, 512, %s6217, %s6205, 128, 128, 8
        $region104: #{tpu_custom_call.1} parent=71 // pred_fallthru
          _
      $region72: #{tpu_custom_call.1} parent=5 // pred_fallthru
        _
      %p6225 = scmp.le.s32.totalorder 2, %s28
      // Predicated region
      $region105: #{tpu_custom_call.1} parent=5 // pred_check
        %p6226 = pneg %p6225
      $region106: #{tpu_custom_call.1} parent=5 // pred_check_branch
        %6228 = sbr.rel (%p6226) target = $region108
      $region107: #{tpu_custom_call.1} parent=5 // pred_region
        %s6229 = ssub.s32 %s28, 2
        // Predicated region
        $region109: #{tpu_custom_call.1} parent=107 // pred_check
          %p6230 = pneg %p416
        $region110: #{tpu_custom_call.1} parent=107 // pred_check_branch
          %6232 = sbr.rel (%p6230) target = $region112
        $region111: #{tpu_custom_call.1} parent=107 // pred_region
          %s6233 = sand.u32 %s401, 1
          %s6234 = scalar_lea.sflag [#allocation11], %s6233
          %s6235 = sand.u32 %s401, 1
          %s6236 = smul.addr %s6235, 32
          %s6237 = scalar_lea.vmem [#allocation15], %s6236
          %6238 = dma.done %s6234, 512
        $region112: #{tpu_custom_call.1} parent=107 // pred_fallthru
          _
      $region108: #{tpu_custom_call.1} parent=5 // pred_fallthru
        _
    $region6: #{tpu_custom_call.1} parent=1 // loop_footer
      %s32 = sadd.s32 1, %s28
    $region7: #{tpu_custom_call.1} parent=1 // loop_footer_branch
      %27 = sbr.rel target = $region3
    $region8: #{tpu_custom_call.1} parent=1 // loop_exit
      _
    %6239 = vsyncpa [#allocation10], 1
    %s6240 = scalar_lea.sflag [#allocation10], 1
    %6241 = vsyncpa %s6240, 1
    %6242 = vsyncpa [#allocation13], 1
    %s6243 = scalar_lea.sflag [#allocation13], 1
    %6244 = vsyncpa %s6243, 1
    %6245 = vsyncpa [#allocation11], 1
    %s6246 = scalar_lea.sflag [#allocation11], 1
    %6247 = vsyncpa %s6246, 1

</llo_original>
